<compile_context>
chip_gen: v6e
topology: v6e:2x2x1
jax: 0.10.0
libtpu: 0.0.40
codegen_flags: <defaults>
</compile_context>

<pallas_src>
import numpy as np
import jax
import jax.numpy as jnp
from jax.experimental import pallas as pl
from jax.experimental.pallas import tpu as pltpu

EPS = 1e-6  # config.layer_norm_epsilon


def _rms_norm(x, w):
    # LongT5LayerNorm: RMS norm (no mean subtraction, no bias); variance kept in f32.
    var = jnp.mean(x * x, axis=-1, keepdims=True)
    return x * jax.lax.rsqrt(var + EPS) * w


# ----------------------------- Pallas kernel ------------------------------- #
def _locost_block_kernel(h_ref, hh_ref, wln1_ref, kband_ref, dskip_ref,
                         wglu_ref, bglu_ref, wln2_ref, wi_ref, wo_ref,
                         o_ref, uext_ref, n2_ref):
    li = pl.program_id(1)            # sequence-tile index
    kf = pl.program_id(2)            # d_ff-chunk index (reduction axis, innermost)
    _, TL, D = h_ref.shape
    W = hh_ref.shape[1]

    # ---- SSM layer + first residual: once per (b, l-tile), on the first d_ff chunk
    @pl.when(kf == 0)
    def _ssm_part():
        wln1 = wln1_ref[0]
        h = h_ref[0]                                            # (TL, D) f32
        u = _rms_norm(h, wln1)
        hh = hh_ref[0]                                          # (W, D) band history rows
        uh = _rms_norm(hh, wln1)
        uh = uh * (li > 0).astype(jnp.float32)                  # no history before t = 0

        # Stage normalized rows [l0 - W, l0 + TL) in VMEM so the banded conv only
        # touches (TL, D) / (1, D) slabs (keeps vreg pressure bounded, no spills).
        uext_ref[pl.ds(0, W), :] = uh
        uext_ref[pl.ds(W, TL), :] = u

        # ---- S4D: banded causal depthwise conv + D*u skip ----
        #   y[t, d] = sum_{w<W} K[d, w] * u[t - w, d]  +  D_skip[d] * u[t, d]
        acc = u * dskip_ref[0]
        for w in range(W):                                      # static band, unrolled
            acc = acc + kband_ref[pl.ds(w, 1), :] * uext_ref[pl.ds(W - w, TL), :]

        # TODO(synk): torch nn.GELU() is exact erf; tanh approximation used here.
        y = jax.nn.gelu(acc, approximate=True)

        # ---- S4D output projection: one fused (D, 2D) matmul, then GLU ----
        z = jnp.dot(y.astype(wglu_ref.dtype), wglu_ref[...],
                    preferred_element_type=jnp.float32) + bglu_ref[0]
        a = z[:, :D]
        g = z[:, D:]
        h_new = h + a * jax.nn.sigmoid(g)       # residual; dropout = identity (eval)
        o_ref[0] = h_new                        # clamp_inf: fp16-only no-op

        # ---- LongT5LayerFF pre-norm, cached for all d_ff chunks of this tile ----
        n2 = _rms_norm(h_new, wln2_ref[0])
        n2_ref[...] = n2.astype(n2_ref.dtype)

    # ---- LongT5LayerFF (DenseReluDense), streamed over d_ff chunks ----
    mid = jax.nn.relu(jnp.dot(n2_ref[...], wi_ref[...],
                              preferred_element_type=jnp.float32))
    ff = jnp.dot(mid.astype(wo_ref.dtype), wo_ref[...],
                 preferred_element_type=jnp.float32)
    o_ref[0] = o_ref[0] + ff                    # output tile resident along kf axis


# ------------------------------- wrapper ------------------------------------ #
def locost_block(h, params, *, tl=128, tff=128, mxu_dtype=jnp.bfloat16):
    B, L, D = h.shape
    kband = params["kband"]                     # (W, D) conv taps, tap w on row w
    W = int(kband.shape[0])
    d_ff = int(params["wi"].shape[1])
    assert L % tl == 0, "L must be a multiple of the sequence tile"
    assert tl % W == 0, "band width must divide the l-tile (one aligned history block)"
    assert d_ff % tff == 0, "d_ff must be a multiple of the d_ff tile"
    assert D % 128 == 0 and tff % 128 == 0 and tl % 8 == 0 and W % 8 == 0

    r = tl // W                                 # h-blocks of size W per l-tile
    grid = (B, L // tl, d_ff // tff)

    # MXU operands at reduced precision (v6e/v7x fast path); elementwise math stays f32.
    wglu = params["w_glu"].astype(mxu_dtype)
    wi = params["wi"].astype(mxu_dtype)
    wo = params["wo"].astype(mxu_dtype)

    def const_spec(arr):
        # Constant index_map -> DMA'd once (Pallas skips re-copy on repeated block idx).
        return pl.BlockSpec(arr.shape, lambda b, i, k, _nd=arr.ndim: (0,) * _nd)

    in_specs = [
        pl.BlockSpec((1, tl, D), lambda b, i, k: (b, i, 0)),                 # h, current tile
        pl.BlockSpec((1, W, D),
                     lambda b, i, k: (b, jnp.maximum(i * r - 1, 0), 0)),     # h, band history
        const_spec(params["w_ln1"]),                                         # (1, D)
        const_spec(kband),                                                   # (W, D)
        const_spec(params["d_skip"]),                                        # (1, D)
        const_spec(wglu),                                                    # (D, 2D)
        const_spec(params["b_glu"]),                                         # (1, 2D)
        const_spec(params["w_ln2"]),                                         # (1, D)
        pl.BlockSpec((D, tff), lambda b, i, k: (0, k)),                      # wi chunk
        pl.BlockSpec((tff, D), lambda b, i, k: (k, 0)),                      # wo chunk
    ]

    itemsize = jnp.dtype(mxu_dtype).itemsize
    flops = int(2 * B * L * W * D               # banded conv MACs
                + 4 * B * L * D * D             # fused GLU projection
                + 4 * B * L * D * d_ff)         # FF wi + wo
    bytes_accessed = int(4 * (2 * B * L * D + B * (L // tl) * W * D)
                         + itemsize * (wglu.size + wi.size + wo.size)
                         + 4 * (kband.size + 6 * D))

    return pl.pallas_call(
        _locost_block_kernel,
        out_shape=jax.ShapeDtypeStruct((B, L, D), jnp.float32),
        grid=grid,
        in_specs=in_specs,
        out_specs=pl.BlockSpec((1, tl, D), lambda b, i, k: (b, i, 0)),
        scratch_shapes=[
            pltpu.VMEM((W + tl, D), jnp.float32),   # staged normalized rows for the band
            pltpu.VMEM((tl, D), mxu_dtype),         # cached FF pre-norm across d_ff chunks
        ],
        compiler_params=pltpu.CompilerParams(
            dimension_semantics=("parallel", "parallel", "arbitrary"),
            vmem_limit_bytes=48 * 1024 * 1024,      # fits v7x's 64 MiB/TC with headroom
        ),
        cost_estimate=pl.CostEstimate(flops=flops,
                                      transcendentals=int(3 * B * L * D),
                                      bytes_accessed=bytes_accessed),
    )(h, h, params["w_ln1"], kband, params["d_skip"],
      wglu, params["b_glu"], params["w_ln2"], wi, wo)


# ----------------------- S4D kernel materialization (glue) ------------------ #
def s4d_conv_kernel(log_dt, log_A_real, A_imag, C_re, C_im, length):
    """Standard S4D-Lin convolution kernel taps.  Returns K of shape (D, length)."""
    dt = np.exp(log_dt)                                   # (D,)
    A = -np.exp(log_A_real) + 1j * A_imag                 # (D, N)
    dtA = A * dt[:, None]                                 # (D, N)
    C = (C_re + 1j * C_im) * (np.exp(dtA) - 1.0) / A      # (D, N)
    vand = np.exp(dtA[:, :, None] * np.arange(length))    # (D, N, length)
    K = 2.0 * np.einsum("dn,dnl->dl", C, vand).real
    return K.astype(np.float32)


# ------------------------------- pure-JAX ref ------------------------------- #
def reference_forward(h, params):
    B, L, D = h.shape
    kband = params["kband"]                               # (W, D)
    W = kband.shape[0]
    u = _rms_norm(h, params["w_ln1"][0])
    up = jnp.pad(u, ((0, 0), (W - 1, 0), (0, 0)))
    y = u * params["d_skip"][0]
    for w in range(W):                                    # banded causal conv
        y = y + kband[w] * up[:, W - 1 - w:W - 1 - w + L, :]
    y = jax.nn.gelu(y, approximate=True)
    z = y @ params["w_glu"] + params["b_glu"][0]
    a, g = z[..., :D], z[..., D:]
    h = h + a * jax.nn.sigmoid(g)
    n2 = _rms_norm(h, params["w_ln2"][0])
    return h + jax.nn.relu(n2 @ params["wi"]) @ params["wo"]


# ----------------------------------- main ----------------------------------- #
if __name__ == "__main__":
    B, L, D = 2, 256, 128            # small, but lane-dense (D % 128 == 0)
    D_FF, N_STATE = 256, 16
    TL, TFF, W = 128, 128, 64        # l-tile, d_ff-tile, conv band width

    key = jax.random.PRNGKey(0)
    ks = jax.random.split(key, 12)

    h = jax.random.normal(ks[0], (B, L, D), dtype=jnp.float32)

    # --- S4D parameters (standard S4D-Lin init); taps materialized on host and
    #     truncated to the first W lags (the kernel decays exponentially). ---
    log_dt = np.log(1e-3) + np.asarray(jax.random.uniform(ks[1], (D,)),
                                       dtype=np.float64) * (np.log(1e-1) - np.log(1e-3))
    log_A_real = np.log(0.5 * np.ones((D, N_STATE)))
    A_imag = np.pi * np.broadcast_to(np.arange(N_STATE, dtype=np.float64), (D, N_STATE))
    C_re = np.asarray(jax.random.normal(ks[2], (D, N_STATE)), dtype=np.float64) * 0.5 ** 0.5
    C_im = np.asarray(jax.random.normal(ks[3], (D, N_STATE)), dtype=np.float64) * 0.5 ** 0.5
    Kband = s4d_conv_kernel(log_dt, log_A_real, A_imag, C_re, C_im, W)   # (D, W)

    params = {
        "w_ln1": (1.0 + 0.1 * jax.random.normal(ks[9], (D,), dtype=jnp.float32)).reshape(1, D),
        "kband": jnp.asarray(Kband.T),                                   # (W, D)
        "d_skip": jax.random.normal(ks[4], (D,), dtype=jnp.float32).reshape(1, D),
        "w_glu": jax.random.normal(ks[5], (D, 2 * D), dtype=jnp.float32) * 0.05,
        "b_glu": (jax.random.normal(ks[6], (2 * D,), dtype=jnp.float32) * 0.02).reshape(1, 2 * D),
        "w_ln2": (1.0 + 0.1 * jax.random.normal(ks[10], (D,), dtype=jnp.float32)).reshape(1, D),
        "wi": jax.random.normal(ks[7], (D, D_FF), dtype=jnp.float32) * 0.05,
        "wo": jax.random.normal(ks[8], (D_FF, D), dtype=jnp.float32) * 0.05,
    }

    ref = jax.block_until_ready(reference_forward(h, params))

    # f32 MXU path: matches the PyTorch (eval, fp32) block semantics.
    out_f32 = jax.block_until_ready(
        locost_block(h, params, tl=TL, tff=TFF, mxu_dtype=jnp.float32))
    np.testing.assert_allclose(np.asarray(out_f32), np.asarray(ref), atol=3e-2, rtol=3e-2)

    # bf16 MXU operands (v6e/v7x fast path); norms/activations/residuals stay f32,
    # so only matmul rounding differs -> loose tolerance vs the f32 reference.
    out_bf16 = jax.block_until_ready(
        locost_block(h, params, tl=TL, tff=TFF, mxu_dtype=jnp.bfloat16))
    np.testing.assert_allclose(np.asarray(out_bf16), np.asarray(ref), atol=1e-1, rtol=1e-1)

    print("KERNEL_OK")
</pallas_src>

<mosaic_0001>
module attributes {stable_mosaic.version = 11 : i64} {
  func.func @_locost_block_kernel(%arg0: i32, %arg1: i32, %arg2: i32, %arg3: memref<1x128x128xf32, #tpu.memory_space<vmem>>, %arg4: memref<1x64x128xf32, #tpu.memory_space<vmem>>, %arg5: memref<1x128xf32, #tpu.memory_space<vmem>>, %arg6: memref<64x128xf32, #tpu.memory_space<vmem>>, %arg7: memref<1x128xf32, #tpu.memory_space<vmem>>, %arg8: memref<128x256xf32, #tpu.memory_space<vmem>>, %arg9: memref<1x256xf32, #tpu.memory_space<vmem>>, %arg10: memref<1x128xf32, #tpu.memory_space<vmem>>, %arg11: memref<128x128xf32, #tpu.memory_space<vmem>>, %arg12: memref<128x128xf32, #tpu.memory_space<vmem>>, %arg13: memref<1x128x128xf32, #tpu.memory_space<vmem>>, %arg14: memref<192x128xf32, #tpu.memory_space<vmem>>, %arg15: memref<128x128xf32, #tpu.memory_space<vmem>>) attributes {dimension_semantics = [#tpu.dimension_semantics<parallel>, #tpu.dimension_semantics<parallel>, #tpu.dimension_semantics<arbitrary>], iteration_bounds = array<i64: 2, 2, 2>, scalar_prefetch = 0 : i64, scratch_operands = 2 : i64, tpu.core_type = #tpu.core_type<tc>, window_params = [{transform_indices = @transform_0, window_bounds = array<i64: 1, 128, 128>}, {transform_indices = @transform_1, window_bounds = array<i64: 1, 64, 128>}, {pipeline_mode = #tpu.pipeline_mode<synchronous>, transform_indices = @transform_2, window_bounds = array<i64: 1, 128>}, {pipeline_mode = #tpu.pipeline_mode<synchronous>, transform_indices = @transform_3, window_bounds = array<i64: 64, 128>}, {pipeline_mode = #tpu.pipeline_mode<synchronous>, transform_indices = @transform_4, window_bounds = array<i64: 1, 128>}, {pipeline_mode = #tpu.pipeline_mode<synchronous>, transform_indices = @transform_5, window_bounds = array<i64: 128, 256>}, {pipeline_mode = #tpu.pipeline_mode<synchronous>, transform_indices = @transform_6, window_bounds = array<i64: 1, 256>}, {pipeline_mode = #tpu.pipeline_mode<synchronous>, transform_indices = @transform_7, window_bounds = array<i64: 1, 128>}, {transform_indices = @transform_8, window_bounds = array<i64: 128, 128>}, {transform_indices = @transform_9, window_bounds = array<i64: 128, 128>}, {transform_indices = @transform_10, window_bounds = array<i64: 1, 128, 128>}]} {
    %c0_i32 = arith.constant 0 : i32
    %0 = arith.cmpi eq, %arg2, %c0_i32 : i32
    %1 = arith.extui %0 : i1 to i32
    %c0_i32_0 = arith.constant 0 : i32
    %2 = arith.cmpi ne, %1, %c0_i32_0 : i32
    scf.if %2 {
      %c0_14 = arith.constant 0 : index
      %c0_15 = arith.constant 0 : index
      %16 = vector.load %arg5[%c0_14, %c0_15] : memref<1x128xf32, #tpu.memory_space<vmem>>, vector<1x128xf32>
      %17 = vector.shape_cast %16 : vector<1x128xf32> to vector<128xf32>
      %c0_16 = arith.constant 0 : index
      %c0_17 = arith.constant 0 : index
      %c0_18 = arith.constant 0 : index
      %18 = vector.load %arg3[%c0_16, %c0_17, %c0_18] : memref<1x128x128xf32, #tpu.memory_space<vmem>>, vector<1x128x128xf32>
      %19 = vector.shape_cast %18 : vector<1x128x128xf32> to vector<128x128xf32>
      %20 = arith.mulf %19, %19 : vector<128x128xf32>
      %cst_19 = arith.constant dense<0.000000e+00> : vector<128xf32>
      %21 = vector.multi_reduction <add>, %20, %cst_19 [1] : vector<128x128xf32> to vector<128xf32>
      %22 = vector.shape_cast %21 : vector<128xf32> to vector<128x1xf32>
      %cst_20 = arith.constant 1.280000e+02 : f32
      %23 = vector.broadcast %cst_20 : f32 to vector<128x1xf32>
      %24 = arith.divf %22, %23 : vector<128x1xf32>
      %cst_21 = arith.constant 9.99999997E-7 : f32
      %25 = vector.broadcast %cst_21 : f32 to vector<128x1xf32>
      %26 = arith.addf %24, %25 : vector<128x1xf32>
      %27 = math.rsqrt %26 : vector<128x1xf32>
      %28 = vector.broadcast %27 : vector<128x1xf32> to vector<128x128xf32>
      %29 = arith.mulf %19, %28 : vector<128x128xf32>
      %30 = vector.shape_cast %17 : vector<128xf32> to vector<1x128xf32>
      %31 = vector.broadcast %30 : vector<1x128xf32> to vector<128x128xf32>
      %32 = arith.mulf %29, %31 : vector<128x128xf32>
      %c0_22 = arith.constant 0 : index
      %c0_23 = arith.constant 0 : index
      %c0_24 = arith.constant 0 : index
      %33 = vector.load %arg4[%c0_22, %c0_23, %c0_24] : memref<1x64x128xf32, #tpu.memory_space<vmem>>, vector<1x64x128xf32>
      %34 = vector.shape_cast %33 : vector<1x64x128xf32> to vector<64x128xf32>
      %35 = arith.mulf %34, %34 : vector<64x128xf32>
      %cst_25 = arith.constant dense<0.000000e+00> : vector<64xf32>
      %36 = vector.multi_reduction <add>, %35, %cst_25 [1] : vector<64x128xf32> to vector<64xf32>
      %37 = vector.shape_cast %36 : vector<64xf32> to vector<64x1xf32>
      %cst_26 = arith.constant 1.280000e+02 : f32
      %38 = vector.broadcast %cst_26 : f32 to vector<64x1xf32>
      %39 = arith.divf %37, %38 : vector<64x1xf32>
      %cst_27 = arith.constant 9.99999997E-7 : f32
      %40 = vector.broadcast %cst_27 : f32 to vector<64x1xf32>
      %41 = arith.addf %39, %40 : vector<64x1xf32>
      %42 = math.rsqrt %41 : vector<64x1xf32>
      %43 = vector.broadcast %42 : vector<64x1xf32> to vector<64x128xf32>
      %44 = arith.mulf %34, %43 : vector<64x128xf32>
      %45 = vector.shape_cast %17 : vector<128xf32> to vector<1x128xf32>
      %46 = vector.broadcast %45 : vector<1x128xf32> to vector<64x128xf32>
      %47 = arith.mulf %44, %46 : vector<64x128xf32>
      %c0_i32_28 = arith.constant 0 : i32
      %48 = arith.cmpi sgt, %arg1, %c0_i32_28 : i32
      %49 = arith.extui %48 : i1 to i32
      %50 = arith.sitofp %49 : i32 to f32
      %51 = vector.broadcast %50 : f32 to vector<64x128xf32>
      %52 = arith.mulf %47, %51 : vector<64x128xf32>
      %c0_29 = arith.constant 0 : index
      %c0_30 = arith.constant 0 : index
      %53 = vector.load %arg14[%c0_29, %c0_30] : memref<192x128xf32, #tpu.memory_space<vmem>>, vector<64x128xf32>
      tpu.vector_store %arg14[%c0_29, %c0_30], %52 {strides = array<i32>} : memref<192x128xf32, #tpu.memory_space<vmem>>, vector<64x128xf32>,
      %c64 = arith.constant 64 : index
      %c0_31 = arith.constant 0 : index
      %54 = vector.load %arg14[%c64, %c0_31] : memref<192x128xf32, #tpu.memory_space<vmem>>, vector<128x128xf32>
      tpu.vector_store %arg14[%c64, %c0_31], %32 {strides = array<i32>} : memref<192x128xf32, #tpu.memory_space<vmem>>, vector<128x128xf32>,
      %c0_32 = arith.constant 0 : index
      %c0_33 = arith.constant 0 : index
      %55 = vector.load %arg7[%c0_32, %c0_33] : memref<1x128xf32, #tpu.memory_space<vmem>>, vector<1x128xf32>
      %56 = vector.shape_cast %55 : vector<1x128xf32> to vector<128xf32>
      %57 = vector.shape_cast %56 : vector<128xf32> to vector<1x128xf32>
      %58 = vector.broadcast %57 : vector<1x128xf32> to vector<128x128xf32>
      %59 = arith.mulf %32, %58 : vector<128x128xf32>
      %c0_34 = arith.constant 0 : index
      %c0_35 = arith.constant 0 : index
      %60 = vector.load %arg6[%c0_34, %c0_35] : memref<64x128xf32, #tpu.memory_space<vmem>>, vector<1x128xf32>
      %c64_36 = arith.constant 64 : index
      %c0_37 = arith.constant 0 : index
      %61 = vector.load %arg14[%c64_36, %c0_37] : memref<192x128xf32, #tpu.memory_space<vmem>>, vector<128x128xf32>
      %62 = vector.broadcast %60 : vector<1x128xf32> to vector<128x128xf32>
      %63 = arith.mulf %62, %61 : vector<128x128xf32>
      %64 = arith.addf %59, %63 : vector<128x128xf32>
      %c1 = arith.constant 1 : index
      %c0_38 = arith.constant 0 : index
      %65 = vector.load %arg6[%c1, %c0_38] : memref<64x128xf32, #tpu.memory_space<vmem>>, vector<1x128xf32>
      %c63 = arith.constant 63 : index
      %c0_39 = arith.constant 0 : index
      %66 = vector.load %arg14[%c63, %c0_39] : memref<192x128xf32, #tpu.memory_space<vmem>>, vector<128x128xf32>
      %67 = vector.broadcast %65 : vector<1x128xf32> to vector<128x128xf32>
      %68 = arith.mulf %67, %66 : vector<128x128xf32>
      %69 = arith.addf %64, %68 : vector<128x128xf32>
      %c2 = arith.constant 2 : index
      %c0_40 = arith.constant 0 : index
      %70 = vector.load %arg6[%c2, %c0_40] : memref<64x128xf32, #tpu.memory_space<vmem>>, vector<1x128xf32>
      %c62 = arith.constant 62 : index
      %c0_41 = arith.constant 0 : index
      %71 = vector.load %arg14[%c62, %c0_41] : memref<192x128xf32, #tpu.memory_space<vmem>>, vector<128x128xf32>
      %72 = vector.broadcast %70 : vector<1x128xf32> to vector<128x128xf32>
      %73 = arith.mulf %72, %71 : vector<128x128xf32>
      %74 = arith.addf %69, %73 : vector<128x128xf32>
      %c3 = arith.constant 3 : index
      %c0_42 = arith.constant 0 : index
      %75 = vector.load %arg6[%c3, %c0_42] : memref<64x128xf32, #tpu.memory_space<vmem>>, vector<1x128xf32>
      %c61 = arith.constant 61 : index
      %c0_43 = arith.constant 0 : index
      %76 = vector.load %arg14[%c61, %c0_43] : memref<192x128xf32, #tpu.memory_space<vmem>>, vector<128x128xf32>
      %77 = vector.broadcast %75 : vector<1x128xf32> to vector<128x128xf32>
      %78 = arith.mulf %77, %76 : vector<128x128xf32>
      %79 = arith.addf %74, %78 : vector<128x128xf32>
      %c4 = arith.constant 4 : index
      %c0_44 = arith.constant 0 : index
      %80 = vector.load %arg6[%c4, %c0_44] : memref<64x128xf32, #tpu.memory_space<vmem>>, vector<1x128xf32>
      %c60 = arith.constant 60 : index
      %c0_45 = arith.constant 0 : index
      %81 = vector.load %arg14[%c60, %c0_45] : memref<192x128xf32, #tpu.memory_space<vmem>>, vector<128x128xf32>
      %82 = vector.broadcast %80 : vector<1x128xf32> to vector<128x128xf32>
      %83 = arith.mulf %82, %81 : vector<128x128xf32>
      %84 = arith.addf %79, %83 : vector<128x128xf32>
      %c5 = arith.constant 5 : index
      %c0_46 = arith.constant 0 : index
      %85 = vector.load %arg6[%c5, %c0_46] : memref<64x128xf32, #tpu.memory_space<vmem>>, vector<1x128xf32>
      %c59 = arith.constant 59 : index
      %c0_47 = arith.constant 0 : index
      %86 = vector.load %arg14[%c59, %c0_47] : memref<192x128xf32, #tpu.memory_space<vmem>>, vector<128x128xf32>
      %87 = vector.broadcast %85 : vector<1x128xf32> to vector<128x128xf32>
      %88 = arith.mulf %87, %86 : vector<128x128xf32>
      %89 = arith.addf %84, %88 : vector<128x128xf32>
      %c6 = arith.constant 6 : index
      %c0_48 = arith.constant 0 : index
      %90 = vector.load %arg6[%c6, %c0_48] : memref<64x128xf32, #tpu.memory_space<vmem>>, vector<1x128xf32>
      %c58 = arith.constant 58 : index
      %c0_49 = arith.constant 0 : index
      %91 = vector.load %arg14[%c58, %c0_49] : memref<192x128xf32, #tpu.memory_space<vmem>>, vector<128x128xf32>
      %92 = vector.broadcast %90 : vector<1x128xf32> to vector<128x128xf32>
      %93 = arith.mulf %92, %91 : vector<128x128xf32>
      %94 = arith.addf %89, %93 : vector<128x128xf32>
      %c7 = arith.constant 7 : index
      %c0_50 = arith.constant 0 : index
      %95 = vector.load %arg6[%c7, %c0_50] : memref<64x128xf32, #tpu.memory_space<vmem>>, vector<1x128xf32>
      %c57 = arith.constant 57 : index
      %c0_51 = arith.constant 0 : index
      %96 = vector.load %arg14[%c57, %c0_51] : memref<192x128xf32, #tpu.memory_space<vmem>>, vector<128x128xf32>
      %97 = vector.broadcast %95 : vector<1x128xf32> to vector<128x128xf32>
      %98 = arith.mulf %97, %96 : vector<128x128xf32>
      %99 = arith.addf %94, %98 : vector<128x128xf32>
      %c8 = arith.constant 8 : index
      %c0_52 = arith.constant 0 : index
      %100 = vector.load %arg6[%c8, %c0_52] : memref<64x128xf32, #tpu.memory_space<vmem>>, vector<1x128xf32>
      %c56 = arith.constant 56 : index
      %c0_53 = arith.constant 0 : index
      %101 = vector.load %arg14[%c56, %c0_53] : memref<192x128xf32, #tpu.memory_space<vmem>>, vector<128x128xf32>
      %102 = vector.broadcast %100 : vector<1x128xf32> to vector<128x128xf32>
      %103 = arith.mulf %102, %101 : vector<128x128xf32>
      %104 = arith.addf %99, %103 : vector<128x128xf32>
      %c9 = arith.constant 9 : index
      %c0_54 = arith.constant 0 : index
      %105 = vector.load %arg6[%c9, %c0_54] : memref<64x128xf32, #tpu.memory_space<vmem>>, vector<1x128xf32>
      %c55 = arith.constant 55 : index
      %c0_55 = arith.constant 0 : index
      %106 = vector.load %arg14[%c55, %c0_55] : memref<192x128xf32, #tpu.memory_space<vmem>>, vector<128x128xf32>
      %107 = vector.broadcast %105 : vector<1x128xf32> to vector<128x128xf32>
      %108 = arith.mulf %107, %106 : vector<128x128xf32>
      %109 = arith.addf %104, %108 : vector<128x128xf32>
      %c10 = arith.constant 10 : index
      %c0_56 = arith.constant 0 : index
      %110 = vector.load %arg6[%c10, %c0_56] : memref<64x128xf32, #tpu.memory_space<vmem>>, vector<1x128xf32>
      %c54 = arith.constant 54 : index
      %c0_57 = arith.constant 0 : index
      %111 = vector.load %arg14[%c54, %c0_57] : memref<192x128xf32, #tpu.memory_space<vmem>>, vector<128x128xf32>
      %112 = vector.broadcast %110 : vector<1x128xf32> to vector<128x128xf32>
      %113 = arith.mulf %112, %111 : vector<128x128xf32>
      %114 = arith.addf %109, %113 : vector<128x128xf32>
      %c11 = arith.constant 11 : index
      %c0_58 = arith.constant 0 : index
      %115 = vector.load %arg6[%c11, %c0_58] : memref<64x128xf32, #tpu.memory_space<vmem>>, vector<1x128xf32>
      %c53 = arith.constant 53 : index
      %c0_59 = arith.constant 0 : index
      %116 = vector.load %arg14[%c53, %c0_59] : memref<192x128xf32, #tpu.memory_space<vmem>>, vector<128x128xf32>
      %117 = vector.broadcast %115 : vector<1x128xf32> to vector<128x128xf32>
      %118 = arith.mulf %117, %116 : vector<128x128xf32>
      %119 = arith.addf %114, %118 : vector<128x128xf32>
      %c12 = arith.constant 12 : index
      %c0_60 = arith.constant 0 : index
      %120 = vector.load %arg6[%c12, %c0_60] : memref<64x128xf32, #tpu.memory_space<vmem>>, vector<1x128xf32>
      %c52 = arith.constant 52 : index
      %c0_61 = arith.constant 0 : index
      %121 = vector.load %arg14[%c52, %c0_61] : memref<192x128xf32, #tpu.memory_space<vmem>>, vector<128x128xf32>
      %122 = vector.broadcast %120 : vector<1x128xf32> to vector<128x128xf32>
      %123 = arith.mulf %122, %121 : vector<128x128xf32>
      %124 = arith.addf %119, %123 : vector<128x128xf32>
      %c13 = arith.constant 13 : index
      %c0_62 = arith.constant 0 : index
      %125 = vector.load %arg6[%c13, %c0_62] : memref<64x128xf32, #tpu.memory_space<vmem>>, vector<1x128xf32>
      %c51 = arith.constant 51 : index
      %c0_63 = arith.constant 0 : index
      %126 = vector.load %arg14[%c51, %c0_63] : memref<192x128xf32, #tpu.memory_space<vmem>>, vector<128x128xf32>
      %127 = vector.broadcast %125 : vector<1x128xf32> to vector<128x128xf32>
      %128 = arith.mulf %127, %126 : vector<128x128xf32>
      %129 = arith.addf %124, %128 : vector<128x128xf32>
      %c14 = arith.constant 14 : index
      %c0_64 = arith.constant 0 : index
      %130 = vector.load %arg6[%c14, %c0_64] : memref<64x128xf32, #tpu.memory_space<vmem>>, vector<1x128xf32>
      %c50 = arith.constant 50 : index
      %c0_65 = arith.constant 0 : index
      %131 = vector.load %arg14[%c50, %c0_65] : memref<192x128xf32, #tpu.memory_space<vmem>>, vector<128x128xf32>
      %132 = vector.broadcast %130 : vector<1x128xf32> to vector<128x128xf32>
      %133 = arith.mulf %132, %131 : vector<128x128xf32>
      %134 = arith.addf %129, %133 : vector<128x128xf32>
      %c15 = arith.constant 15 : index
      %c0_66 = arith.constant 0 : index
      %135 = vector.load %arg6[%c15, %c0_66] : memref<64x128xf32, #tpu.memory_space<vmem>>, vector<1x128xf32>
      %c49 = arith.constant 49 : index
      %c0_67 = arith.constant 0 : index
      %136 = vector.load %arg14[%c49, %c0_67] : memref<192x128xf32, #tpu.memory_space<vmem>>, vector<128x128xf32>
      %137 = vector.broadcast %135 : vector<1x128xf32> to vector<128x128xf32>
      %138 = arith.mulf %137, %136 : vector<128x128xf32>
      %139 = arith.addf %134, %138 : vector<128x128xf32>
      %c16 = arith.constant 16 : index
      %c0_68 = arith.constant 0 : index
      %140 = vector.load %arg6[%c16, %c0_68] : memref<64x128xf32, #tpu.memory_space<vmem>>, vector<1x128xf32>
      %c48 = arith.constant 48 : index
      %c0_69 = arith.constant 0 : index
      %141 = vector.load %arg14[%c48, %c0_69] : memref<192x128xf32, #tpu.memory_space<vmem>>, vector<128x128xf32>
      %142 = vector.broadcast %140 : vector<1x128xf32> to vector<128x128xf32>
      %143 = arith.mulf %142, %141 : vector<128x128xf32>
      %144 = arith.addf %139, %143 : vector<128x128xf32>
      %c17 = arith.constant 17 : index
      %c0_70 = arith.constant 0 : index
      %145 = vector.load %arg6[%c17, %c0_70] : memref<64x128xf32, #tpu.memory_space<vmem>>, vector<1x128xf32>
      %c47 = arith.constant 47 : index
      %c0_71 = arith.constant 0 : index
      %146 = vector.load %arg14[%c47, %c0_71] : memref<192x128xf32, #tpu.memory_space<vmem>>, vector<128x128xf32>
      %147 = vector.broadcast %145 : vector<1x128xf32> to vector<128x128xf32>
      %148 = arith.mulf %147, %146 : vector<128x128xf32>
      %149 = arith.addf %144, %148 : vector<128x128xf32>
      %c18 = arith.constant 18 : index
      %c0_72 = arith.constant 0 : index
      %150 = vector.load %arg6[%c18, %c0_72] : memref<64x128xf32, #tpu.memory_space<vmem>>, vector<1x128xf32>
      %c46 = arith.constant 46 : index
      %c0_73 = arith.constant 0 : index
      %151 = vector.load %arg14[%c46, %c0_73] : memref<192x128xf32, #tpu.memory_space<vmem>>, vector<128x128xf32>
      %152 = vector.broadcast %150 : vector<1x128xf32> to vector<128x128xf32>
      %153 = arith.mulf %152, %151 : vector<128x128xf32>
      %154 = arith.addf %149, %153 : vector<128x128xf32>
      %c19 = arith.constant 19 : index
      %c0_74 = arith.constant 0 : index
      %155 = vector.load %arg6[%c19, %c0_74] : memref<64x128xf32, #tpu.memory_space<vmem>>, vector<1x128xf32>
      %c45 = arith.constant 45 : index
      %c0_75 = arith.constant 0 : index
      %156 = vector.load %arg14[%c45, %c0_75] : memref<192x128xf32, #tpu.memory_space<vmem>>, vector<128x128xf32>
      %157 = vector.broadcast %155 : vector<1x128xf32> to vector<128x128xf32>
      %158 = arith.mulf %157, %156 : vector<128x128xf32>
      %159 = arith.addf %154, %158 : vector<128x128xf32>
      %c20 = arith.constant 20 : index
      %c0_76 = arith.constant 0 : index
      %160 = vector.load %arg6[%c20, %c0_76] : memref<64x128xf32, #tpu.memory_space<vmem>>, vector<1x128xf32>
      %c44 = arith.constant 44 : index
      %c0_77 = arith.constant 0 : index
      %161 = vector.load %arg14[%c44, %c0_77] : memref<192x128xf32, #tpu.memory_space<vmem>>, vector<128x128xf32>
      %162 = vector.broadcast %160 : vector<1x128xf32> to vector<128x128xf32>
      %163 = arith.mulf %162, %161 : vector<128x128xf32>
      %164 = arith.addf %159, %163 : vector<128x128xf32>
      %c21 = arith.constant 21 : index
      %c0_78 = arith.constant 0 : index
      %165 = vector.load %arg6[%c21, %c0_78] : memref<64x128xf32, #tpu.memory_space<vmem>>, vector<1x128xf32>
      %c43 = arith.constant 43 : index
      %c0_79 = arith.constant 0 : index
      %166 = vector.load %arg14[%c43, %c0_79] : memref<192x128xf32, #tpu.memory_space<vmem>>, vector<128x128xf32>
      %167 = vector.broadcast %165 : vector<1x128xf32> to vector<128x128xf32>
      %168 = arith.mulf %167, %166 : vector<128x128xf32>
      %169 = arith.addf %164, %168 : vector<128x128xf32>
      %c22 = arith.constant 22 : index
      %c0_80 = arith.constant 0 : index
      %170 = vector.load %arg6[%c22, %c0_80] : memref<64x128xf32, #tpu.memory_space<vmem>>, vector<1x128xf32>
      %c42 = arith.constant 42 : index
      %c0_81 = arith.constant 0 : index
      %171 = vector.load %arg14[%c42, %c0_81] : memref<192x128xf32, #tpu.memory_space<vmem>>, vector<128x128xf32>
      %172 = vector.broadcast %170 : vector<1x128xf32> to vector<128x128xf32>
      %173 = arith.mulf %172, %171 : vector<128x128xf32>
      %174 = arith.addf %169, %173 : vector<128x128xf32>
      %c23 = arith.constant 23 : index
      %c0_82 = arith.constant 0 : index
      %175 = vector.load %arg6[%c23, %c0_82] : memref<64x128xf32, #tpu.memory_space<vmem>>, vector<1x128xf32>
      %c41 = arith.constant 41 : index
      %c0_83 = arith.constant 0 : index
      %176 = vector.load %arg14[%c41, %c0_83] : memref<192x128xf32, #tpu.memory_space<vmem>>, vector<128x128xf32>
      %177 = vector.broadcast %175 : vector<1x128xf32> to vector<128x128xf32>
      %178 = arith.mulf %177, %176 : vector<128x128xf32>
      %179 = arith.addf %174, %178 : vector<128x128xf32>
      %c24 = arith.constant 24 : index
      %c0_84 = arith.constant 0 : index
      %180 = vector.load %arg6[%c24, %c0_84] : memref<64x128xf32, #tpu.memory_space<vmem>>, vector<1x128xf32>
      %c40 = arith.constant 40 : index
      %c0_85 = arith.constant 0 : index
      %181 = vector.load %arg14[%c40, %c0_85] : memref<192x128xf32, #tpu.memory_space<vmem>>, vector<128x128xf32>
      %182 = vector.broadcast %180 : vector<1x128xf32> to vector<128x128xf32>
      %183 = arith.mulf %182, %181 : vector<128x128xf32>
      %184 = arith.addf %179, %183 : vector<128x128xf32>
      %c25 = arith.constant 25 : index
      %c0_86 = arith.constant 0 : index
      %185 = vector.load %arg6[%c25, %c0_86] : memref<64x128xf32, #tpu.memory_space<vmem>>, vector<1x128xf32>
      %c39 = arith.constant 39 : index
      %c0_87 = arith.constant 0 : index
      %186 = vector.load %arg14[%c39, %c0_87] : memref<192x128xf32, #tpu.memory_space<vmem>>, vector<128x128xf32>
      %187 = vector.broadcast %185 : vector<1x128xf32> to vector<128x128xf32>
      %188 = arith.mulf %187, %186 : vector<128x128xf32>
      %189 = arith.addf %184, %188 : vector<128x128xf32>
      %c26 = arith.constant 26 : index
      %c0_88 = arith.constant 0 : index
      %190 = vector.load %arg6[%c26, %c0_88] : memref<64x128xf32, #tpu.memory_space<vmem>>, vector<1x128xf32>
      %c38 = arith.constant 38 : index
      %c0_89 = arith.constant 0 : index
      %191 = vector.load %arg14[%c38, %c0_89] : memref<192x128xf32, #tpu.memory_space<vmem>>, vector<128x128xf32>
      %192 = vector.broadcast %190 : vector<1x128xf32> to vector<128x128xf32>
      %193 = arith.mulf %192, %191 : vector<128x128xf32>
      %194 = arith.addf %189, %193 : vector<128x128xf32>
      %c27 = arith.constant 27 : index
      %c0_90 = arith.constant 0 : index
      %195 = vector.load %arg6[%c27, %c0_90] : memref<64x128xf32, #tpu.memory_space<vmem>>, vector<1x128xf32>
      %c37 = arith.constant 37 : index
      %c0_91 = arith.constant 0 : index
      %196 = vector.load %arg14[%c37, %c0_91] : memref<192x128xf32, #tpu.memory_space<vmem>>, vector<128x128xf32>
      %197 = vector.broadcast %195 : vector<1x128xf32> to vector<128x128xf32>
      %198 = arith.mulf %197, %196 : vector<128x128xf32>
      %199 = arith.addf %194, %198 : vector<128x128xf32>
      %c28 = arith.constant 28 : index
      %c0_92 = arith.constant 0 : index
      %200 = vector.load %arg6[%c28, %c0_92] : memref<64x128xf32, #tpu.memory_space<vmem>>, vector<1x128xf32>
      %c36 = arith.constant 36 : index
      %c0_93 = arith.constant 0 : index
      %201 = vector.load %arg14[%c36, %c0_93] : memref<192x128xf32, #tpu.memory_space<vmem>>, vector<128x128xf32>
      %202 = vector.broadcast %200 : vector<1x128xf32> to vector<128x128xf32>
      %203 = arith.mulf %202, %201 : vector<128x128xf32>
      %204 = arith.addf %199, %203 : vector<128x128xf32>
      %c29 = arith.constant 29 : index
      %c0_94 = arith.constant 0 : index
      %205 = vector.load %arg6[%c29, %c0_94] : memref<64x128xf32, #tpu.memory_space<vmem>>, vector<1x128xf32>
      %c35 = arith.constant 35 : index
      %c0_95 = arith.constant 0 : index
      %206 = vector.load %arg14[%c35, %c0_95] : memref<192x128xf32, #tpu.memory_space<vmem>>, vector<128x128xf32>
      %207 = vector.broadcast %205 : vector<1x128xf32> to vector<128x128xf32>
      %208 = arith.mulf %207, %206 : vector<128x128xf32>
      %209 = arith.addf %204, %208 : vector<128x128xf32>
      %c30 = arith.constant 30 : index
      %c0_96 = arith.constant 0 : index
      %210 = vector.load %arg6[%c30, %c0_96] : memref<64x128xf32, #tpu.memory_space<vmem>>, vector<1x128xf32>
      %c34 = arith.constant 34 : index
      %c0_97 = arith.constant 0 : index
      %211 = vector.load %arg14[%c34, %c0_97] : memref<192x128xf32, #tpu.memory_space<vmem>>, vector<128x128xf32>
      %212 = vector.broadcast %210 : vector<1x128xf32> to vector<128x128xf32>
      %213 = arith.mulf %212, %211 : vector<128x128xf32>
      %214 = arith.addf %209, %213 : vector<128x128xf32>
      %c31 = arith.constant 31 : index
      %c0_98 = arith.constant 0 : index
      %215 = vector.load %arg6[%c31, %c0_98] : memref<64x128xf32, #tpu.memory_space<vmem>>, vector<1x128xf32>
      %c33 = arith.constant 33 : index
      %c0_99 = arith.constant 0 : index
      %216 = vector.load %arg14[%c33, %c0_99] : memref<192x128xf32, #tpu.memory_space<vmem>>, vector<128x128xf32>
      %217 = vector.broadcast %215 : vector<1x128xf32> to vector<128x128xf32>
      %218 = arith.mulf %217, %216 : vector<128x128xf32>
      %219 = arith.addf %214, %218 : vector<128x128xf32>
      %c32 = arith.constant 32 : index
      %c0_100 = arith.constant 0 : index
      %220 = vector.load %arg6[%c32, %c0_100] : memref<64x128xf32, #tpu.memory_space<vmem>>, vector<1x128xf32>
      %c32_101 = arith.constant 32 : index
      %c0_102 = arith.constant 0 : index
      %221 = vector.load %arg14[%c32_101, %c0_102] : memref<192x128xf32, #tpu.memory_space<vmem>>, vector<128x128xf32>
      %222 = vector.broadcast %220 : vector<1x128xf32> to vector<128x128xf32>
      %223 = arith.mulf %222, %221 : vector<128x128xf32>
      %224 = arith.addf %219, %223 : vector<128x128xf32>
      %c33_103 = arith.constant 33 : index
      %c0_104 = arith.constant 0 : index
      %225 = vector.load %arg6[%c33_103, %c0_104] : memref<64x128xf32, #tpu.memory_space<vmem>>, vector<1x128xf32>
      %c31_105 = arith.constant 31 : index
      %c0_106 = arith.constant 0 : index
      %226 = vector.load %arg14[%c31_105, %c0_106] : memref<192x128xf32, #tpu.memory_space<vmem>>, vector<128x128xf32>
      %227 = vector.broadcast %225 : vector<1x128xf32> to vector<128x128xf32>
      %228 = arith.mulf %227, %226 : vector<128x128xf32>
      %229 = arith.addf %224, %228 : vector<128x128xf32>
      %c34_107 = arith.constant 34 : index
      %c0_108 = arith.constant 0 : index
      %230 = vector.load %arg6[%c34_107, %c0_108] : memref<64x128xf32, #tpu.memory_space<vmem>>, vector<1x128xf32>
      %c30_109 = arith.constant 30 : index
      %c0_110 = arith.constant 0 : index
      %231 = vector.load %arg14[%c30_109, %c0_110] : memref<192x128xf32, #tpu.memory_space<vmem>>, vector<128x128xf32>
      %232 = vector.broadcast %230 : vector<1x128xf32> to vector<128x128xf32>
      %233 = arith.mulf %232, %231 : vector<128x128xf32>
      %234 = arith.addf %229, %233 : vector<128x128xf32>
      %c35_111 = arith.constant 35 : index
      %c0_112 = arith.constant 0 : index
      %235 = vector.load %arg6[%c35_111, %c0_112] : memref<64x128xf32, #tpu.memory_space<vmem>>, vector<1x128xf32>
      %c29_113 = arith.constant 29 : index
      %c0_114 = arith.constant 0 : index
      %236 = vector.load %arg14[%c29_113, %c0_114] : memref<192x128xf32, #tpu.memory_space<vmem>>, vector<128x128xf32>
      %237 = vector.broadcast %235 : vector<1x128xf32> to vector<128x128xf32>
      %238 = arith.mulf %237, %236 : vector<128x128xf32>
      %239 = arith.addf %234, %238 : vector<128x128xf32>
      %c36_115 = arith.constant 36 : index
      %c0_116 = arith.constant 0 : index
      %240 = vector.load %arg6[%c36_115, %c0_116] : memref<64x128xf32, #tpu.memory_space<vmem>>, vector<1x128xf32>
      %c28_117 = arith.constant 28 : index
      %c0_118 = arith.constant 0 : index
      %241 = vector.load %arg14[%c28_117, %c0_118] : memref<192x128xf32, #tpu.memory_space<vmem>>, vector<128x128xf32>
      %242 = vector.broadcast %240 : vector<1x128xf32> to vector<128x128xf32>
      %243 = arith.mulf %242, %241 : vector<128x128xf32>
      %244 = arith.addf %239, %243 : vector<128x128xf32>
      %c37_119 = arith.constant 37 : index
      %c0_120 = arith.constant 0 : index
      %245 = vector.load %arg6[%c37_119, %c0_120] : memref<64x128xf32, #tpu.memory_space<vmem>>, vector<1x128xf32>
      %c27_121 = arith.constant 27 : index
      %c0_122 = arith.constant 0 : index
      %246 = vector.load %arg14[%c27_121, %c0_122] : memref<192x128xf32, #tpu.memory_space<vmem>>, vector<128x128xf32>
      %247 = vector.broadcast %245 : vector<1x128xf32> to vector<128x128xf32>
      %248 = arith.mulf %247, %246 : vector<128x128xf32>
      %249 = arith.addf %244, %248 : vector<128x128xf32>
      %c38_123 = arith.constant 38 : index
      %c0_124 = arith.constant 0 : index
      %250 = vector.load %arg6[%c38_123, %c0_124] : memref<64x128xf32, #tpu.memory_space<vmem>>, vector<1x128xf32>
      %c26_125 = arith.constant 26 : index
      %c0_126 = arith.constant 0 : index
      %251 = vector.load %arg14[%c26_125, %c0_126] : memref<192x128xf32, #tpu.memory_space<vmem>>, vector<128x128xf32>
      %252 = vector.broadcast %250 : vector<1x128xf32> to vector<128x128xf32>
      %253 = arith.mulf %252, %251 : vector<128x128xf32>
      %254 = arith.addf %249, %253 : vector<128x128xf32>
      %c39_127 = arith.constant 39 : index
      %c0_128 = arith.constant 0 : index
      %255 = vector.load %arg6[%c39_127, %c0_128] : memref<64x128xf32, #tpu.memory_space<vmem>>, vector<1x128xf32>
      %c25_129 = arith.constant 25 : index
      %c0_130 = arith.constant 0 : index
      %256 = vector.load %arg14[%c25_129, %c0_130] : memref<192x128xf32, #tpu.memory_space<vmem>>, vector<128x128xf32>
      %257 = vector.broadcast %255 : vector<1x128xf32> to vector<128x128xf32>
      %258 = arith.mulf %257, %256 : vector<128x128xf32>
      %259 = arith.addf %254, %258 : vector<128x128xf32>
      %c40_131 = arith.constant 40 : index
      %c0_132 = arith.constant 0 : index
      %260 = vector.load %arg6[%c40_131, %c0_132] : memref<64x128xf32, #tpu.memory_space<vmem>>, vector<1x128xf32>
      %c24_133 = arith.constant 24 : index
      %c0_134 = arith.constant 0 : index
      %261 = vector.load %arg14[%c24_133, %c0_134] : memref<192x128xf32, #tpu.memory_space<vmem>>, vector<128x128xf32>
      %262 = vector.broadcast %260 : vector<1x128xf32> to vector<128x128xf32>
      %263 = arith.mulf %262, %261 : vector<128x128xf32>
      %264 = arith.addf %259, %263 : vector<128x128xf32>
      %c41_135 = arith.constant 41 : index
      %c0_136 = arith.constant 0 : index
      %265 = vector.load %arg6[%c41_135, %c0_136] : memref<64x128xf32, #tpu.memory_space<vmem>>, vector<1x128xf32>
      %c23_137 = arith.constant 23 : index
      %c0_138 = arith.constant 0 : index
      %266 = vector.load %arg14[%c23_137, %c0_138] : memref<192x128xf32, #tpu.memory_space<vmem>>, vector<128x128xf32>
      %267 = vector.broadcast %265 : vector<1x128xf32> to vector<128x128xf32>
      %268 = arith.mulf %267, %266 : vector<128x128xf32>
      %269 = arith.addf %264, %268 : vector<128x128xf32>
      %c42_139 = arith.constant 42 : index
      %c0_140 = arith.constant 0 : index
      %270 = vector.load %arg6[%c42_139, %c0_140] : memref<64x128xf32, #tpu.memory_space<vmem>>, vector<1x128xf32>
      %c22_141 = arith.constant 22 : index
      %c0_142 = arith.constant 0 : index
      %271 = vector.load %arg14[%c22_141, %c0_142] : memref<192x128xf32, #tpu.memory_space<vmem>>, vector<128x128xf32>
      %272 = vector.broadcast %270 : vector<1x128xf32> to vector<128x128xf32>
      %273 = arith.mulf %272, %271 : vector<128x128xf32>
      %274 = arith.addf %269, %273 : vector<128x128xf32>
      %c43_143 = arith.constant 43 : index
      %c0_144 = arith.constant 0 : index
      %275 = vector.load %arg6[%c43_143, %c0_144] : memref<64x128xf32, #tpu.memory_space<vmem>>, vector<1x128xf32>
      %c21_145 = arith.constant 21 : index
      %c0_146 = arith.constant 0 : index
      %276 = vector.load %arg14[%c21_145, %c0_146] : memref<192x128xf32, #tpu.memory_space<vmem>>, vector<128x128xf32>
      %277 = vector.broadcast %275 : vector<1x128xf32> to vector<128x128xf32>
      %278 = arith.mulf %277, %276 : vector<128x128xf32>
      %279 = arith.addf %274, %278 : vector<128x128xf32>
      %c44_147 = arith.constant 44 : index
      %c0_148 = arith.constant 0 : index
      %280 = vector.load %arg6[%c44_147, %c0_148] : memref<64x128xf32, #tpu.memory_space<vmem>>, vector<1x128xf32>
      %c20_149 = arith.constant 20 : index
      %c0_150 = arith.constant 0 : index
      %281 = vector.load %arg14[%c20_149, %c0_150] : memref<192x128xf32, #tpu.memory_space<vmem>>, vector<128x128xf32>
      %282 = vector.broadcast %280 : vector<1x128xf32> to vector<128x128xf32>
      %283 = arith.mulf %282, %281 : vector<128x128xf32>
      %284 = arith.addf %279, %283 : vector<128x128xf32>
      %c45_151 = arith.constant 45 : index
      %c0_152 = arith.constant 0 : index
      %285 = vector.load %arg6[%c45_151, %c0_152] : memref<64x128xf32, #tpu.memory_space<vmem>>, vector<1x128xf32>
      %c19_153 = arith.constant 19 : index
      %c0_154 = arith.constant 0 : index
      %286 = vector.load %arg14[%c19_153, %c0_154] : memref<192x128xf32, #tpu.memory_space<vmem>>, vector<128x128xf32>
      %287 = vector.broadcast %285 : vector<1x128xf32> to vector<128x128xf32>
      %288 = arith.mulf %287, %286 : vector<128x128xf32>
      %289 = arith.addf %284, %288 : vector<128x128xf32>
      %c46_155 = arith.constant 46 : index
      %c0_156 = arith.constant 0 : index
      %290 = vector.load %arg6[%c46_155, %c0_156] : memref<64x128xf32, #tpu.memory_space<vmem>>, vector<1x128xf32>
      %c18_157 = arith.constant 18 : index
      %c0_158 = arith.constant 0 : index
      %291 = vector.load %arg14[%c18_157, %c0_158] : memref<192x128xf32, #tpu.memory_space<vmem>>, vector<128x128xf32>
      %292 = vector.broadcast %290 : vector<1x128xf32> to vector<128x128xf32>
      %293 = arith.mulf %292, %291 : vector<128x128xf32>
      %294 = arith.addf %289, %293 : vector<128x128xf32>
      %c47_159 = arith.constant 47 : index
      %c0_160 = arith.constant 0 : index
      %295 = vector.load %arg6[%c47_159, %c0_160] : memref<64x128xf32, #tpu.memory_space<vmem>>, vector<1x128xf32>
      %c17_161 = arith.constant 17 : index
      %c0_162 = arith.constant 0 : index
      %296 = vector.load %arg14[%c17_161, %c0_162] : memref<192x128xf32, #tpu.memory_space<vmem>>, vector<128x128xf32>
      %297 = vector.broadcast %295 : vector<1x128xf32> to vector<128x128xf32>
      %298 = arith.mulf %297, %296 : vector<128x128xf32>
      %299 = arith.addf %294, %298 : vector<128x128xf32>
      %c48_163 = arith.constant 48 : index
      %c0_164 = arith.constant 0 : index
      %300 = vector.load %arg6[%c48_163, %c0_164] : memref<64x128xf32, #tpu.memory_space<vmem>>, vector<1x128xf32>
      %c16_165 = arith.constant 16 : index
      %c0_166 = arith.constant 0 : index
      %301 = vector.load %arg14[%c16_165, %c0_166] : memref<192x128xf32, #tpu.memory_space<vmem>>, vector<128x128xf32>
      %302 = vector.broadcast %300 : vector<1x128xf32> to vector<128x128xf32>
      %303 = arith.mulf %302, %301 : vector<128x128xf32>
      %304 = arith.addf %299, %303 : vector<128x128xf32>
      %c49_167 = arith.constant 49 : index
      %c0_168 = arith.constant 0 : index
      %305 = vector.load %arg6[%c49_167, %c0_168] : memref<64x128xf32, #tpu.memory_space<vmem>>, vector<1x128xf32>
      %c15_169 = arith.constant 15 : index
      %c0_170 = arith.constant 0 : index
      %306 = vector.load %arg14[%c15_169, %c0_170] : memref<192x128xf32, #tpu.memory_space<vmem>>, vector<128x128xf32>
      %307 = vector.broadcast %305 : vector<1x128xf32> to vector<128x128xf32>
      %308 = arith.mulf %307, %306 : vector<128x128xf32>
      %309 = arith.addf %304, %308 : vector<128x128xf32>
      %c50_171 = arith.constant 50 : index
      %c0_172 = arith.constant 0 : index
      %310 = vector.load %arg6[%c50_171, %c0_172] : memref<64x128xf32, #tpu.memory_space<vmem>>, vector<1x128xf32>
      %c14_173 = arith.constant 14 : index
      %c0_174 = arith.constant 0 : index
      %311 = vector.load %arg14[%c14_173, %c0_174] : memref<192x128xf32, #tpu.memory_space<vmem>>, vector<128x128xf32>
      %312 = vector.broadcast %310 : vector<1x128xf32> to vector<128x128xf32>
      %313 = arith.mulf %312, %311 : vector<128x128xf32>
      %314 = arith.addf %309, %313 : vector<128x128xf32>
      %c51_175 = arith.constant 51 : index
      %c0_176 = arith.constant 0 : index
      %315 = vector.load %arg6[%c51_175, %c0_176] : memref<64x128xf32, #tpu.memory_space<vmem>>, vector<1x128xf32>
      %c13_177 = arith.constant 13 : index
      %c0_178 = arith.constant 0 : index
      %316 = vector.load %arg14[%c13_177, %c0_178] : memref<192x128xf32, #tpu.memory_space<vmem>>, vector<128x128xf32>
      %317 = vector.broadcast %315 : vector<1x128xf32> to vector<128x128xf32>
      %318 = arith.mulf %317, %316 : vector<128x128xf32>
      %319 = arith.addf %314, %318 : vector<128x128xf32>
      %c52_179 = arith.constant 52 : index
      %c0_180 = arith.constant 0 : index
      %320 = vector.load %arg6[%c52_179, %c0_180] : memref<64x128xf32, #tpu.memory_space<vmem>>, vector<1x128xf32>
      %c12_181 = arith.constant 12 : index
      %c0_182 = arith.constant 0 : index
      %321 = vector.load %arg14[%c12_181, %c0_182] : memref<192x128xf32, #tpu.memory_space<vmem>>, vector<128x128xf32>
      %322 = vector.broadcast %320 : vector<1x128xf32> to vector<128x128xf32>
      %323 = arith.mulf %322, %321 : vector<128x128xf32>
      %324 = arith.addf %319, %323 : vector<128x128xf32>
      %c53_183 = arith.constant 53 : index
      %c0_184 = arith.constant 0 : index
      %325 = vector.load %arg6[%c53_183, %c0_184] : memref<64x128xf32, #tpu.memory_space<vmem>>, vector<1x128xf32>
      %c11_185 = arith.constant 11 : index
      %c0_186 = arith.constant 0 : index
      %326 = vector.load %arg14[%c11_185, %c0_186] : memref<192x128xf32, #tpu.memory_space<vmem>>, vector<128x128xf32>
      %327 = vector.broadcast %325 : vector<1x128xf32> to vector<128x128xf32>
      %328 = arith.mulf %327, %326 : vector<128x128xf32>
      %329 = arith.addf %324, %328 : vector<128x128xf32>
      %c54_187 = arith.constant 54 : index
      %c0_188 = arith.constant 0 : index
      %330 = vector.load %arg6[%c54_187, %c0_188] : memref<64x128xf32, #tpu.memory_space<vmem>>, vector<1x128xf32>
      %c10_189 = arith.constant 10 : index
      %c0_190 = arith.constant 0 : index
      %331 = vector.load %arg14[%c10_189, %c0_190] : memref<192x128xf32, #tpu.memory_space<vmem>>, vector<128x128xf32>
      %332 = vector.broadcast %330 : vector<1x128xf32> to vector<128x128xf32>
      %333 = arith.mulf %332, %331 : vector<128x128xf32>
      %334 = arith.addf %329, %333 : vector<128x128xf32>
      %c55_191 = arith.constant 55 : index
      %c0_192 = arith.constant 0 : index
      %335 = vector.load %arg6[%c55_191, %c0_192] : memref<64x128xf32, #tpu.memory_space<vmem>>, vector<1x128xf32>
      %c9_193 = arith.constant 9 : index
      %c0_194 = arith.constant 0 : index
      %336 = vector.load %arg14[%c9_193, %c0_194] : memref<192x128xf32, #tpu.memory_space<vmem>>, vector<128x128xf32>
      %337 = vector.broadcast %335 : vector<1x128xf32> to vector<128x128xf32>
      %338 = arith.mulf %337, %336 : vector<128x128xf32>
      %339 = arith.addf %334, %338 : vector<128x128xf32>
      %c56_195 = arith.constant 56 : index
      %c0_196 = arith.constant 0 : index
      %340 = vector.load %arg6[%c56_195, %c0_196] : memref<64x128xf32, #tpu.memory_space<vmem>>, vector<1x128xf32>
      %c8_197 = arith.constant 8 : index
      %c0_198 = arith.constant 0 : index
      %341 = vector.load %arg14[%c8_197, %c0_198] : memref<192x128xf32, #tpu.memory_space<vmem>>, vector<128x128xf32>
      %342 = vector.broadcast %340 : vector<1x128xf32> to vector<128x128xf32>
      %343 = arith.mulf %342, %341 : vector<128x128xf32>
      %344 = arith.addf %339, %343 : vector<128x128xf32>
      %c57_199 = arith.constant 57 : index
      %c0_200 = arith.constant 0 : index
      %345 = vector.load %arg6[%c57_199, %c0_200] : memref<64x128xf32, #tpu.memory_space<vmem>>, vector<1x128xf32>
      %c7_201 = arith.constant 7 : index
      %c0_202 = arith.constant 0 : index
      %346 = vector.load %arg14[%c7_201, %c0_202] : memref<192x128xf32, #tpu.memory_space<vmem>>, vector<128x128xf32>
      %347 = vector.broadcast %345 : vector<1x128xf32> to vector<128x128xf32>
      %348 = arith.mulf %347, %346 : vector<128x128xf32>
      %349 = arith.addf %344, %348 : vector<128x128xf32>
      %c58_203 = arith.constant 58 : index
      %c0_204 = arith.constant 0 : index
      %350 = vector.load %arg6[%c58_203, %c0_204] : memref<64x128xf32, #tpu.memory_space<vmem>>, vector<1x128xf32>
      %c6_205 = arith.constant 6 : index
      %c0_206 = arith.constant 0 : index
      %351 = vector.load %arg14[%c6_205, %c0_206] : memref<192x128xf32, #tpu.memory_space<vmem>>, vector<128x128xf32>
      %352 = vector.broadcast %350 : vector<1x128xf32> to vector<128x128xf32>
      %353 = arith.mulf %352, %351 : vector<128x128xf32>
      %354 = arith.addf %349, %353 : vector<128x128xf32>
      %c59_207 = arith.constant 59 : index
      %c0_208 = arith.constant 0 : index
      %355 = vector.load %arg6[%c59_207, %c0_208] : memref<64x128xf32, #tpu.memory_space<vmem>>, vector<1x128xf32>
      %c5_209 = arith.constant 5 : index
      %c0_210 = arith.constant 0 : index
      %356 = vector.load %arg14[%c5_209, %c0_210] : memref<192x128xf32, #tpu.memory_space<vmem>>, vector<128x128xf32>
      %357 = vector.broadcast %355 : vector<1x128xf32> to vector<128x128xf32>
      %358 = arith.mulf %357, %356 : vector<128x128xf32>
      %359 = arith.addf %354, %358 : vector<128x128xf32>
      %c60_211 = arith.constant 60 : index
      %c0_212 = arith.constant 0 : index
      %360 = vector.load %arg6[%c60_211, %c0_212] : memref<64x128xf32, #tpu.memory_space<vmem>>, vector<1x128xf32>
      %c4_213 = arith.constant 4 : index
      %c0_214 = arith.constant 0 : index
      %361 = vector.load %arg14[%c4_213, %c0_214] : memref<192x128xf32, #tpu.memory_space<vmem>>, vector<128x128xf32>
      %362 = vector.broadcast %360 : vector<1x128xf32> to vector<128x128xf32>
      %363 = arith.mulf %362, %361 : vector<128x128xf32>
      %364 = arith.addf %359, %363 : vector<128x128xf32>
      %c61_215 = arith.constant 61 : index
      %c0_216 = arith.constant 0 : index
      %365 = vector.load %arg6[%c61_215, %c0_216] : memref<64x128xf32, #tpu.memory_space<vmem>>, vector<1x128xf32>
      %c3_217 = arith.constant 3 : index
      %c0_218 = arith.constant 0 : index
      %366 = vector.load %arg14[%c3_217, %c0_218] : memref<192x128xf32, #tpu.memory_space<vmem>>, vector<128x128xf32>
      %367 = vector.broadcast %365 : vector<1x128xf32> to vector<128x128xf32>
      %368 = arith.mulf %367, %366 : vector<128x128xf32>
      %369 = arith.addf %364, %368 : vector<128x128xf32>
      %c62_219 = arith.constant 62 : index
      %c0_220 = arith.constant 0 : index
      %370 = vector.load %arg6[%c62_219, %c0_220] : memref<64x128xf32, #tpu.memory_space<vmem>>, vector<1x128xf32>
      %c2_221 = arith.constant 2 : index
      %c0_222 = arith.constant 0 : index
      %371 = vector.load %arg14[%c2_221, %c0_222] : memref<192x128xf32, #tpu.memory_space<vmem>>, vector<128x128xf32>
      %372 = vector.broadcast %370 : vector<1x128xf32> to vector<128x128xf32>
      %373 = arith.mulf %372, %371 : vector<128x128xf32>
      %374 = arith.addf %369, %373 : vector<128x128xf32>
      %c63_223 = arith.constant 63 : index
      %c0_224 = arith.constant 0 : index
      %375 = vector.load %arg6[%c63_223, %c0_224] : memref<64x128xf32, #tpu.memory_space<vmem>>, vector<1x128xf32>
      %c1_225 = arith.constant 1 : index
      %c0_226 = arith.constant 0 : index
      %376 = vector.load %arg14[%c1_225, %c0_226] : memref<192x128xf32, #tpu.memory_space<vmem>>, vector<128x128xf32>
      %377 = vector.broadcast %375 : vector<1x128xf32> to vector<128x128xf32>
      %378 = arith.mulf %377, %376 : vector<128x128xf32>
      %379 = arith.addf %374, %378 : vector<128x128xf32>
      %380 = arith.mulf %379, %379 : vector<128x128xf32>
      %381 = arith.mulf %379, %380 : vector<128x128xf32>
      %cst_227 = arith.constant 4.471500e-02 : f32
      %382 = vector.broadcast %cst_227 : f32 to vector<128x128xf32>
      %383 = arith.mulf %382, %381 : vector<128x128xf32>
      %384 = arith.addf %379, %383 : vector<128x128xf32>
      %cst_228 = arith.constant 0.797884583 : f32
      %385 = vector.broadcast %cst_228 : f32 to vector<128x128xf32>
      %386 = arith.mulf %385, %384 : vector<128x128xf32>
      %387 = math.tanh %386 : vector<128x128xf32>
      %cst_229 = arith.constant 1.000000e+00 : f32
      %388 = vector.broadcast %cst_229 : f32 to vector<128x128xf32>
      %389 = arith.addf %388, %387 : vector<128x128xf32>
      %cst_230 = arith.constant 5.000000e-01 : f32
      %390 = vector.broadcast %cst_230 : f32 to vector<128x128xf32>
      %391 = arith.mulf %390, %389 : vector<128x128xf32>
      %392 = arith.mulf %379, %391 : vector<128x128xf32>
      %c0_231 = arith.constant 0 : index
      %c0_232 = arith.constant 0 : index
      %393 = vector.load %arg8[%c0_231, %c0_232] : memref<128x256xf32, #tpu.memory_space<vmem>>, vector<128x256xf32>
      %cst_233 = arith.constant dense<0.000000e+00> : vector<128x256xf32>
      %394 = tpu.matmul %392, %393, %cst_233 {dimension_numbers = #tpu.dot_dimension_numbers<[1], [0], [0], [1], [0, 0, 1, 1], [], []>} : vector<128x128xf32>, vector<128x256xf32>, vector<128x256xf32> -> vector<128x256xf32>
      %c0_234 = arith.constant 0 : index
      %c0_235 = arith.constant 0 : index
      %395 = vector.load %arg9[%c0_234, %c0_235] : memref<1x256xf32, #tpu.memory_space<vmem>>, vector<1x256xf32>
      %396 = vector.shape_cast %395 : vector<1x256xf32> to vector<256xf32>
      %397 = vector.shape_cast %396 : vector<256xf32> to vector<1x256xf32>
      %398 = vector.broadcast %397 : vector<1x256xf32> to vector<128x256xf32>
      %399 = arith.addf %394, %398 : vector<128x256xf32>
      %400 = vector.extract_strided_slice %399 {offsets = [0, 0], sizes = [128, 128], strides = [1, 1]} : vector<128x256xf32> to vector<128x128xf32>
      %401 = vector.extract_strided_slice %399 {offsets = [0, 128], sizes = [128, 128], strides = [1, 1]} : vector<128x256xf32> to vector<128x128xf32>
      %402 = arith.negf %401 : vector<128x128xf32>
      %403 = math.exp %402 : vector<128x128xf32>
      %cst_236 = arith.constant 1.000000e+00 : f32
      %404 = vector.broadcast %cst_236 : f32 to vector<128x128xf32>
      %405 = arith.addf %404, %403 : vector<128x128xf32>
      %406 = arith.divf %404, %405 : vector<128x128xf32>
      %407 = arith.mulf %400, %406 : vector<128x128xf32>
      %408 = arith.addf %19, %407 : vector<128x128xf32>
      %c0_237 = arith.constant 0 : index
      %c0_238 = arith.constant 0 : index
      %c0_239 = arith.constant 0 : index
      %409 = vector.load %arg13[%c0_237, %c0_238, %c0_239] : memref<1x128x128xf32, #tpu.memory_space<vmem>>, vector<1x128x128xf32>
      %410 = vector.shape_cast %409 : vector<1x128x128xf32> to vector<128x128xf32>
      %411 = vector.shape_cast %408 : vector<128x128xf32> to vector<1x128x128xf32>
      tpu.vector_store %arg13[%c0_237, %c0_238, %c0_239], %411 {strides = array<i32>} : memref<1x128x128xf32, #tpu.memory_space<vmem>>, vector<1x128x128xf32>,
      %c0_240 = arith.constant 0 : index
      %c0_241 = arith.constant 0 : index
      %412 = vector.load %arg10[%c0_240, %c0_241] : memref<1x128xf32, #tpu.memory_space<vmem>>, vector<1x128xf32>
      %413 = vector.shape_cast %412 : vector<1x128xf32> to vector<128xf32>
      %414 = arith.mulf %408, %408 : vector<128x128xf32>
      %cst_242 = arith.constant dense<0.000000e+00> : vector<128xf32>
      %415 = vector.multi_reduction <add>, %414, %cst_242 [1] : vector<128x128xf32> to vector<128xf32>
      %416 = vector.shape_cast %415 : vector<128xf32> to vector<128x1xf32>
      %cst_243 = arith.constant 1.280000e+02 : f32
      %417 = vector.broadcast %cst_243 : f32 to vector<128x1xf32>
      %418 = arith.divf %416, %417 : vector<128x1xf32>
      %cst_244 = arith.constant 9.99999997E-7 : f32
      %419 = vector.broadcast %cst_244 : f32 to vector<128x1xf32>
      %420 = arith.addf %418, %419 : vector<128x1xf32>
      %421 = math.rsqrt %420 : vector<128x1xf32>
      %422 = vector.broadcast %421 : vector<128x1xf32> to vector<128x128xf32>
      %423 = arith.mulf %408, %422 : vector<128x128xf32>
      %424 = vector.shape_cast %413 : vector<128xf32> to vector<1x128xf32>
      %425 = vector.broadcast %424 : vector<1x128xf32> to vector<128x128xf32>
      %426 = arith.mulf %423, %425 : vector<128x128xf32>
      %c0_245 = arith.constant 0 : index
      %c0_246 = arith.constant 0 : index
      %427 = vector.load %arg15[%c0_245, %c0_246] : memref<128x128xf32, #tpu.memory_space<vmem>>, vector<128x128xf32>
      tpu.vector_store %arg15[%c0_245, %c0_246], %426 {strides = array<i32>} : memref<128x128xf32, #tpu.memory_space<vmem>>, vector<128x128xf32>,
    } else {
    }
    %c0 = arith.constant 0 : index
    %c0_1 = arith.constant 0 : index
    %3 = vector.load %arg15[%c0, %c0_1] : memref<128x128xf32, #tpu.memory_space<vmem>>, vector<128x128xf32>
    %c0_2 = arith.constant 0 : index
    %c0_3 = arith.constant 0 : index
    %4 = vector.load %arg11[%c0_2, %c0_3] : memref<128x128xf32, #tpu.memory_space<vmem>>, vector<128x128xf32>
    %cst = arith.constant dense<0.000000e+00> : vector<128x128xf32>
    %5 = tpu.matmul %3, %4, %cst {dimension_numbers = #tpu.dot_dimension_numbers<[1], [0], [0], [1], [0, 0, 1, 1], [], []>} : vector<128x128xf32>, vector<128x128xf32>, vector<128x128xf32> -> vector<128x128xf32>
    %cst_4 = arith.constant 0.000000e+00 : f32
    %6 = vector.broadcast %cst_4 : f32 to vector<128x128xf32>
    %7 = arith.maximumf %5, %6 : vector<128x128xf32>
    %c0_5 = arith.constant 0 : index
    %c0_6 = arith.constant 0 : index
    %8 = vector.load %arg12[%c0_5, %c0_6] : memref<128x128xf32, #tpu.memory_space<vmem>>, vector<128x128xf32>
    %cst_7 = arith.constant dense<0.000000e+00> : vector<128x128xf32>
    %9 = tpu.matmul %7, %8, %cst_7 {dimension_numbers = #tpu.dot_dimension_numbers<[1], [0], [0], [1], [0, 0, 1, 1], [], []>} : vector<128x128xf32>, vector<128x128xf32>, vector<128x128xf32> -> vector<128x128xf32>
    %c0_8 = arith.constant 0 : index
    %c0_9 = arith.constant 0 : index
    %c0_10 = arith.constant 0 : index
    %10 = vector.load %arg13[%c0_8, %c0_9, %c0_10] : memref<1x128x128xf32, #tpu.memory_space<vmem>>, vector<1x128x128xf32>
    %11 = vector.shape_cast %10 : vector<1x128x128xf32> to vector<128x128xf32>
    %12 = arith.addf %11, %9 : vector<128x128xf32>
    %c0_11 = arith.constant 0 : index
    %c0_12 = arith.constant 0 : index
    %c0_13 = arith.constant 0 : index
    %13 = vector.load %arg13[%c0_11, %c0_12, %c0_13] : memref<1x128x128xf32, #tpu.memory_space<vmem>>, vector<1x128x128xf32>
    %14 = vector.shape_cast %13 : vector<1x128x128xf32> to vector<128x128xf32>
    %15 = vector.shape_cast %12 : vector<128x128xf32> to vector<1x128x128xf32>
    tpu.vector_store %arg13[%c0_11, %c0_12, %c0_13], %15 {strides = array<i32>} : memref<1x128x128xf32, #tpu.memory_space<vmem>>, vector<1x128x128xf32>,
    return
  }
  func.func @transform_0(%arg0: i32, %arg1: i32, %arg2: i32) -> (i32, i32, i32) {
    %c0_i32 = arith.constant 0 : i32
    %c0_i32_0 = arith.constant 0 : i32
    return %arg0, %arg1, %c0_i32 : i32, i32, i32
  }
  func.func @transform_1(%arg0: i32, %arg1: i32, %arg2: i32) -> (i32, i32, i32) {
    %c2_i32 = arith.constant 2 : i32
    %0 = arith.muli %arg1, %c2_i32 : i32
    %c1_i32 = arith.constant 1 : i32
    %1 = arith.subi %0, %c1_i32 : i32
    %c0_i32 = arith.constant 0 : i32
    %2 = arith.maxsi %1, %c0_i32 : i32
    %c0_i32_0 = arith.constant 0 : i32
    %c0_i32_1 = arith.constant 0 : i32
    return %arg0, %2, %c0_i32_0 : i32, i32, i32
  }
  func.func @transform_2(%arg0: i32, %arg1: i32, %arg2: i32) -> (i32, i32) {
    %c0_i32 = arith.constant 0 : i32
    %c0_i32_0 = arith.constant 0 : i32
    %c0_i32_1 = arith.constant 0 : i32
    return %c0_i32, %c0_i32_0 : i32, i32
  }
  func.func @transform_3(%arg0: i32, %arg1: i32, %arg2: i32) -> (i32, i32) {
    %c0_i32 = arith.constant 0 : i32
    %c0_i32_0 = arith.constant 0 : i32
    %c0_i32_1 = arith.constant 0 : i32
    return %c0_i32, %c0_i32_0 : i32, i32
  }
  func.func @transform_4(%arg0: i32, %arg1: i32, %arg2: i32) -> (i32, i32) {
    %c0_i32 = arith.constant 0 : i32
    %c0_i32_0 = arith.constant 0 : i32
    %c0_i32_1 = arith.constant 0 : i32
    return %c0_i32, %c0_i32_0 : i32, i32
  }
  func.func @transform_5(%arg0: i32, %arg1: i32, %arg2: i32) -> (i32, i32) {
    %c0_i32 = arith.constant 0 : i32
    %c0_i32_0 = arith.constant 0 : i32
    %c0_i32_1 = arith.constant 0 : i32
    return %c0_i32, %c0_i32_0 : i32, i32
  }
  func.func @transform_6(%arg0: i32, %arg1: i32, %arg2: i32) -> (i32, i32) {
    %c0_i32 = arith.constant 0 : i32
    %c0_i32_0 = arith.constant 0 : i32
    %c0_i32_1 = arith.constant 0 : i32
    return %c0_i32, %c0_i32_0 : i32, i32
  }
  func.func @transform_7(%arg0: i32, %arg1: i32, %arg2: i32) -> (i32, i32) {
    %c0_i32 = arith.constant 0 : i32
    %c0_i32_0 = arith.constant 0 : i32
    %c0_i32_1 = arith.constant 0 : i32
    return %c0_i32, %c0_i32_0 : i32, i32
  }
  func.func @transform_8(%arg0: i32, %arg1: i32, %arg2: i32) -> (i32, i32) {
    %c0_i32 = arith.constant 0 : i32
    %c0_i32_0 = arith.constant 0 : i32
    return %c0_i32, %arg2 : i32, i32
  }
  func.func @transform_9(%arg0: i32, %arg1: i32, %arg2: i32) -> (i32, i32) {
    %c0_i32 = arith.constant 0 : i32
    %c0_i32_0 = arith.constant 0 : i32
    return %arg2, %c0_i32 : i32, i32
  }
  func.func @transform_10(%arg0: i32, %arg1: i32, %arg2: i32) -> (i32, i32, i32) {
    %c0_i32 = arith.constant 0 : i32
    %c0_i32_0 = arith.constant 0 : i32
    return %arg0, %arg1, %c0_i32 : i32, i32, i32
  }
}

</mosaic_0001>

<llo_original>
// kernel: tpu_custom_call.1
$region0: #{tpu_custom_call.1}
  #allocation0 [shape = 'u32[]', space=smem, size = 0x4, offset = 0x4, fixed_abs, tag = 'smem constant byte address 0x4 - core index']
  #allocation1 [shape = 'u32[144,128]{1,0:T(1,128)}', space=vmem, size = 0x12000, scoped, tag = 'internal scratch']
  #allocation2 [shape = 'f32[192,128]{1,0:T(8,128)}', space=vmem, size = 0x18000, scoped, tag = 'scratch operand']
  #allocation3 [shape = 'f32[128,128]{1,0:T(8,128)}', space=vmem, size = 0x10000, scoped, tag = 'scratch operand']
  %s0 = inlined_call_operand.hbm [shape: f32[2,256,128], index: 0, kind: input, shape index: {}]
  %s1 = inlined_call_operand.hbm [shape: f32[2,256,128], index: 1, kind: input, shape index: {}]
  %s2 = inlined_call_operand.vmem [shape: f32[1,128], index: 2, kind: input, shape index: {}]
  %s3 = inlined_call_operand.hbm [shape: f32[64,128], index: 3, kind: input, shape index: {}]
  %s4 = inlined_call_operand.vmem [shape: f32[1,128], index: 4, kind: input, shape index: {}]
  %s5 = inlined_call_operand.hbm [shape: f32[128,256], index: 5, kind: input, shape index: {}]
  %s6 = inlined_call_operand.vmem [shape: f32[1,256], index: 6, kind: input, shape index: {}]
  %s7 = inlined_call_operand.vmem [shape: f32[1,128], index: 7, kind: input, shape index: {}]
  %s8 = inlined_call_operand.hbm [shape: f32[128,256], index: 8, kind: input, shape index: {}]
  %s9 = inlined_call_operand.hbm [shape: f32[256,128], index: 9, kind: input, shape index: {}]
  %s10 = inlined_call_operand.hbm [shape: f32[2,256,128], index: 10, kind: output, shape index: {}]
  %s11 = sld [smem:[#allocation0]]
  $region101: #{tpu_custom_call.1} parent=0
    _
  %s13 = ssub.s32 1, %s11
  %s14 = scalar_select 0, %s13, %s11
  $region1: #{tpu_custom_call.1} parent=0
    #allocation4 [shape = 'u8[131072]{0}', space=vmem, size = 0x20000, scoped, tag = 'input window, operand 0']
    #allocation5 [shape = 's32[2]{0}', space=sflag, size = 0x8, scoped, tag = 'scoped memory for tpu_custom_call.1']
    #allocation6 [shape = 's32[2]{0}', space=sflag, size = 0x8, scoped, tag = 'scoped memory for tpu_custom_call.1']
    #allocation7 [shape = 'u8[65536]{0}', space=vmem, size = 0x10000, scoped, tag = 'input window, operand 1']
    #allocation8 [shape = 's32[2]{0}', space=sflag, size = 0x8, scoped, tag = 'scoped memory for tpu_custom_call.1']
    #allocation9 [shape = 'u8[32768]{0}', space=vmem, size = 0x8000, scoped, tag = 'input window, operand 3, single buffered']
    #allocation10 [shape = 'u8[131072]{0}', space=vmem, size = 0x20000, scoped, tag = 'input window, operand 5, single buffered']
    #allocation11 [shape = 's32[1]{0}', space=sflag, size = 0x4, scoped, tag = 'scoped memory for tpu_custom_call.1']
    #allocation12 [shape = 'u8[131072]{0}', space=vmem, size = 0x20000, scoped, tag = 'input window, operand 8']
    #allocation13 [shape = 'u8[131072]{0}', space=vmem, size = 0x20000, scoped, tag = 'input window, operand 9']
    #allocation14 [shape = 'u8[131072]{0}', space=vmem, size = 0x20000, scoped, tag = 'output window, operand 0']
    %15 = vsyncpa [#allocation5], 0
    %s16 = scalar_lea.sflag [#allocation5], 1
    %17 = vsyncpa %s16, 0
    %18 = vsyncpa [#allocation8], 0
    %s19 = scalar_lea.sflag [#allocation8], 1
    %20 = vsyncpa %s19, 0
    %21 = vsyncpa [#allocation11], 0
    %22 = vsyncpa [#allocation6], 0
    %s23 = scalar_lea.sflag [#allocation6], 1
    %24 = vsyncpa %s23, 0
    loop: start=0, step=1, limit=10
    $region2: #{tpu_custom_call.1} parent=1 // loop_pre_header
      _
    $region3: #{tpu_custom_call.1} parent=1 // loop_header
      %s26 = sphi 0, %s30
      %p27 = scmp.ge.s32.totalorder %s26, 10
      %s33 = sphi 0, %s52
      %s34 = sphi 0, %s48
      %s35 = sphi 0, %s44
      %s36 = sphi 0, %s33
      %s37 = sphi 0, %s34
      %s38 = sphi 0, %s35
      %s39 = sphi 0, %s36
      %s40 = sphi 0, %s37
      %s41 = sphi 0, %s38
      %s57 = sphi 0, %s59
      %s60 = sphi 0, %s57
      %s61 = sphi 0, %s60
      %s77 = sphi 0, %s61
      %s93 = sphi 0, %s95
      %s96 = sphi 0, %s93
      %s97 = sphi 0, %s96
      %s113 = sphi 0, %s97
      %s117 = sphi 0, %s117
      %s119 = sphi 0, %s117
      %s120 = sphi 0, %s119
      %s134 = sphi 0, %s120
      %s138 = sphi 0, %s138
      %s140 = sphi 0, %s138
      %s141 = sphi 0, %s140
      %s155 = sphi 0, %s141
      %s159 = sphi 0, %s159
      %s161 = sphi 0, %s159
      %s162 = sphi 0, %s161
      %s176 = sphi 0, %s162
      %s180 = sphi 0, %s180
      %s182 = sphi 0, %s180
      %s183 = sphi 0, %s182
      %s197 = sphi 0, %s183
      %s201 = sphi 0, %s201
      %s203 = sphi 0, %s201
      %s204 = sphi 0, %s203
      %s218 = sphi 0, %s204
      %s222 = sphi 0, %s222
      %s224 = sphi 0, %s222
      %s225 = sphi 0, %s224
      %s239 = sphi 0, %s225
      %s245 = sphi 0, %s247
      %s248 = sphi 0, %s245
      %s249 = sphi 0, %s248
      %s265 = sphi 0, %s249
      %s271 = sphi 0, %s273
      %s274 = sphi 0, %s271
      %s275 = sphi 0, %s274
      %s291 = sphi 0, %s275
      %s299 = sphi 0, %s301
      %s302 = sphi 0, %s299
      %s303 = sphi 0, %s302
      %s319 = sphi 0, %s303
    $region4: #{tpu_custom_call.1} parent=1 // loop_header_branch
      %29 = sbr.rel (%p27) target = $region8
    $region5: #{tpu_custom_call.1} parent=1 // loop_body
      %s31 = ssub.s32 %s26, 1
      %s32 = ssub.s32 %s26, 2
      %s42 = sadd.s32 1, %s35
      %p43 = scmp.ge.s32.totalorder %s42, 2
      %s44 = scalar_select %p43, 0, %s42
      %s45 = sadd.s32 1, %s34
      %s46 = scalar_select %p43, %s45, %s34
      %p47 = scmp.ge.s32.totalorder %s46, 2
      %s48 = scalar_select %p47, 0, %s46
      %s49 = sadd.s32 1, %s33
      %s50 = scalar_select %p47, %s49, %s33
      %p51 = scmp.ge.s32.totalorder %s50, 2
      %s52 = scalar_select %p51, 0, %s50
      %s53 = ssub.s32 %s33, %s52
      %s54 = ssub.s32 %s34, %s48
      %s55 = sor.u32 %s53, %s54
      %p56 = scmp.eq.s32.totalorder %s55, 0
      %s58 = sadd.s32 %s57, 1
      %s59 = scalar_select %p56, %s57, %s58
      %p62 = pneg %p56
      %p63 = scmp.eq.s32.totalorder %s26, 7
      %p64 = por %p62, %p63
      %p65 = scmp.ne.s32.totalorder %s57, %s60
      %p66 = scmp.eq.s32.totalorder %s26, 0
      %p67 = por %p65, %p66
      %p68 = scmp.ne.s32.totalorder %s57, %s60
      %p69 = scmp.eq.s32.totalorder %s31, 7
      %p70 = por %p68, %p69
      %p71 = scmp.ne.s32.totalorder %s60, %s61
      %p72 = scmp.eq.s32.totalorder %s31, 0
      %p73 = por %p71, %p72
      %p74 = scmp.ne.s32.totalorder %s60, %s61
      %p75 = scmp.eq.s32.totalorder %s32, 7
      %p76 = por %p74, %p75
      %p78 = scmp.ne.s32.totalorder %s61, %s77
      %p79 = scmp.eq.s32.totalorder %s32, 0
      %p80 = por %p78, %p79
      %s81 = smul.u32 %s34, 2
      %s82 = ssub.s32 %s81, 1
      %p83 = scmp.gt.s32.totalorder %s82, 0
      %s84 = scalar_select %p83, %s82, 0
      %s85 = smul.u32 %s48, 2
      %s86 = ssub.s32 %s85, 1
      %p87 = scmp.gt.s32.totalorder %s86, 0
      %s88 = scalar_select %p87, %s86, 0
      %s89 = ssub.s32 %s33, %s52
      %s90 = ssub.s32 %s84, %s88
      %s91 = sor.u32 %s89, %s90
      %p92 = scmp.eq.s32.totalorder %s91, 0
      %s94 = sadd.s32 %s93, 1
      %s95 = scalar_select %p92, %s93, %s94
      %p98 = pneg %p92
      %p99 = scmp.eq.s32.totalorder %s26, 7
      %p100 = por %p98, %p99
      %p101 = scmp.ne.s32.totalorder %s93, %s96
      %p102 = scmp.eq.s32.totalorder %s26, 0
      %p103 = por %p101, %p102
      %p104 = scmp.ne.s32.totalorder %s93, %s96
      %p105 = scmp.eq.s32.totalorder %s31, 7
      %p106 = por %p104, %p105
      %p107 = scmp.ne.s32.totalorder %s96, %s97
      %p108 = scmp.eq.s32.totalorder %s31, 0
      %p109 = por %p107, %p108
      %p110 = scmp.ne.s32.totalorder %s96, %s97
      %p111 = scmp.eq.s32.totalorder %s32, 7
      %p112 = por %p110, %p111
      %p114 = scmp.ne.s32.totalorder %s97, %s113
      %p115 = scmp.eq.s32.totalorder %s32, 0
      %p116 = por %p114, %p115
      %s118 = sadd.s32 %s117, 1
      %p121 = scmp.eq.s32.totalorder %s26, 7
      %p122 = scmp.ne.s32.totalorder %s117, %s119
      %p123 = scmp.eq.s32.totalorder %s26, 0
      %p124 = por %p122, %p123
      %p125 = scmp.ne.s32.totalorder %s117, %s119
      %p126 = scmp.eq.s32.totalorder %s31, 7
      %p127 = por %p125, %p126
      %p128 = scmp.ne.s32.totalorder %s119, %s120
      %p129 = scmp.eq.s32.totalorder %s31, 0
      %p130 = por %p128, %p129
      %p131 = scmp.ne.s32.totalorder %s119, %s120
      %p132 = scmp.eq.s32.totalorder %s32, 7
      %p133 = por %p131, %p132
      %p135 = scmp.ne.s32.totalorder %s120, %s134
      %p136 = scmp.eq.s32.totalorder %s32, 0
      %p137 = por %p135, %p136
      %s139 = sadd.s32 %s138, 1
      %p142 = scmp.eq.s32.totalorder %s26, 7
      %p143 = scmp.ne.s32.totalorder %s138, %s140
      %p144 = scmp.eq.s32.totalorder %s26, 0
      %p145 = por %p143, %p144
      %p146 = scmp.ne.s32.totalorder %s138, %s140
      %p147 = scmp.eq.s32.totalorder %s31, 7
      %p148 = por %p146, %p147
      %p149 = scmp.ne.s32.totalorder %s140, %s141
      %p150 = scmp.eq.s32.totalorder %s31, 0
      %p151 = por %p149, %p150
      %p152 = scmp.ne.s32.totalorder %s140, %s141
      %p153 = scmp.eq.s32.totalorder %s32, 7
      %p154 = por %p152, %p153
      %p156 = scmp.ne.s32.totalorder %s141, %s155
      %p157 = scmp.eq.s32.totalorder %s32, 0
      %p158 = por %p156, %p157
      %s160 = sadd.s32 %s159, 1
      %p163 = scmp.eq.s32.totalorder %s26, 7
      %p164 = scmp.ne.s32.totalorder %s159, %s161
      %p165 = scmp.eq.s32.totalorder %s26, 0
      %p166 = por %p164, %p165
      %p167 = scmp.ne.s32.totalorder %s159, %s161
      %p168 = scmp.eq.s32.totalorder %s31, 7
      %p169 = por %p167, %p168
      %p170 = scmp.ne.s32.totalorder %s161, %s162
      %p171 = scmp.eq.s32.totalorder %s31, 0
      %p172 = por %p170, %p171
      %p173 = scmp.ne.s32.totalorder %s161, %s162
      %p174 = scmp.eq.s32.totalorder %s32, 7
      %p175 = por %p173, %p174
      %p177 = scmp.ne.s32.totalorder %s162, %s176
      %p178 = scmp.eq.s32.totalorder %s32, 0
      %p179 = por %p177, %p178
      %s181 = sadd.s32 %s180, 1
      %p184 = scmp.eq.s32.totalorder %s26, 7
      %p185 = scmp.ne.s32.totalorder %s180, %s182
      %p186 = scmp.eq.s32.totalorder %s26, 0
      %p187 = por %p185, %p186
      %p188 = scmp.ne.s32.totalorder %s180, %s182
      %p189 = scmp.eq.s32.totalorder %s31, 7
      %p190 = por %p188, %p189
      %p191 = scmp.ne.s32.totalorder %s182, %s183
      %p192 = scmp.eq.s32.totalorder %s31, 0
      %p193 = por %p191, %p192
      %p194 = scmp.ne.s32.totalorder %s182, %s183
      %p195 = scmp.eq.s32.totalorder %s32, 7
      %p196 = por %p194, %p195
      %p198 = scmp.ne.s32.totalorder %s183, %s197
      %p199 = scmp.eq.s32.totalorder %s32, 0
      %p200 = por %p198, %p199
      %s202 = sadd.s32 %s201, 1
      %p205 = scmp.eq.s32.totalorder %s26, 7
      %p206 = scmp.ne.s32.totalorder %s201, %s203
      %p207 = scmp.eq.s32.totalorder %s26, 0
      %p208 = por %p206, %p207
      %p209 = scmp.ne.s32.totalorder %s201, %s203
      %p210 = scmp.eq.s32.totalorder %s31, 7
      %p211 = por %p209, %p210
      %p212 = scmp.ne.s32.totalorder %s203, %s204
      %p213 = scmp.eq.s32.totalorder %s31, 0
      %p214 = por %p212, %p213
      %p215 = scmp.ne.s32.totalorder %s203, %s204
      %p216 = scmp.eq.s32.totalorder %s32, 7
      %p217 = por %p215, %p216
      %p219 = scmp.ne.s32.totalorder %s204, %s218
      %p220 = scmp.eq.s32.totalorder %s32, 0
      %p221 = por %p219, %p220
      %s223 = sadd.s32 %s222, 1
      %p226 = scmp.eq.s32.totalorder %s26, 7
      %p227 = scmp.ne.s32.totalorder %s222, %s224
      %p228 = scmp.eq.s32.totalorder %s26, 0
      %p229 = por %p227, %p228
      %p230 = scmp.ne.s32.totalorder %s222, %s224
      %p231 = scmp.eq.s32.totalorder %s31, 7
      %p232 = por %p230, %p231
      %p233 = scmp.ne.s32.totalorder %s224, %s225
      %p234 = scmp.eq.s32.totalorder %s31, 0
      %p235 = por %p233, %p234
      %p236 = scmp.ne.s32.totalorder %s224, %s225
      %p237 = scmp.eq.s32.totalorder %s32, 7
      %p238 = por %p236, %p237
      %p240 = scmp.ne.s32.totalorder %s225, %s239
      %p241 = scmp.eq.s32.totalorder %s32, 0
      %p242 = por %p240, %p241
      %s243 = ssub.s32 %s35, %s44
      %p244 = scmp.eq.s32.totalorder %s243, 0
      %s246 = sadd.s32 %s245, 1
      %s247 = scalar_select %p244, %s245, %s246
      %p250 = pneg %p244
      %p251 = scmp.eq.s32.totalorder %s26, 7
      %p252 = por %p250, %p251
      %p253 = scmp.ne.s32.totalorder %s245, %s248
      %p254 = scmp.eq.s32.totalorder %s26, 0
      %p255 = por %p253, %p254
      %p256 = scmp.ne.s32.totalorder %s245, %s248
      %p257 = scmp.eq.s32.totalorder %s31, 7
      %p258 = por %p256, %p257
      %p259 = scmp.ne.s32.totalorder %s248, %s249
      %p260 = scmp.eq.s32.totalorder %s31, 0
      %p261 = por %p259, %p260
      %p262 = scmp.ne.s32.totalorder %s248, %s249
      %p263 = scmp.eq.s32.totalorder %s32, 7
      %p264 = por %p262, %p263
      %p266 = scmp.ne.s32.totalorder %s249, %s265
      %p267 = scmp.eq.s32.totalorder %s32, 0
      %p268 = por %p266, %p267
      %s269 = ssub.s32 %s35, %s44
      %p270 = scmp.eq.s32.totalorder %s269, 0
      %s272 = sadd.s32 %s271, 1
      %s273 = scalar_select %p270, %s271, %s272
      %p276 = pneg %p270
      %p277 = scmp.eq.s32.totalorder %s26, 7
      %p278 = por %p276, %p277
      %p279 = scmp.ne.s32.totalorder %s271, %s274
      %p280 = scmp.eq.s32.totalorder %s26, 0
      %p281 = por %p279, %p280
      %p282 = scmp.ne.s32.totalorder %s271, %s274
      %p283 = scmp.eq.s32.totalorder %s31, 7
      %p284 = por %p282, %p283
      %p285 = scmp.ne.s32.totalorder %s274, %s275
      %p286 = scmp.eq.s32.totalorder %s31, 0
      %p287 = por %p285, %p286
      %p288 = scmp.ne.s32.totalorder %s274, %s275
      %p289 = scmp.eq.s32.totalorder %s32, 7
      %p290 = por %p288, %p289
      %p292 = scmp.ne.s32.totalorder %s275, %s291
      %p293 = scmp.eq.s32.totalorder %s32, 0
      %p294 = por %p292, %p293
      %s295 = ssub.s32 %s33, %s52
      %s296 = ssub.s32 %s34, %s48
      %s297 = sor.u32 %s295, %s296
      %p298 = scmp.eq.s32.totalorder %s297, 0
      %s300 = sadd.s32 %s299, 1
      %s301 = scalar_select %p298, %s299, %s300
      %p304 = pneg %p298
      %p305 = scmp.eq.s32.totalorder %s26, 7
      %p306 = por %p304, %p305
      %p307 = scmp.ne.s32.totalorder %s299, %s302
      %p308 = scmp.eq.s32.totalorder %s26, 0
      %p309 = por %p307, %p308
      %p310 = scmp.ne.s32.totalorder %s299, %s302
      %p311 = scmp.eq.s32.totalorder %s31, 7
      %p312 = por %p310, %p311
      %p313 = scmp.ne.s32.totalorder %s302, %s303
      %p314 = scmp.eq.s32.totalorder %s31, 0
      %p315 = por %p313, %p314
      %p316 = scmp.ne.s32.totalorder %s302, %s303
      %p317 = scmp.eq.s32.totalorder %s32, 7
      %p318 = por %p316, %p317
      %p320 = scmp.ne.s32.totalorder %s303, %s319
      %p321 = scmp.eq.s32.totalorder %s32, 0
      %p322 = por %p320, %p321
      %p323 = scmp.le.s32.totalorder 1, %s26
      %p324 = scmp.lt.s32.totalorder %s26, 9
      %p325 = pnand %p323, %p324
      %p326 = pneg %p325
      // Predicated region
      $region9: #{tpu_custom_call.1} parent=5 // pred_check
        _
      $region10: #{tpu_custom_call.1} parent=5 // pred_check_branch
        %328 = sbr.rel (%p325) target = $region12
      $region11: #{tpu_custom_call.1} parent=5 // pred_region
        %s329 = ssub.s32 %s26, 1
        // Predicated region
        $region13: #{tpu_custom_call.1} parent=11 // pred_check
          %p330 = pneg %p130
        $region14: #{tpu_custom_call.1} parent=11 // pred_check_branch
          %332 = sbr.rel (%p330) target = $region16
        $region15: #{tpu_custom_call.1} parent=11 // pred_region
          _
        $region16: #{tpu_custom_call.1} parent=11 // pred_fallthru
          _
        // Predicated region
        $region17: #{tpu_custom_call.1} parent=11 // pred_check
          %p333 = pneg %p151
        $region18: #{tpu_custom_call.1} parent=11 // pred_check_branch
          %335 = sbr.rel (%p333) target = $region20
        $region19: #{tpu_custom_call.1} parent=11 // pred_region
          %s337 = ssub.s32 1024, 1024
          %338 = vsyncadd [#allocation8], %s337
          %s339 = sshll.u32 [#allocation9], 4
          %s340 = int_to_ptr.vmem [resolvable:$true] %s339
          %345 = dma.hbm_to_vmem [thread:$0]  %s3, 1024, %s340, [#allocation8], 128, 128, 8
        $region20: #{tpu_custom_call.1} parent=11 // pred_fallthru
          _
        // Predicated region
        $region21: #{tpu_custom_call.1} parent=11 // pred_check
          %p346 = pneg %p172
        $region22: #{tpu_custom_call.1} parent=11 // pred_check_branch
          %348 = sbr.rel (%p346) target = $region24
        $region23: #{tpu_custom_call.1} parent=11 // pred_region
          _
        $region24: #{tpu_custom_call.1} parent=11 // pred_fallthru
          _
        // Predicated region
        $region25: #{tpu_custom_call.1} parent=11 // pred_check
          %p349 = pneg %p193
        $region26: #{tpu_custom_call.1} parent=11 // pred_check_branch
          %351 = sbr.rel (%p349) target = $region28
        $region27: #{tpu_custom_call.1} parent=11 // pred_region
          %s353 = ssub.s32 4096, 4096
          %354 = vsyncadd [#allocation11], %s353
          %s355 = sshll.u32 [#allocation10], 4
          %s356 = int_to_ptr.vmem [resolvable:$true] %s355
          %361 = dma.hbm_to_vmem [thread:$0]  %s5, 4096, %s356, [#allocation11], 256, 256, 16
        $region28: #{tpu_custom_call.1} parent=11 // pred_fallthru
          _
        // Predicated region
        $region29: #{tpu_custom_call.1} parent=11 // pred_check
          %p362 = pneg %p214
        $region30: #{tpu_custom_call.1} parent=11 // pred_check_branch
          %364 = sbr.rel (%p362) target = $region32
        $region31: #{tpu_custom_call.1} parent=11 // pred_region
          _
        $region32: #{tpu_custom_call.1} parent=11 // pred_fallthru
          _
        // Predicated region
        $region33: #{tpu_custom_call.1} parent=11 // pred_check
          %p365 = pneg %p235
        $region34: #{tpu_custom_call.1} parent=11 // pred_check_branch
          %367 = sbr.rel (%p365) target = $region36
        $region35: #{tpu_custom_call.1} parent=11 // pred_region
          _
        $region36: #{tpu_custom_call.1} parent=11 // pred_fallthru
          _
      $region12: #{tpu_custom_call.1} parent=5 // pred_fallthru
        _
      %p368 = scmp.lt.s32.totalorder %s26, 8
      // Predicated region
      $region37: #{tpu_custom_call.1} parent=5 // pred_check
        %p369 = pneg %p368
      $region38: #{tpu_custom_call.1} parent=5 // pred_check_branch
        %371 = sbr.rel (%p369) target = $region40
      $region39: #{tpu_custom_call.1} parent=5 // pred_region
        // Predicated region
        $region41: #{tpu_custom_call.1} parent=39 // pred_check
          %p372 = pneg %p67
        $region42: #{tpu_custom_call.1} parent=39 // pred_check_branch
          %374 = sbr.rel (%p372) target = $region44
        $region43: #{tpu_custom_call.1} parent=39 // pred_region
          %s375 = sand.u32 %s26, 1
          %s376 = scalar_lea.sflag [#allocation5], %s375
          %s377 = sand.u32 %s57, 1
          %s378 = smul.addr %s377, 128
          %s379 = scalar_lea.vmem [#allocation4], %s378
          %s380 = smul.u32 16, %s34
          %s382 = ssub.s32 2048, 2048
          %383 = vsyncadd %s376, %s382
          %s384 = smul.addr %s33, 32
          %s385 = sadd.s32 %s380, %s384
          %s386 = smul.addr %s385, 128
          %s387 = scalar_lea.hbm %s0, %s386
          %s388 = sshll.u32 %s379, 4
          %s389 = int_to_ptr.vmem [resolvable:$true] %s388
          %394 = dma.hbm_to_vmem [thread:$0]  %s387, 2048, %s389, %s376, 128, 128, 8
        $region44: #{tpu_custom_call.1} parent=39 // pred_fallthru
          _
        // Predicated region
        $region45: #{tpu_custom_call.1} parent=39 // pred_check
          %p395 = pneg %p103
        $region46: #{tpu_custom_call.1} parent=39 // pred_check_branch
          %397 = sbr.rel (%p395) target = $region48
        $region47: #{tpu_custom_call.1} parent=39 // pred_region
          %s398 = sand.u32 %s26, 1
          %s399 = scalar_lea.sflag [#allocation8], %s398
          %s400 = sand.u32 %s93, 1
          %s401 = smul.addr %s400, 64
          %s402 = scalar_lea.vmem [#allocation7], %s401
          %s403 = smul.u32 %s34, 2
          %s404 = ssub.s32 %s403, 1
          %p405 = scmp.gt.s32.totalorder %s404, 0
          %s406 = scalar_select %p405, %s404, 0
          %s407 = smul.u32 8, %s406
          %s409 = ssub.s32 1024, 1024
          %410 = vsyncadd %s399, %s409
          %s411 = smul.addr %s33, 32
          %s412 = sadd.s32 %s407, %s411
          %s413 = smul.addr %s412, 128
          %s414 = scalar_lea.hbm %s1, %s413
          %s415 = sshll.u32 %s402, 4
          %s416 = int_to_ptr.vmem [resolvable:$true] %s415
          %421 = dma.hbm_to_vmem [thread:$0]  %s414, 1024, %s416, %s399, 128, 128, 8
        $region48: #{tpu_custom_call.1} parent=39 // pred_fallthru
          _
        // Predicated region
        $region49: #{tpu_custom_call.1} parent=39 // pred_check
          %p422 = pneg %p255
        $region50: #{tpu_custom_call.1} parent=39 // pred_check_branch
          %424 = sbr.rel (%p422) target = $region52
        $region51: #{tpu_custom_call.1} parent=39 // pred_region
          %s425 = sand.u32 %s26, 1
          %s426 = scalar_lea.sflag [#allocation5], %s425
          %s427 = sand.u32 %s245, 1
          %s428 = smul.addr %s427, 128
          %s429 = scalar_lea.vmem [#allocation12], %s428
          %s431 = ssub.s32 2048, 2048
          %432 = vsyncadd %s426, %s431
          %s433 = smul.addr %s35, 128
          %s434 = scalar_lea.hbm %s8, %s433
          %s435 = sshll.u32 %s429, 4
          %s436 = int_to_ptr.vmem [resolvable:$true] %s435
          %441 = dma.hbm_to_vmem [thread:$0]  %s434, 2048, %s436, %s426, 256, 128, 8
        $region52: #{tpu_custom_call.1} parent=39 // pred_fallthru
          _
        // Predicated region
        $region53: #{tpu_custom_call.1} parent=39 // pred_check
          %p442 = pneg %p281
        $region54: #{tpu_custom_call.1} parent=39 // pred_check_branch
          %444 = sbr.rel (%p442) target = $region56
        $region55: #{tpu_custom_call.1} parent=39 // pred_region
          %s445 = sand.u32 %s26, 1
          %s446 = scalar_lea.sflag [#allocation8], %s445
          %s447 = sand.u32 %s271, 1
          %s448 = smul.addr %s447, 128
          %s449 = scalar_lea.vmem [#allocation13], %s448
          %s450 = smul.u32 16, %s35
          %s452 = ssub.s32 2048, 2048
          %453 = vsyncadd %s446, %s452
          %s454 = smul.addr %s450, 128
          %s455 = scalar_lea.hbm %s9, %s454
          %s456 = sshll.u32 %s449, 4
          %s457 = int_to_ptr.vmem [resolvable:$true] %s456
          %462 = dma.hbm_to_vmem [thread:$0]  %s455, 2048, %s457, %s446, 128, 128, 8
        $region56: #{tpu_custom_call.1} parent=39 // pred_fallthru
          _
      $region40: #{tpu_custom_call.1} parent=5 // pred_fallthru
        _
      %p463 = scmp.le.s32.totalorder 1, %s26
      %p464 = scmp.lt.s32.totalorder %s26, 9
      %p465 = pnand %p463, %p464
      %p466 = pneg %p465
      // Predicated region
      $region57: #{tpu_custom_call.1} parent=5 // pred_check
        _
      $region58: #{tpu_custom_call.1} parent=5 // pred_check_branch
        %468 = sbr.rel (%p465) target = $region60
      $region59: #{tpu_custom_call.1} parent=5 // pred_region
        %s469 = ssub.s32 %s26, 1
        %s470 = sand.u32 %s31, 1
        %s471 = scalar_lea.sflag [#allocation5], %s470
        %s472 = sand.u32 %s60, 1
        %s473 = smul.addr %s472, 128
        %s474 = scalar_lea.vmem [#allocation4], %s473
        // Predicated region
        $region61: #{tpu_custom_call.1} parent=59 // pred_check
          %p475 = pneg %p73
        $region62: #{tpu_custom_call.1} parent=59 // pred_check_branch
          %477 = sbr.rel (%p475) target = $region64
        $region63: #{tpu_custom_call.1} parent=59 // pred_region
          %478 = dma.done %s471, 2048
        $region64: #{tpu_custom_call.1} parent=59 // pred_fallthru
          _
        %s479 = sand.u32 %s31, 1
        %s480 = scalar_lea.sflag [#allocation8], %s479
        %s481 = sand.u32 %s96, 1
        %s482 = smul.addr %s481, 64
        %s483 = scalar_lea.vmem [#allocation7], %s482
        // Predicated region
        $region65: #{tpu_custom_call.1} parent=59 // pred_check
          %p484 = pneg %p109
        $region66: #{tpu_custom_call.1} parent=59 // pred_check_branch
          %486 = sbr.rel (%p484) target = $region68
        $region67: #{tpu_custom_call.1} parent=59 // pred_region
          %487 = dma.done %s480, 1024
        $region68: #{tpu_custom_call.1} parent=59 // pred_fallthru
          _
        // Predicated region
        $region69: #{tpu_custom_call.1} parent=59 // pred_check
          %p488 = pneg %p151
        $region70: #{tpu_custom_call.1} parent=59 // pred_check_branch
          %490 = sbr.rel (%p488) target = $region72
        $region71: #{tpu_custom_call.1} parent=59 // pred_region
          %491 = dma.done [#allocation8], 1024
        $region72: #{tpu_custom_call.1} parent=59 // pred_fallthru
          _
        // Predicated region
        $region73: #{tpu_custom_call.1} parent=59 // pred_check
          %p492 = pneg %p193
        $region74: #{tpu_custom_call.1} parent=59 // pred_check_branch
          %494 = sbr.rel (%p492) target = $region76
        $region75: #{tpu_custom_call.1} parent=59 // pred_region
          %495 = dma.done [#allocation11], 4096
        $region76: #{tpu_custom_call.1} parent=59 // pred_fallthru
          _
        %s496 = sand.u32 %s31, 1
        %s497 = scalar_lea.sflag [#allocation5], %s496
        %s498 = sand.u32 %s248, 1
        %s499 = smul.addr %s498, 128
        %s500 = scalar_lea.vmem [#allocation12], %s499
        // Predicated region
        $region77: #{tpu_custom_call.1} parent=59 // pred_check
          %p501 = pneg %p261
        $region78: #{tpu_custom_call.1} parent=59 // pred_check_branch
          %503 = sbr.rel (%p501) target = $region80
        $region79: #{tpu_custom_call.1} parent=59 // pred_region
          %504 = dma.done %s497, 2048
        $region80: #{tpu_custom_call.1} parent=59 // pred_fallthru
          _
        %s505 = sand.u32 %s31, 1
        %s506 = scalar_lea.sflag [#allocation8], %s505
        %s507 = sand.u32 %s274, 1
        %s508 = smul.addr %s507, 128
        %s509 = scalar_lea.vmem [#allocation13], %s508
        // Predicated region
        $region81: #{tpu_custom_call.1} parent=59 // pred_check
          %p510 = pneg %p287
        $region82: #{tpu_custom_call.1} parent=59 // pred_check_branch
          %512 = sbr.rel (%p510) target = $region84
        $region83: #{tpu_custom_call.1} parent=59 // pred_region
          %513 = dma.done %s506, 2048
        $region84: #{tpu_custom_call.1} parent=59 // pred_fallthru
          _
        %s514 = sand.u32 %s31, 1
        %s515 = scalar_lea.sflag [#allocation5], %s514
        %s516 = sand.u32 %s60, 1
        %s517 = smul.addr %s516, 128
        %s518 = scalar_lea.vmem [#allocation4], %s517
        %p519 = pneg %p73
        %p520 = pneg %p70
        %s521 = sand.u32 %s31, 1
        %s522 = scalar_lea.sflag [#allocation8], %s521
        %s523 = sand.u32 %s96, 1
        %s524 = smul.addr %s523, 64
        %s525 = scalar_lea.vmem [#allocation7], %s524
        %p526 = pneg %p109
        %p527 = pneg %p106
        %p528 = pneg %p130
        %p529 = pneg %p127
        %p530 = pneg %p151
        %p531 = pneg %p148
        %p532 = pneg %p172
        %p533 = pneg %p169
        %p534 = pneg %p193
        %p535 = pneg %p190
        %p536 = pneg %p214
        %p537 = pneg %p211
        %p538 = pneg %p235
        %p539 = pneg %p232
        %s540 = sand.u32 %s31, 1
        %s541 = scalar_lea.sflag [#allocation5], %s540
        %s542 = sand.u32 %s248, 1
        %s543 = smul.addr %s542, 128
        %s544 = scalar_lea.vmem [#allocation12], %s543
        %p545 = pneg %p261
        %p546 = pneg %p258
        %s547 = sand.u32 %s31, 1
        %s548 = scalar_lea.sflag [#allocation8], %s547
        %s549 = sand.u32 %s274, 1
        %s550 = smul.addr %s549, 128
        %s551 = scalar_lea.vmem [#allocation13], %s550
        %p552 = pneg %p287
        %p553 = pneg %p284
        %p554 = pneg %p315
        %p555 = pneg %p312
        %s556 = sand.u32 %s302, 1
        %s557 = scalar_lea.sflag [#allocation6], %s556
        %s558 = sand.u32 %s302, 1
        %s559 = smul.addr %s558, 128
        %s560 = scalar_lea.vmem [#allocation14], %s559
        %s561 = smul.u32 16, %s37
        %s562 = smul.u32 %s37, 2
        %s563 = ssub.s32 %s562, 1
        %p564 = scmp.gt.s32.totalorder %s563, 0
        %s565 = scalar_select %p564, %s563, 0
        %s566 = smul.u32 8, %s565
        %s567 = smul.u32 16, %s38
        %s568 = smul.u32 16, %s37
        %p569 = scmp.eq.s32.totalorder %s38, 0
        // Predicated region
        $region85: #{tpu_custom_call.1} parent=59 // pred_check
          %p570 = pneg %p569
        $region86: #{tpu_custom_call.1} parent=59 // pred_check_branch
          %572 = sbr.rel (%p570) target = $region88
        $region87: #{tpu_custom_call.1} parent=59 // pred_region
          %v573 = vld [vmem:[%s2] sm:$0x1]
          %v574 = vld [vmem:[%s474] sm:$0xff]
          %v575 = vld [vmem:[%s474 + $0x8] sm:$0xff]
          %v576 = vld [vmem:[%s474 + $0x10] sm:$0xff]
          %v577 = vld [vmem:[%s474 + $0x18] sm:$0xff]
          %v578 = vld [vmem:[%s474 + $0x20] sm:$0xff]
          %v579 = vld [vmem:[%s474 + $0x28] sm:$0xff]
          %v580 = vld [vmem:[%s474 + $0x30] sm:$0xff]
          %v581 = vld [vmem:[%s474 + $0x38] sm:$0xff]
          %v582 = vld [vmem:[%s474 + $0x40] sm:$0xff]
          %v583 = vld [vmem:[%s474 + $0x48] sm:$0xff]
          %v584 = vld [vmem:[%s474 + $0x50] sm:$0xff]
          %v585 = vld [vmem:[%s474 + $0x58] sm:$0xff]
          %v586 = vld [vmem:[%s474 + $0x60] sm:$0xff]
          %v587 = vld [vmem:[%s474 + $0x68] sm:$0xff]
          %v588 = vld [vmem:[%s474 + $0x70] sm:$0xff]
          %v589 = vld [vmem:[%s474 + $0x78] sm:$0xff]
          %v590 = vmul.f32 %v574, %v574
          %v591 = vmul.f32 %v575, %v575
          %v592 = vmul.f32 %v576, %v576
          %v593 = vmul.f32 %v577, %v577
          %v594 = vmul.f32 %v578, %v578
          %v595 = vmul.f32 %v579, %v579
          %v596 = vmul.f32 %v580, %v580
          %v597 = vmul.f32 %v581, %v581
          %v598 = vmul.f32 %v582, %v582
          %v599 = vmul.f32 %v583, %v583
          %v600 = vmul.f32 %v584, %v584
          %v601 = vmul.f32 %v585, %v585
          %v602 = vmul.f32 %v586, %v586
          %v603 = vmul.f32 %v587, %v587
          %v604 = vmul.f32 %v588, %v588
          %v605 = vmul.f32 %v589, %v589
          %606 = vadd.xlane.f32.xlu0 %v590
          %v607 = vpop.xlane.xlu0 %606
          %608 = vadd.xlane.f32.xlu0 %v591
          %v609 = vpop.xlane.xlu0 %608
          %610 = vadd.xlane.f32.xlu0 %v592
          %v611 = vpop.xlane.xlu0 %610
          %612 = vadd.xlane.f32.xlu0 %v593
          %v613 = vpop.xlane.xlu0 %612
          %614 = vadd.xlane.f32.xlu0 %v594
          %v615 = vpop.xlane.xlu0 %614
          %616 = vadd.xlane.f32.xlu0 %v595
          %v617 = vpop.xlane.xlu0 %616
          %618 = vadd.xlane.f32.xlu0 %v596
          %v619 = vpop.xlane.xlu0 %618
          %620 = vadd.xlane.f32.xlu0 %v597
          %v621 = vpop.xlane.xlu0 %620
          %622 = vadd.xlane.f32.xlu0 %v598
          %v623 = vpop.xlane.xlu0 %622
          %624 = vadd.xlane.f32.xlu0 %v599
          %v625 = vpop.xlane.xlu0 %624
          %626 = vadd.xlane.f32.xlu0 %v600
          %v627 = vpop.xlane.xlu0 %626
          %628 = vadd.xlane.f32.xlu0 %v601
          %v629 = vpop.xlane.xlu0 %628
          %630 = vadd.xlane.f32.xlu0 %v602
          %v631 = vpop.xlane.xlu0 %630
          %632 = vadd.xlane.f32.xlu0 %v603
          %v633 = vpop.xlane.xlu0 %632
          %634 = vadd.xlane.f32.xlu0 %v604
          %v635 = vpop.xlane.xlu0 %634
          %636 = vadd.xlane.f32.xlu0 %v605
          %v637 = vpop.xlane.xlu0 %636
          %v638 = vrcp.pop 128.0
          %v639 = vmul.f32 %v607, %v638
          %v640 = vmul.f32 %v609, %v638
          %v641 = vmul.f32 %v611, %v638
          %v642 = vmul.f32 %v613, %v638
          %v643 = vmul.f32 %v615, %v638
          %v644 = vmul.f32 %v617, %v638
          %v645 = vmul.f32 %v619, %v638
          %v646 = vmul.f32 %v621, %v638
          %v647 = vmul.f32 %v623, %v638
          %v648 = vmul.f32 %v625, %v638
          %v649 = vmul.f32 %v627, %v638
          %v650 = vmul.f32 %v629, %v638
          %v651 = vmul.f32 %v631, %v638
          %v652 = vmul.f32 %v633, %v638
          %v653 = vmul.f32 %v635, %v638
          %v654 = vmul.f32 %v637, %v638
          %v655 = vadd.f32 %v639, 1e-06
          %v656 = vadd.f32 %v640, 1e-06
          %v657 = vadd.f32 %v641, 1e-06
          %v658 = vadd.f32 %v642, 1e-06
          %v659 = vadd.f32 %v643, 1e-06
          %v660 = vadd.f32 %v644, 1e-06
          %v661 = vadd.f32 %v645, 1e-06
          %v662 = vadd.f32 %v646, 1e-06
          %v663 = vadd.f32 %v647, 1e-06
          %v664 = vadd.f32 %v648, 1e-06
          %v665 = vadd.f32 %v649, 1e-06
          %v666 = vadd.f32 %v650, 1e-06
          %v667 = vadd.f32 %v651, 1e-06
          %v668 = vadd.f32 %v652, 1e-06
          %v669 = vadd.f32 %v653, 1e-06
          %v670 = vadd.f32 %v654, 1e-06
          %v671 = vrsqrt.pop %v655
          %v672 = vrsqrt.pop %v656
          %v673 = vrsqrt.pop %v657
          %v674 = vrsqrt.pop %v658
          %v675 = vrsqrt.pop %v659
          %v676 = vrsqrt.pop %v660
          %v677 = vrsqrt.pop %v661
          %v678 = vrsqrt.pop %v662
          %v679 = vrsqrt.pop %v663
          %v680 = vrsqrt.pop %v664
          %v681 = vrsqrt.pop %v665
          %v682 = vrsqrt.pop %v666
          %v683 = vrsqrt.pop %v667
          %v684 = vrsqrt.pop %v668
          %v685 = vrsqrt.pop %v669
          %v686 = vrsqrt.pop %v670
          %v687 = vmul.f32 %v574, %v671
          %v688 = vmul.f32 %v575, %v672
          %v689 = vmul.f32 %v576, %v673
          %v690 = vmul.f32 %v577, %v674
          %v691 = vmul.f32 %v578, %v675
          %v692 = vmul.f32 %v579, %v676
          %v693 = vmul.f32 %v580, %v677
          %v694 = vmul.f32 %v581, %v678
          %v695 = vmul.f32 %v582, %v679
          %v696 = vmul.f32 %v583, %v680
          %v697 = vmul.f32 %v584, %v681
          %v698 = vmul.f32 %v585, %v682
          %v699 = vmul.f32 %v586, %v683
          %v700 = vmul.f32 %v587, %v684
          %v701 = vmul.f32 %v588, %v685
          %v702 = vmul.f32 %v589, %v686
          %v704 = vlaneseq
          %v705 = vshrl.u32 %v704, 7
          %v706 = vsub.s32 0, %v705
          %v707 = vrot.slane %v573, %v706
          %v709 = vmul.f32 %v687, %v707
          %v710 = vmul.f32 %v688, %v707
          %v711 = vmul.f32 %v689, %v707
          %v712 = vmul.f32 %v690, %v707
          %v713 = vmul.f32 %v691, %v707
          %v714 = vmul.f32 %v692, %v707
          %v715 = vmul.f32 %v693, %v707
          %v716 = vmul.f32 %v694, %v707
          %v717 = vmul.f32 %v695, %v707
          %v718 = vmul.f32 %v696, %v707
          %v719 = vmul.f32 %v697, %v707
          %v720 = vmul.f32 %v698, %v707
          %v721 = vmul.f32 %v699, %v707
          %v722 = vmul.f32 %v700, %v707
          %v723 = vmul.f32 %v701, %v707
          %v724 = vmul.f32 %v702, %v707
          %v725 = vld [vmem:[%s483] sm:$0xff]
          %v726 = vld [vmem:[%s483 + $0x8] sm:$0xff]
          %v727 = vld [vmem:[%s483 + $0x10] sm:$0xff]
          %v728 = vld [vmem:[%s483 + $0x18] sm:$0xff]
          %v729 = vld [vmem:[%s483 + $0x20] sm:$0xff]
          %v730 = vld [vmem:[%s483 + $0x28] sm:$0xff]
          %v731 = vld [vmem:[%s483 + $0x30] sm:$0xff]
          %v732 = vld [vmem:[%s483 + $0x38] sm:$0xff]
          %v733 = vmul.f32 %v725, %v725
          %v734 = vmul.f32 %v726, %v726
          %v735 = vmul.f32 %v727, %v727
          %v736 = vmul.f32 %v728, %v728
          %v737 = vmul.f32 %v729, %v729
          %v738 = vmul.f32 %v730, %v730
          %v739 = vmul.f32 %v731, %v731
          %v740 = vmul.f32 %v732, %v732
          %741 = vadd.xlane.f32.xlu0 %v733
          %v742 = vpop.xlane.xlu0 %741
          %743 = vadd.xlane.f32.xlu0 %v734
          %v744 = vpop.xlane.xlu0 %743
          %745 = vadd.xlane.f32.xlu0 %v735
          %v746 = vpop.xlane.xlu0 %745
          %747 = vadd.xlane.f32.xlu0 %v736
          %v748 = vpop.xlane.xlu0 %747
          %749 = vadd.xlane.f32.xlu0 %v737
          %v750 = vpop.xlane.xlu0 %749
          %751 = vadd.xlane.f32.xlu0 %v738
          %v752 = vpop.xlane.xlu0 %751
          %753 = vadd.xlane.f32.xlu0 %v739
          %v754 = vpop.xlane.xlu0 %753
          %755 = vadd.xlane.f32.xlu0 %v740
          %v756 = vpop.xlane.xlu0 %755
          %v757 = vmul.f32 %v742, %v638
          %v758 = vmul.f32 %v744, %v638
          %v759 = vmul.f32 %v746, %v638
          %v760 = vmul.f32 %v748, %v638
          %v761 = vmul.f32 %v750, %v638
          %v762 = vmul.f32 %v752, %v638
          %v763 = vmul.f32 %v754, %v638
          %v764 = vmul.f32 %v756, %v638
          %v765 = vadd.f32 %v757, 1e-06
          %v766 = vadd.f32 %v758, 1e-06
          %v767 = vadd.f32 %v759, 1e-06
          %v768 = vadd.f32 %v760, 1e-06
          %v769 = vadd.f32 %v761, 1e-06
          %v770 = vadd.f32 %v762, 1e-06
          %v771 = vadd.f32 %v763, 1e-06
          %v772 = vadd.f32 %v764, 1e-06
          %v773 = vrsqrt.pop %v765
          %v774 = vrsqrt.pop %v766
          %v775 = vrsqrt.pop %v767
          %v776 = vrsqrt.pop %v768
          %v777 = vrsqrt.pop %v769
          %v778 = vrsqrt.pop %v770
          %v779 = vrsqrt.pop %v771
          %v780 = vrsqrt.pop %v772
          %v781 = vmul.f32 %v725, %v773
          %v782 = vmul.f32 %v726, %v774
          %v783 = vmul.f32 %v727, %v775
          %v784 = vmul.f32 %v728, %v776
          %v785 = vmul.f32 %v729, %v777
          %v786 = vmul.f32 %v730, %v778
          %v787 = vmul.f32 %v731, %v779
          %v788 = vmul.f32 %v732, %v780
          %v789 = vmul.f32 %v781, %v707
          %v790 = vmul.f32 %v782, %v707
          %v791 = vmul.f32 %v783, %v707
          %v792 = vmul.f32 %v784, %v707
          %v793 = vmul.f32 %v785, %v707
          %v794 = vmul.f32 %v786, %v707
          %v795 = vmul.f32 %v787, %v707
          %v796 = vmul.f32 %v788, %v707
          %p797 = scmp.gt.s32.totalorder %s37, 0
          %s798 = scalar_select %p797, 1, 0
          %s799 = scvt.s32.f32 %s798
          %v800 = vstv %s799
          %v801 = vmul.f32 %v789, %v800
          %v802 = vmul.f32 %v790, %v800
          %v803 = vmul.f32 %v791, %v800
          %v804 = vmul.f32 %v792, %v800
          %v805 = vmul.f32 %v793, %v800
          %v806 = vmul.f32 %v794, %v800
          %v807 = vmul.f32 %v795, %v800
          %v808 = vmul.f32 %v796, %v800
          %809 = vst [vmem:[#allocation2] sm:$0xff] %v801
          %810 = vst [vmem:[#allocation2 + $0x8] sm:$0xff] %v802
          %811 = vst [vmem:[#allocation2 + $0x10] sm:$0xff] %v803
          %812 = vst [vmem:[#allocation2 + $0x18] sm:$0xff] %v804
          %813 = vst [vmem:[#allocation2 + $0x20] sm:$0xff] %v805
          %814 = vst [vmem:[#allocation2 + $0x28] sm:$0xff] %v806
          %815 = vst [vmem:[#allocation2 + $0x30] sm:$0xff] %v807
          %816 = vst [vmem:[#allocation2 + $0x38] sm:$0xff] %v808
          %817 = vst [vmem:[#allocation2 + $0x40] sm:$0xff] %v709
          %818 = vst [vmem:[#allocation2 + $0x48] sm:$0xff] %v710
          %819 = vst [vmem:[#allocation2 + $0x50] sm:$0xff] %v711
          %820 = vst [vmem:[#allocation2 + $0x58] sm:$0xff] %v712
          %821 = vst [vmem:[#allocation2 + $0x60] sm:$0xff] %v713
          %822 = vst [vmem:[#allocation2 + $0x68] sm:$0xff] %v714
          %823 = vst [vmem:[#allocation2 + $0x70] sm:$0xff] %v715
          %824 = vst [vmem:[#allocation2 + $0x78] sm:$0xff] %v716
          %825 = vst [vmem:[#allocation2 + $0x80] sm:$0xff] %v717
          %826 = vst [vmem:[#allocation2 + $0x88] sm:$0xff] %v718
          %827 = vst [vmem:[#allocation2 + $0x90] sm:$0xff] %v719
          %828 = vst [vmem:[#allocation2 + $0x98] sm:$0xff] %v720
          %829 = vst [vmem:[#allocation2 + $0xa0] sm:$0xff] %v721
          %830 = vst [vmem:[#allocation2 + $0xa8] sm:$0xff] %v722
          %831 = vst [vmem:[#allocation2 + $0xb0] sm:$0xff] %v723
          %832 = vst [vmem:[#allocation2 + $0xb8] sm:$0xff] %v724
          %v833 = vld [vmem:[%s4] sm:$0x1]
          %v835 = vlaneseq
          %v836 = vshrl.u32 %v835, 7
          %v837 = vsub.s32 0, %v836
          %v838 = vrot.slane %v833, %v837
          %v840 = vmul.f32 %v709, %v838
          %v841 = vmul.f32 %v710, %v838
          %v842 = vmul.f32 %v711, %v838
          %v843 = vmul.f32 %v712, %v838
          %v844 = vmul.f32 %v713, %v838
          %v845 = vmul.f32 %v714, %v838
          %v846 = vmul.f32 %v715, %v838
          %v847 = vmul.f32 %v716, %v838
          %v848 = vmul.f32 %v717, %v838
          %v849 = vmul.f32 %v718, %v838
          %v850 = vmul.f32 %v719, %v838
          %v851 = vmul.f32 %v720, %v838
          %v852 = vmul.f32 %v721, %v838
          %v853 = vmul.f32 %v722, %v838
          %v854 = vmul.f32 %v723, %v838
          %v855 = vmul.f32 %v724, %v838
          %v856 = vld [vmem:[#allocation9] sm:$0x1]
          %v857 = vld [vmem:[#allocation2 + $0x40] sm:$0xff]
          %v858 = vld [vmem:[#allocation2 + $0x48] sm:$0xff]
          %v859 = vld [vmem:[#allocation2 + $0x50] sm:$0xff]
          %v860 = vld [vmem:[#allocation2 + $0x58] sm:$0xff]
          %v861 = vld [vmem:[#allocation2 + $0x60] sm:$0xff]
          %v862 = vld [vmem:[#allocation2 + $0x68] sm:$0xff]
          %v863 = vld [vmem:[#allocation2 + $0x70] sm:$0xff]
          %v864 = vld [vmem:[#allocation2 + $0x78] sm:$0xff]
          %v865 = vld [vmem:[#allocation2 + $0x80] sm:$0xff]
          %v866 = vld [vmem:[#allocation2 + $0x88] sm:$0xff]
          %v867 = vld [vmem:[#allocation2 + $0x90] sm:$0xff]
          %v868 = vld [vmem:[#allocation2 + $0x98] sm:$0xff]
          %v869 = vld [vmem:[#allocation2 + $0xa0] sm:$0xff]
          %v870 = vld [vmem:[#allocation2 + $0xa8] sm:$0xff]
          %v871 = vld [vmem:[#allocation2 + $0xb0] sm:$0xff]
          %v872 = vld [vmem:[#allocation2 + $0xb8] sm:$0xff]
          %v873 = vlaneseq
          %v874 = vshrl.u32 %v873, 7
          %v875 = vsub.s32 0, %v874
          %v876 = vrot.slane %v856, %v875
          %v877 = vmul.f32 %v876, %v857
          %v878 = vmul.f32 %v876, %v858
          %v879 = vmul.f32 %v876, %v859
          %v880 = vmul.f32 %v876, %v860
          %v881 = vmul.f32 %v876, %v861
          %v882 = vmul.f32 %v876, %v862
          %v883 = vmul.f32 %v876, %v863
          %v884 = vmul.f32 %v876, %v864
          %v885 = vmul.f32 %v876, %v865
          %v886 = vmul.f32 %v876, %v866
          %v887 = vmul.f32 %v876, %v867
          %v888 = vmul.f32 %v876, %v868
          %v889 = vmul.f32 %v876, %v869
          %v890 = vmul.f32 %v876, %v870
          %v891 = vmul.f32 %v876, %v871
          %v892 = vmul.f32 %v876, %v872
          %v893 = vadd.f32 %v840, %v877
          %v894 = vadd.f32 %v841, %v878
          %v895 = vadd.f32 %v842, %v879
          %v896 = vadd.f32 %v843, %v880
          %v897 = vadd.f32 %v844, %v881
          %v898 = vadd.f32 %v845, %v882
          %v899 = vadd.f32 %v846, %v883
          %v900 = vadd.f32 %v847, %v884
          %v901 = vadd.f32 %v848, %v885
          %v902 = vadd.f32 %v849, %v886
          %v903 = vadd.f32 %v850, %v887
          %v904 = vadd.f32 %v851, %v888
          %v905 = vadd.f32 %v852, %v889
          %v906 = vadd.f32 %v853, %v890
          %v907 = vadd.f32 %v854, %v891
          %v908 = vadd.f32 %v855, %v892
          %v909 = vld [vmem:[#allocation9 + $0x1] sm:$0x1]
          %v910 = vld [vmem:[#allocation2 + $0x3f] sm:$0xff]
          %v911 = vld [vmem:[#allocation2 + $0x47] sm:$0xff]
          %v912 = vld [vmem:[#allocation2 + $0x4f] sm:$0xff]
          %v913 = vld [vmem:[#allocation2 + $0x57] sm:$0xff]
          %v914 = vld [vmem:[#allocation2 + $0x5f] sm:$0xff]
          %v915 = vld [vmem:[#allocation2 + $0x67] sm:$0xff]
          %v916 = vld [vmem:[#allocation2 + $0x6f] sm:$0xff]
          %v917 = vld [vmem:[#allocation2 + $0x77] sm:$0xff]
          %v918 = vld [vmem:[#allocation2 + $0x7f] sm:$0xff]
          %v919 = vld [vmem:[#allocation2 + $0x87] sm:$0xff]
          %v920 = vld [vmem:[#allocation2 + $0x8f] sm:$0xff]
          %v921 = vld [vmem:[#allocation2 + $0x97] sm:$0xff]
          %v922 = vld [vmem:[#allocation2 + $0x9f] sm:$0xff]
          %v923 = vld [vmem:[#allocation2 + $0xa7] sm:$0xff]
          %v924 = vld [vmem:[#allocation2 + $0xaf] sm:$0xff]
          %v925 = vld [vmem:[#allocation2 + $0xb7] sm:$0xff]
          %v926 = vlaneseq
          %v927 = vshrl.u32 %v926, 7
          %v928 = vsub.s32 0, %v927
          %v929 = vrot.slane %v909, %v928
          %v930 = vmul.f32 %v929, %v910
          %v931 = vmul.f32 %v929, %v911
          %v932 = vmul.f32 %v929, %v912
          %v933 = vmul.f32 %v929, %v913
          %v934 = vmul.f32 %v929, %v914
          %v935 = vmul.f32 %v929, %v915
          %v936 = vmul.f32 %v929, %v916
          %v937 = vmul.f32 %v929, %v917
          %v938 = vmul.f32 %v929, %v918
          %v939 = vmul.f32 %v929, %v919
          %v940 = vmul.f32 %v929, %v920
          %v941 = vmul.f32 %v929, %v921
          %v942 = vmul.f32 %v929, %v922
          %v943 = vmul.f32 %v929, %v923
          %v944 = vmul.f32 %v929, %v924
          %v945 = vmul.f32 %v929, %v925
          %v946 = vadd.f32 %v893, %v930
          %v947 = vadd.f32 %v894, %v931
          %v948 = vadd.f32 %v895, %v932
          %v949 = vadd.f32 %v896, %v933
          %v950 = vadd.f32 %v897, %v934
          %v951 = vadd.f32 %v898, %v935
          %v952 = vadd.f32 %v899, %v936
          %v953 = vadd.f32 %v900, %v937
          %v954 = vadd.f32 %v901, %v938
          %v955 = vadd.f32 %v902, %v939
          %v956 = vadd.f32 %v903, %v940
          %v957 = vadd.f32 %v904, %v941
          %v958 = vadd.f32 %v905, %v942
          %v959 = vadd.f32 %v906, %v943
          %v960 = vadd.f32 %v907, %v944
          %v961 = vadd.f32 %v908, %v945
          %v962 = vld [vmem:[#allocation9 + $0x2] sm:$0x1]
          %v963 = vld [vmem:[#allocation2 + $0x3e] sm:$0xff]
          %v964 = vld [vmem:[#allocation2 + $0x46] sm:$0xff]
          %v965 = vld [vmem:[#allocation2 + $0x4e] sm:$0xff]
          %v966 = vld [vmem:[#allocation2 + $0x56] sm:$0xff]
          %v967 = vld [vmem:[#allocation2 + $0x5e] sm:$0xff]
          %v968 = vld [vmem:[#allocation2 + $0x66] sm:$0xff]
          %v969 = vld [vmem:[#allocation2 + $0x6e] sm:$0xff]
          %v970 = vld [vmem:[#allocation2 + $0x76] sm:$0xff]
          %v971 = vld [vmem:[#allocation2 + $0x7e] sm:$0xff]
          %v972 = vld [vmem:[#allocation2 + $0x86] sm:$0xff]
          %v973 = vld [vmem:[#allocation2 + $0x8e] sm:$0xff]
          %v974 = vld [vmem:[#allocation2 + $0x96] sm:$0xff]
          %v975 = vld [vmem:[#allocation2 + $0x9e] sm:$0xff]
          %v976 = vld [vmem:[#allocation2 + $0xa6] sm:$0xff]
          %v977 = vld [vmem:[#allocation2 + $0xae] sm:$0xff]
          %v978 = vld [vmem:[#allocation2 + $0xb6] sm:$0xff]
          %v979 = vlaneseq
          %v980 = vshrl.u32 %v979, 7
          %v981 = vsub.s32 0, %v980
          %v982 = vrot.slane %v962, %v981
          %v983 = vmul.f32 %v982, %v963
          %v984 = vmul.f32 %v982, %v964
          %v985 = vmul.f32 %v982, %v965
          %v986 = vmul.f32 %v982, %v966
          %v987 = vmul.f32 %v982, %v967
          %v988 = vmul.f32 %v982, %v968
          %v989 = vmul.f32 %v982, %v969
          %v990 = vmul.f32 %v982, %v970
          %v991 = vmul.f32 %v982, %v971
          %v992 = vmul.f32 %v982, %v972
          %v993 = vmul.f32 %v982, %v973
          %v994 = vmul.f32 %v982, %v974
          %v995 = vmul.f32 %v982, %v975
          %v996 = vmul.f32 %v982, %v976
          %v997 = vmul.f32 %v982, %v977
          %v998 = vmul.f32 %v982, %v978
          %v999 = vadd.f32 %v946, %v983
          %v1000 = vadd.f32 %v947, %v984
          %v1001 = vadd.f32 %v948, %v985
          %v1002 = vadd.f32 %v949, %v986
          %v1003 = vadd.f32 %v950, %v987
          %v1004 = vadd.f32 %v951, %v988
          %v1005 = vadd.f32 %v952, %v989
          %v1006 = vadd.f32 %v953, %v990
          %v1007 = vadd.f32 %v954, %v991
          %v1008 = vadd.f32 %v955, %v992
          %v1009 = vadd.f32 %v956, %v993
          %v1010 = vadd.f32 %v957, %v994
          %v1011 = vadd.f32 %v958, %v995
          %v1012 = vadd.f32 %v959, %v996
          %v1013 = vadd.f32 %v960, %v997
          %v1014 = vadd.f32 %v961, %v998
          %v1015 = vld [vmem:[#allocation9 + $0x3] sm:$0x1]
          %v1016 = vld [vmem:[#allocation2 + $0x3d] sm:$0xff]
          %v1017 = vld [vmem:[#allocation2 + $0x45] sm:$0xff]
          %v1018 = vld [vmem:[#allocation2 + $0x4d] sm:$0xff]
          %v1019 = vld [vmem:[#allocation2 + $0x55] sm:$0xff]
          %v1020 = vld [vmem:[#allocation2 + $0x5d] sm:$0xff]
          %v1021 = vld [vmem:[#allocation2 + $0x65] sm:$0xff]
          %v1022 = vld [vmem:[#allocation2 + $0x6d] sm:$0xff]
          %v1023 = vld [vmem:[#allocation2 + $0x75] sm:$0xff]
          %v1024 = vld [vmem:[#allocation2 + $0x7d] sm:$0xff]
          %v1025 = vld [vmem:[#allocation2 + $0x85] sm:$0xff]
          %v1026 = vld [vmem:[#allocation2 + $0x8d] sm:$0xff]
          %v1027 = vld [vmem:[#allocation2 + $0x95] sm:$0xff]
          %v1028 = vld [vmem:[#allocation2 + $0x9d] sm:$0xff]
          %v1029 = vld [vmem:[#allocation2 + $0xa5] sm:$0xff]
          %v1030 = vld [vmem:[#allocation2 + $0xad] sm:$0xff]
          %v1031 = vld [vmem:[#allocation2 + $0xb5] sm:$0xff]
          %v1032 = vlaneseq
          %v1033 = vshrl.u32 %v1032, 7
          %v1034 = vsub.s32 0, %v1033
          %v1035 = vrot.slane %v1015, %v1034
          %v1036 = vmul.f32 %v1035, %v1016
          %v1037 = vmul.f32 %v1035, %v1017
          %v1038 = vmul.f32 %v1035, %v1018
          %v1039 = vmul.f32 %v1035, %v1019
          %v1040 = vmul.f32 %v1035, %v1020
          %v1041 = vmul.f32 %v1035, %v1021
          %v1042 = vmul.f32 %v1035, %v1022
          %v1043 = vmul.f32 %v1035, %v1023
          %v1044 = vmul.f32 %v1035, %v1024
          %v1045 = vmul.f32 %v1035, %v1025
          %v1046 = vmul.f32 %v1035, %v1026
          %v1047 = vmul.f32 %v1035, %v1027
          %v1048 = vmul.f32 %v1035, %v1028
          %v1049 = vmul.f32 %v1035, %v1029
          %v1050 = vmul.f32 %v1035, %v1030
          %v1051 = vmul.f32 %v1035, %v1031
          %v1052 = vadd.f32 %v999, %v1036
          %v1053 = vadd.f32 %v1000, %v1037
          %v1054 = vadd.f32 %v1001, %v1038
          %v1055 = vadd.f32 %v1002, %v1039
          %v1056 = vadd.f32 %v1003, %v1040
          %v1057 = vadd.f32 %v1004, %v1041
          %v1058 = vadd.f32 %v1005, %v1042
          %v1059 = vadd.f32 %v1006, %v1043
          %v1060 = vadd.f32 %v1007, %v1044
          %v1061 = vadd.f32 %v1008, %v1045
          %v1062 = vadd.f32 %v1009, %v1046
          %v1063 = vadd.f32 %v1010, %v1047
          %v1064 = vadd.f32 %v1011, %v1048
          %v1065 = vadd.f32 %v1012, %v1049
          %v1066 = vadd.f32 %v1013, %v1050
          %v1067 = vadd.f32 %v1014, %v1051
          %v1068 = vld [vmem:[#allocation9 + $0x4] sm:$0x1]
          %v1069 = vld [vmem:[#allocation2 + $0x3c] sm:$0xff]
          %v1070 = vld [vmem:[#allocation2 + $0x44] sm:$0xff]
          %v1071 = vld [vmem:[#allocation2 + $0x4c] sm:$0xff]
          %v1072 = vld [vmem:[#allocation2 + $0x54] sm:$0xff]
          %v1073 = vld [vmem:[#allocation2 + $0x5c] sm:$0xff]
          %v1074 = vld [vmem:[#allocation2 + $0x64] sm:$0xff]
          %v1075 = vld [vmem:[#allocation2 + $0x6c] sm:$0xff]
          %v1076 = vld [vmem:[#allocation2 + $0x74] sm:$0xff]
          %v1077 = vld [vmem:[#allocation2 + $0x7c] sm:$0xff]
          %v1078 = vld [vmem:[#allocation2 + $0x84] sm:$0xff]
          %v1079 = vld [vmem:[#allocation2 + $0x8c] sm:$0xff]
          %v1080 = vld [vmem:[#allocation2 + $0x94] sm:$0xff]
          %v1081 = vld [vmem:[#allocation2 + $0x9c] sm:$0xff]
          %v1082 = vld [vmem:[#allocation2 + $0xa4] sm:$0xff]
          %v1083 = vld [vmem:[#allocation2 + $0xac] sm:$0xff]
          %v1084 = vld [vmem:[#allocation2 + $0xb4] sm:$0xff]
          %v1085 = vlaneseq
          %v1086 = vshrl.u32 %v1085, 7
          %v1087 = vsub.s32 0, %v1086
          %v1088 = vrot.slane %v1068, %v1087
          %v1089 = vmul.f32 %v1088, %v1069
          %v1090 = vmul.f32 %v1088, %v1070
          %v1091 = vmul.f32 %v1088, %v1071
          %v1092 = vmul.f32 %v1088, %v1072
          %v1093 = vmul.f32 %v1088, %v1073
          %v1094 = vmul.f32 %v1088, %v1074
          %v1095 = vmul.f32 %v1088, %v1075
          %v1096 = vmul.f32 %v1088, %v1076
          %v1097 = vmul.f32 %v1088, %v1077
          %v1098 = vmul.f32 %v1088, %v1078
          %v1099 = vmul.f32 %v1088, %v1079
          %v1100 = vmul.f32 %v1088, %v1080
          %v1101 = vmul.f32 %v1088, %v1081
          %v1102 = vmul.f32 %v1088, %v1082
          %v1103 = vmul.f32 %v1088, %v1083
          %v1104 = vmul.f32 %v1088, %v1084
          %v1105 = vadd.f32 %v1052, %v1089
          %v1106 = vadd.f32 %v1053, %v1090
          %v1107 = vadd.f32 %v1054, %v1091
          %v1108 = vadd.f32 %v1055, %v1092
          %v1109 = vadd.f32 %v1056, %v1093
          %v1110 = vadd.f32 %v1057, %v1094
          %v1111 = vadd.f32 %v1058, %v1095
          %v1112 = vadd.f32 %v1059, %v1096
          %v1113 = vadd.f32 %v1060, %v1097
          %v1114 = vadd.f32 %v1061, %v1098
          %v1115 = vadd.f32 %v1062, %v1099
          %v1116 = vadd.f32 %v1063, %v1100
          %v1117 = vadd.f32 %v1064, %v1101
          %v1118 = vadd.f32 %v1065, %v1102
          %v1119 = vadd.f32 %v1066, %v1103
          %v1120 = vadd.f32 %v1067, %v1104
          %v1121 = vld [vmem:[#allocation9 + $0x5] sm:$0x1]
          %v1122 = vld [vmem:[#allocation2 + $0x3b] sm:$0xff]
          %v1123 = vld [vmem:[#allocation2 + $0x43] sm:$0xff]
          %v1124 = vld [vmem:[#allocation2 + $0x4b] sm:$0xff]
          %v1125 = vld [vmem:[#allocation2 + $0x53] sm:$0xff]
          %v1126 = vld [vmem:[#allocation2 + $0x5b] sm:$0xff]
          %v1127 = vld [vmem:[#allocation2 + $0x63] sm:$0xff]
          %v1128 = vld [vmem:[#allocation2 + $0x6b] sm:$0xff]
          %v1129 = vld [vmem:[#allocation2 + $0x73] sm:$0xff]
          %v1130 = vld [vmem:[#allocation2 + $0x7b] sm:$0xff]
          %v1131 = vld [vmem:[#allocation2 + $0x83] sm:$0xff]
          %v1132 = vld [vmem:[#allocation2 + $0x8b] sm:$0xff]
          %v1133 = vld [vmem:[#allocation2 + $0x93] sm:$0xff]
          %v1134 = vld [vmem:[#allocation2 + $0x9b] sm:$0xff]
          %v1135 = vld [vmem:[#allocation2 + $0xa3] sm:$0xff]
          %v1136 = vld [vmem:[#allocation2 + $0xab] sm:$0xff]
          %v1137 = vld [vmem:[#allocation2 + $0xb3] sm:$0xff]
          %v1138 = vlaneseq
          %v1139 = vshrl.u32 %v1138, 7
          %v1140 = vsub.s32 0, %v1139
          %v1141 = vrot.slane %v1121, %v1140
          %v1142 = vmul.f32 %v1141, %v1122
          %v1143 = vmul.f32 %v1141, %v1123
          %v1144 = vmul.f32 %v1141, %v1124
          %v1145 = vmul.f32 %v1141, %v1125
          %v1146 = vmul.f32 %v1141, %v1126
          %v1147 = vmul.f32 %v1141, %v1127
          %v1148 = vmul.f32 %v1141, %v1128
          %v1149 = vmul.f32 %v1141, %v1129
          %v1150 = vmul.f32 %v1141, %v1130
          %v1151 = vmul.f32 %v1141, %v1131
          %v1152 = vmul.f32 %v1141, %v1132
          %v1153 = vmul.f32 %v1141, %v1133
          %v1154 = vmul.f32 %v1141, %v1134
          %v1155 = vmul.f32 %v1141, %v1135
          %v1156 = vmul.f32 %v1141, %v1136
          %v1157 = vmul.f32 %v1141, %v1137
          %v1158 = vadd.f32 %v1105, %v1142
          %v1159 = vadd.f32 %v1106, %v1143
          %v1160 = vadd.f32 %v1107, %v1144
          %v1161 = vadd.f32 %v1108, %v1145
          %v1162 = vadd.f32 %v1109, %v1146
          %v1163 = vadd.f32 %v1110, %v1147
          %v1164 = vadd.f32 %v1111, %v1148
          %v1165 = vadd.f32 %v1112, %v1149
          %v1166 = vadd.f32 %v1113, %v1150
          %v1167 = vadd.f32 %v1114, %v1151
          %v1168 = vadd.f32 %v1115, %v1152
          %v1169 = vadd.f32 %v1116, %v1153
          %v1170 = vadd.f32 %v1117, %v1154
          %v1171 = vadd.f32 %v1118, %v1155
          %v1172 = vadd.f32 %v1119, %v1156
          %v1173 = vadd.f32 %v1120, %v1157
          %v1174 = vld [vmem:[#allocation9 + $0x6] sm:$0x1]
          %v1175 = vld [vmem:[#allocation2 + $0x3a] sm:$0xff]
          %v1176 = vld [vmem:[#allocation2 + $0x42] sm:$0xff]
          %v1177 = vld [vmem:[#allocation2 + $0x4a] sm:$0xff]
          %v1178 = vld [vmem:[#allocation2 + $0x52] sm:$0xff]
          %v1179 = vld [vmem:[#allocation2 + $0x5a] sm:$0xff]
          %v1180 = vld [vmem:[#allocation2 + $0x62] sm:$0xff]
          %v1181 = vld [vmem:[#allocation2 + $0x6a] sm:$0xff]
          %v1182 = vld [vmem:[#allocation2 + $0x72] sm:$0xff]
          %v1183 = vld [vmem:[#allocation2 + $0x7a] sm:$0xff]
          %v1184 = vld [vmem:[#allocation2 + $0x82] sm:$0xff]
          %v1185 = vld [vmem:[#allocation2 + $0x8a] sm:$0xff]
          %v1186 = vld [vmem:[#allocation2 + $0x92] sm:$0xff]
          %v1187 = vld [vmem:[#allocation2 + $0x9a] sm:$0xff]
          %v1188 = vld [vmem:[#allocation2 + $0xa2] sm:$0xff]
          %v1189 = vld [vmem:[#allocation2 + $0xaa] sm:$0xff]
          %v1190 = vld [vmem:[#allocation2 + $0xb2] sm:$0xff]
          %v1191 = vlaneseq
          %v1192 = vshrl.u32 %v1191, 7
          %v1193 = vsub.s32 0, %v1192
          %v1194 = vrot.slane %v1174, %v1193
          %v1195 = vmul.f32 %v1194, %v1175
          %v1196 = vmul.f32 %v1194, %v1176
          %v1197 = vmul.f32 %v1194, %v1177
          %v1198 = vmul.f32 %v1194, %v1178
          %v1199 = vmul.f32 %v1194, %v1179
          %v1200 = vmul.f32 %v1194, %v1180
          %v1201 = vmul.f32 %v1194, %v1181
          %v1202 = vmul.f32 %v1194, %v1182
          %v1203 = vmul.f32 %v1194, %v1183
          %v1204 = vmul.f32 %v1194, %v1184
          %v1205 = vmul.f32 %v1194, %v1185
          %v1206 = vmul.f32 %v1194, %v1186
          %v1207 = vmul.f32 %v1194, %v1187
          %v1208 = vmul.f32 %v1194, %v1188
          %v1209 = vmul.f32 %v1194, %v1189
          %v1210 = vmul.f32 %v1194, %v1190
          %v1211 = vadd.f32 %v1158, %v1195
          %v1212 = vadd.f32 %v1159, %v1196
          %v1213 = vadd.f32 %v1160, %v1197
          %v1214 = vadd.f32 %v1161, %v1198
          %v1215 = vadd.f32 %v1162, %v1199
          %v1216 = vadd.f32 %v1163, %v1200
          %v1217 = vadd.f32 %v1164, %v1201
          %v1218 = vadd.f32 %v1165, %v1202
          %v1219 = vadd.f32 %v1166, %v1203
          %v1220 = vadd.f32 %v1167, %v1204
          %v1221 = vadd.f32 %v1168, %v1205
          %v1222 = vadd.f32 %v1169, %v1206
          %v1223 = vadd.f32 %v1170, %v1207
          %v1224 = vadd.f32 %v1171, %v1208
          %v1225 = vadd.f32 %v1172, %v1209
          %v1226 = vadd.f32 %v1173, %v1210
          %v1227 = vld [vmem:[#allocation9 + $0x7] sm:$0x1]
          %v1228 = vld [vmem:[#allocation2 + $0x39] sm:$0xff]
          %v1229 = vld [vmem:[#allocation2 + $0x41] sm:$0xff]
          %v1230 = vld [vmem:[#allocation2 + $0x49] sm:$0xff]
          %v1231 = vld [vmem:[#allocation2 + $0x51] sm:$0xff]
          %v1232 = vld [vmem:[#allocation2 + $0x59] sm:$0xff]
          %v1233 = vld [vmem:[#allocation2 + $0x61] sm:$0xff]
          %v1234 = vld [vmem:[#allocation2 + $0x69] sm:$0xff]
          %v1235 = vld [vmem:[#allocation2 + $0x71] sm:$0xff]
          %v1236 = vld [vmem:[#allocation2 + $0x79] sm:$0xff]
          %v1237 = vld [vmem:[#allocation2 + $0x81] sm:$0xff]
          %v1238 = vld [vmem:[#allocation2 + $0x89] sm:$0xff]
          %v1239 = vld [vmem:[#allocation2 + $0x91] sm:$0xff]
          %v1240 = vld [vmem:[#allocation2 + $0x99] sm:$0xff]
          %v1241 = vld [vmem:[#allocation2 + $0xa1] sm:$0xff]
          %v1242 = vld [vmem:[#allocation2 + $0xa9] sm:$0xff]
          %v1243 = vld [vmem:[#allocation2 + $0xb1] sm:$0xff]
          %v1244 = vlaneseq
          %v1245 = vshrl.u32 %v1244, 7
          %v1246 = vsub.s32 0, %v1245
          %v1247 = vrot.slane %v1227, %v1246
          %v1248 = vmul.f32 %v1247, %v1228
          %v1249 = vmul.f32 %v1247, %v1229
          %v1250 = vmul.f32 %v1247, %v1230
          %v1251 = vmul.f32 %v1247, %v1231
          %v1252 = vmul.f32 %v1247, %v1232
          %v1253 = vmul.f32 %v1247, %v1233
          %v1254 = vmul.f32 %v1247, %v1234
          %v1255 = vmul.f32 %v1247, %v1235
          %v1256 = vmul.f32 %v1247, %v1236
          %v1257 = vmul.f32 %v1247, %v1237
          %v1258 = vmul.f32 %v1247, %v1238
          %v1259 = vmul.f32 %v1247, %v1239
          %v1260 = vmul.f32 %v1247, %v1240
          %v1261 = vmul.f32 %v1247, %v1241
          %v1262 = vmul.f32 %v1247, %v1242
          %v1263 = vmul.f32 %v1247, %v1243
          %v1264 = vadd.f32 %v1211, %v1248
          %v1265 = vadd.f32 %v1212, %v1249
          %v1266 = vadd.f32 %v1213, %v1250
          %v1267 = vadd.f32 %v1214, %v1251
          %v1268 = vadd.f32 %v1215, %v1252
          %v1269 = vadd.f32 %v1216, %v1253
          %v1270 = vadd.f32 %v1217, %v1254
          %v1271 = vadd.f32 %v1218, %v1255
          %v1272 = vadd.f32 %v1219, %v1256
          %v1273 = vadd.f32 %v1220, %v1257
          %v1274 = vadd.f32 %v1221, %v1258
          %v1275 = vadd.f32 %v1222, %v1259
          %v1276 = vadd.f32 %v1223, %v1260
          %v1277 = vadd.f32 %v1224, %v1261
          %v1278 = vadd.f32 %v1225, %v1262
          %v1279 = vadd.f32 %v1226, %v1263
          %v1280 = vld [vmem:[#allocation9 + $0x8] sm:$0x1]
          %v1281 = vld [vmem:[#allocation2 + $0x38] sm:$0xff]
          %v1282 = vld [vmem:[#allocation2 + $0x40] sm:$0xff]
          %v1283 = vld [vmem:[#allocation2 + $0x48] sm:$0xff]
          %v1284 = vld [vmem:[#allocation2 + $0x50] sm:$0xff]
          %v1285 = vld [vmem:[#allocation2 + $0x58] sm:$0xff]
          %v1286 = vld [vmem:[#allocation2 + $0x60] sm:$0xff]
          %v1287 = vld [vmem:[#allocation2 + $0x68] sm:$0xff]
          %v1288 = vld [vmem:[#allocation2 + $0x70] sm:$0xff]
          %v1289 = vld [vmem:[#allocation2 + $0x78] sm:$0xff]
          %v1290 = vld [vmem:[#allocation2 + $0x80] sm:$0xff]
          %v1291 = vld [vmem:[#allocation2 + $0x88] sm:$0xff]
          %v1292 = vld [vmem:[#allocation2 + $0x90] sm:$0xff]
          %v1293 = vld [vmem:[#allocation2 + $0x98] sm:$0xff]
          %v1294 = vld [vmem:[#allocation2 + $0xa0] sm:$0xff]
          %v1295 = vld [vmem:[#allocation2 + $0xa8] sm:$0xff]
          %v1296 = vld [vmem:[#allocation2 + $0xb0] sm:$0xff]
          %v1297 = vlaneseq
          %v1298 = vshrl.u32 %v1297, 7
          %v1299 = vsub.s32 0, %v1298
          %v1300 = vrot.slane %v1280, %v1299
          %v1301 = vmul.f32 %v1300, %v1281
          %v1302 = vmul.f32 %v1300, %v1282
          %v1303 = vmul.f32 %v1300, %v1283
          %v1304 = vmul.f32 %v1300, %v1284
          %v1305 = vmul.f32 %v1300, %v1285
          %v1306 = vmul.f32 %v1300, %v1286
          %v1307 = vmul.f32 %v1300, %v1287
          %v1308 = vmul.f32 %v1300, %v1288
          %v1309 = vmul.f32 %v1300, %v1289
          %v1310 = vmul.f32 %v1300, %v1290
          %v1311 = vmul.f32 %v1300, %v1291
          %v1312 = vmul.f32 %v1300, %v1292
          %v1313 = vmul.f32 %v1300, %v1293
          %v1314 = vmul.f32 %v1300, %v1294
          %v1315 = vmul.f32 %v1300, %v1295
          %v1316 = vmul.f32 %v1300, %v1296
          %v1317 = vadd.f32 %v1264, %v1301
          %v1318 = vadd.f32 %v1265, %v1302
          %v1319 = vadd.f32 %v1266, %v1303
          %v1320 = vadd.f32 %v1267, %v1304
          %v1321 = vadd.f32 %v1268, %v1305
          %v1322 = vadd.f32 %v1269, %v1306
          %v1323 = vadd.f32 %v1270, %v1307
          %v1324 = vadd.f32 %v1271, %v1308
          %v1325 = vadd.f32 %v1272, %v1309
          %v1326 = vadd.f32 %v1273, %v1310
          %v1327 = vadd.f32 %v1274, %v1311
          %v1328 = vadd.f32 %v1275, %v1312
          %v1329 = vadd.f32 %v1276, %v1313
          %v1330 = vadd.f32 %v1277, %v1314
          %v1331 = vadd.f32 %v1278, %v1315
          %v1332 = vadd.f32 %v1279, %v1316
          %v1333 = vld [vmem:[#allocation9 + $0x9] sm:$0x1]
          %v1334 = vld [vmem:[#allocation2 + $0x37] sm:$0xff]
          %v1335 = vlaneseq
          %v1336 = vshrl.u32 %v1335, 7
          %v1337 = vsub.s32 0, %v1336
          %v1338 = vrot.slane %v1333, %v1337
          %v1339 = vmul.f32 %v1338, %v1334
          %v1340 = vmul.f32 %v1338, %v910
          %v1341 = vmul.f32 %v1338, %v911
          %v1342 = vmul.f32 %v1338, %v912
          %v1343 = vmul.f32 %v1338, %v913
          %v1344 = vmul.f32 %v1338, %v914
          %v1345 = vmul.f32 %v1338, %v915
          %v1346 = vmul.f32 %v1338, %v916
          %v1347 = vmul.f32 %v1338, %v917
          %v1348 = vmul.f32 %v1338, %v918
          %v1349 = vmul.f32 %v1338, %v919
          %v1350 = vmul.f32 %v1338, %v920
          %v1351 = vmul.f32 %v1338, %v921
          %v1352 = vmul.f32 %v1338, %v922
          %v1353 = vmul.f32 %v1338, %v923
          %v1354 = vmul.f32 %v1338, %v924
          %v1355 = vadd.f32 %v1317, %v1339
          %v1356 = vadd.f32 %v1318, %v1340
          %v1357 = vadd.f32 %v1319, %v1341
          %v1358 = vadd.f32 %v1320, %v1342
          %v1359 = vadd.f32 %v1321, %v1343
          %v1360 = vadd.f32 %v1322, %v1344
          %v1361 = vadd.f32 %v1323, %v1345
          %v1362 = vadd.f32 %v1324, %v1346
          %v1363 = vadd.f32 %v1325, %v1347
          %v1364 = vadd.f32 %v1326, %v1348
          %v1365 = vadd.f32 %v1327, %v1349
          %v1366 = vadd.f32 %v1328, %v1350
          %v1367 = vadd.f32 %v1329, %v1351
          %v1368 = vadd.f32 %v1330, %v1352
          %v1369 = vadd.f32 %v1331, %v1353
          %v1370 = vadd.f32 %v1332, %v1354
          %v1371 = vld [vmem:[#allocation9 + $0xa] sm:$0x1]
          %v1372 = vld [vmem:[#allocation2 + $0x36] sm:$0xff]
          %v1373 = vlaneseq
          %v1374 = vshrl.u32 %v1373, 7
          %v1375 = vsub.s32 0, %v1374
          %v1376 = vrot.slane %v1371, %v1375
          %v1377 = vmul.f32 %v1376, %v1372
          %v1378 = vmul.f32 %v1376, %v963
          %v1379 = vmul.f32 %v1376, %v964
          %v1380 = vmul.f32 %v1376, %v965
          %v1381 = vmul.f32 %v1376, %v966
          %v1382 = vmul.f32 %v1376, %v967
          %v1383 = vmul.f32 %v1376, %v968
          %v1384 = vmul.f32 %v1376, %v969
          %v1385 = vmul.f32 %v1376, %v970
          %v1386 = vmul.f32 %v1376, %v971
          %v1387 = vmul.f32 %v1376, %v972
          %v1388 = vmul.f32 %v1376, %v973
          %v1389 = vmul.f32 %v1376, %v974
          %v1390 = vmul.f32 %v1376, %v975
          %v1391 = vmul.f32 %v1376, %v976
          %v1392 = vmul.f32 %v1376, %v977
          %v1393 = vadd.f32 %v1355, %v1377
          %v1394 = vadd.f32 %v1356, %v1378
          %v1395 = vadd.f32 %v1357, %v1379
          %v1396 = vadd.f32 %v1358, %v1380
          %v1397 = vadd.f32 %v1359, %v1381
          %v1398 = vadd.f32 %v1360, %v1382
          %v1399 = vadd.f32 %v1361, %v1383
          %v1400 = vadd.f32 %v1362, %v1384
          %v1401 = vadd.f32 %v1363, %v1385
          %v1402 = vadd.f32 %v1364, %v1386
          %v1403 = vadd.f32 %v1365, %v1387
          %v1404 = vadd.f32 %v1366, %v1388
          %v1405 = vadd.f32 %v1367, %v1389
          %v1406 = vadd.f32 %v1368, %v1390
          %v1407 = vadd.f32 %v1369, %v1391
          %v1408 = vadd.f32 %v1370, %v1392
          %v1409 = vld [vmem:[#allocation9 + $0xb] sm:$0x1]
          %v1410 = vld [vmem:[#allocation2 + $0x35] sm:$0xff]
          %v1411 = vlaneseq
          %v1412 = vshrl.u32 %v1411, 7
          %v1413 = vsub.s32 0, %v1412
          %v1414 = vrot.slane %v1409, %v1413
          %v1415 = vmul.f32 %v1414, %v1410
          %v1416 = vmul.f32 %v1414, %v1016
          %v1417 = vmul.f32 %v1414, %v1017
          %v1418 = vmul.f32 %v1414, %v1018
          %v1419 = vmul.f32 %v1414, %v1019
          %v1420 = vmul.f32 %v1414, %v1020
          %v1421 = vmul.f32 %v1414, %v1021
          %v1422 = vmul.f32 %v1414, %v1022
          %v1423 = vmul.f32 %v1414, %v1023
          %v1424 = vmul.f32 %v1414, %v1024
          %v1425 = vmul.f32 %v1414, %v1025
          %v1426 = vmul.f32 %v1414, %v1026
          %v1427 = vmul.f32 %v1414, %v1027
          %v1428 = vmul.f32 %v1414, %v1028
          %v1429 = vmul.f32 %v1414, %v1029
          %v1430 = vmul.f32 %v1414, %v1030
          %v1431 = vadd.f32 %v1393, %v1415
          %v1432 = vadd.f32 %v1394, %v1416
          %v1433 = vadd.f32 %v1395, %v1417
          %v1434 = vadd.f32 %v1396, %v1418
          %v1435 = vadd.f32 %v1397, %v1419
          %v1436 = vadd.f32 %v1398, %v1420
          %v1437 = vadd.f32 %v1399, %v1421
          %v1438 = vadd.f32 %v1400, %v1422
          %v1439 = vadd.f32 %v1401, %v1423
          %v1440 = vadd.f32 %v1402, %v1424
          %v1441 = vadd.f32 %v1403, %v1425
          %v1442 = vadd.f32 %v1404, %v1426
          %v1443 = vadd.f32 %v1405, %v1427
          %v1444 = vadd.f32 %v1406, %v1428
          %v1445 = vadd.f32 %v1407, %v1429
          %v1446 = vadd.f32 %v1408, %v1430
          %v1447 = vld [vmem:[#allocation9 + $0xc] sm:$0x1]
          %v1448 = vld [vmem:[#allocation2 + $0x34] sm:$0xff]
          %v1449 = vlaneseq
          %v1450 = vshrl.u32 %v1449, 7
          %v1451 = vsub.s32 0, %v1450
          %v1452 = vrot.slane %v1447, %v1451
          %v1453 = vmul.f32 %v1452, %v1448
          %v1454 = vmul.f32 %v1452, %v1069
          %v1455 = vmul.f32 %v1452, %v1070
          %v1456 = vmul.f32 %v1452, %v1071
          %v1457 = vmul.f32 %v1452, %v1072
          %v1458 = vmul.f32 %v1452, %v1073
          %v1459 = vmul.f32 %v1452, %v1074
          %v1460 = vmul.f32 %v1452, %v1075
          %v1461 = vmul.f32 %v1452, %v1076
          %v1462 = vmul.f32 %v1452, %v1077
          %v1463 = vmul.f32 %v1452, %v1078
          %v1464 = vmul.f32 %v1452, %v1079
          %v1465 = vmul.f32 %v1452, %v1080
          %v1466 = vmul.f32 %v1452, %v1081
          %v1467 = vmul.f32 %v1452, %v1082
          %v1468 = vmul.f32 %v1452, %v1083
          %v1469 = vadd.f32 %v1431, %v1453
          %v1470 = vadd.f32 %v1432, %v1454
          %v1471 = vadd.f32 %v1433, %v1455
          %v1472 = vadd.f32 %v1434, %v1456
          %v1473 = vadd.f32 %v1435, %v1457
          %v1474 = vadd.f32 %v1436, %v1458
          %v1475 = vadd.f32 %v1437, %v1459
          %v1476 = vadd.f32 %v1438, %v1460
          %v1477 = vadd.f32 %v1439, %v1461
          %v1478 = vadd.f32 %v1440, %v1462
          %v1479 = vadd.f32 %v1441, %v1463
          %v1480 = vadd.f32 %v1442, %v1464
          %v1481 = vadd.f32 %v1443, %v1465
          %v1482 = vadd.f32 %v1444, %v1466
          %v1483 = vadd.f32 %v1445, %v1467
          %v1484 = vadd.f32 %v1446, %v1468
          %v1485 = vld [vmem:[#allocation9 + $0xd] sm:$0x1]
          %v1486 = vld [vmem:[#allocation2 + $0x33] sm:$0xff]
          %v1487 = vlaneseq
          %v1488 = vshrl.u32 %v1487, 7
          %v1489 = vsub.s32 0, %v1488
          %v1490 = vrot.slane %v1485, %v1489
          %v1491 = vmul.f32 %v1490, %v1486
          %v1492 = vmul.f32 %v1490, %v1122
          %v1493 = vmul.f32 %v1490, %v1123
          %v1494 = vmul.f32 %v1490, %v1124
          %v1495 = vmul.f32 %v1490, %v1125
          %v1496 = vmul.f32 %v1490, %v1126
          %v1497 = vmul.f32 %v1490, %v1127
          %v1498 = vmul.f32 %v1490, %v1128
          %v1499 = vmul.f32 %v1490, %v1129
          %v1500 = vmul.f32 %v1490, %v1130
          %v1501 = vmul.f32 %v1490, %v1131
          %v1502 = vmul.f32 %v1490, %v1132
          %v1503 = vmul.f32 %v1490, %v1133
          %v1504 = vmul.f32 %v1490, %v1134
          %v1505 = vmul.f32 %v1490, %v1135
          %v1506 = vmul.f32 %v1490, %v1136
          %v1507 = vadd.f32 %v1469, %v1491
          %v1508 = vadd.f32 %v1470, %v1492
          %v1509 = vadd.f32 %v1471, %v1493
          %v1510 = vadd.f32 %v1472, %v1494
          %v1511 = vadd.f32 %v1473, %v1495
          %v1512 = vadd.f32 %v1474, %v1496
          %v1513 = vadd.f32 %v1475, %v1497
          %v1514 = vadd.f32 %v1476, %v1498
          %v1515 = vadd.f32 %v1477, %v1499
          %v1516 = vadd.f32 %v1478, %v1500
          %v1517 = vadd.f32 %v1479, %v1501
          %v1518 = vadd.f32 %v1480, %v1502
          %v1519 = vadd.f32 %v1481, %v1503
          %v1520 = vadd.f32 %v1482, %v1504
          %v1521 = vadd.f32 %v1483, %v1505
          %v1522 = vadd.f32 %v1484, %v1506
          %v1523 = vld [vmem:[#allocation9 + $0xe] sm:$0x1]
          %v1524 = vld [vmem:[#allocation2 + $0x32] sm:$0xff]
          %v1525 = vlaneseq
          %v1526 = vshrl.u32 %v1525, 7
          %v1527 = vsub.s32 0, %v1526
          %v1528 = vrot.slane %v1523, %v1527
          %v1529 = vmul.f32 %v1528, %v1524
          %v1530 = vmul.f32 %v1528, %v1175
          %v1531 = vmul.f32 %v1528, %v1176
          %v1532 = vmul.f32 %v1528, %v1177
          %v1533 = vmul.f32 %v1528, %v1178
          %v1534 = vmul.f32 %v1528, %v1179
          %v1535 = vmul.f32 %v1528, %v1180
          %v1536 = vmul.f32 %v1528, %v1181
          %v1537 = vmul.f32 %v1528, %v1182
          %v1538 = vmul.f32 %v1528, %v1183
          %v1539 = vmul.f32 %v1528, %v1184
          %v1540 = vmul.f32 %v1528, %v1185
          %v1541 = vmul.f32 %v1528, %v1186
          %v1542 = vmul.f32 %v1528, %v1187
          %v1543 = vmul.f32 %v1528, %v1188
          %v1544 = vmul.f32 %v1528, %v1189
          %v1545 = vadd.f32 %v1507, %v1529
          %v1546 = vadd.f32 %v1508, %v1530
          %v1547 = vadd.f32 %v1509, %v1531
          %v1548 = vadd.f32 %v1510, %v1532
          %v1549 = vadd.f32 %v1511, %v1533
          %v1550 = vadd.f32 %v1512, %v1534
          %v1551 = vadd.f32 %v1513, %v1535
          %v1552 = vadd.f32 %v1514, %v1536
          %v1553 = vadd.f32 %v1515, %v1537
          %v1554 = vadd.f32 %v1516, %v1538
          %v1555 = vadd.f32 %v1517, %v1539
          %v1556 = vadd.f32 %v1518, %v1540
          %v1557 = vadd.f32 %v1519, %v1541
          %v1558 = vadd.f32 %v1520, %v1542
          %v1559 = vadd.f32 %v1521, %v1543
          %v1560 = vadd.f32 %v1522, %v1544
          %v1561 = vld [vmem:[#allocation9 + $0xf] sm:$0x1]
          %v1562 = vld [vmem:[#allocation2 + $0x31] sm:$0xff]
          %v1563 = vlaneseq
          %v1564 = vshrl.u32 %v1563, 7
          %v1565 = vsub.s32 0, %v1564
          %v1566 = vrot.slane %v1561, %v1565
          %v1567 = vmul.f32 %v1566, %v1562
          %v1568 = vmul.f32 %v1566, %v1228
          %v1569 = vmul.f32 %v1566, %v1229
          %v1570 = vmul.f32 %v1566, %v1230
          %v1571 = vmul.f32 %v1566, %v1231
          %v1572 = vmul.f32 %v1566, %v1232
          %v1573 = vmul.f32 %v1566, %v1233
          %v1574 = vmul.f32 %v1566, %v1234
          %v1575 = vmul.f32 %v1566, %v1235
          %v1576 = vmul.f32 %v1566, %v1236
          %v1577 = vmul.f32 %v1566, %v1237
          %v1578 = vmul.f32 %v1566, %v1238
          %v1579 = vmul.f32 %v1566, %v1239
          %v1580 = vmul.f32 %v1566, %v1240
          %v1581 = vmul.f32 %v1566, %v1241
          %v1582 = vmul.f32 %v1566, %v1242
          %v1583 = vadd.f32 %v1545, %v1567
          %v1584 = vadd.f32 %v1546, %v1568
          %v1585 = vadd.f32 %v1547, %v1569
          %v1586 = vadd.f32 %v1548, %v1570
          %v1587 = vadd.f32 %v1549, %v1571
          %v1588 = vadd.f32 %v1550, %v1572
          %v1589 = vadd.f32 %v1551, %v1573
          %v1590 = vadd.f32 %v1552, %v1574
          %v1591 = vadd.f32 %v1553, %v1575
          %v1592 = vadd.f32 %v1554, %v1576
          %v1593 = vadd.f32 %v1555, %v1577
          %v1594 = vadd.f32 %v1556, %v1578
          %v1595 = vadd.f32 %v1557, %v1579
          %v1596 = vadd.f32 %v1558, %v1580
          %v1597 = vadd.f32 %v1559, %v1581
          %v1598 = vadd.f32 %v1560, %v1582
          %v1599 = vld [vmem:[#allocation9 + $0x10] sm:$0x1]
          %v1600 = vld [vmem:[#allocation2 + $0x30] sm:$0xff]
          %v1601 = vlaneseq
          %v1602 = vshrl.u32 %v1601, 7
          %v1603 = vsub.s32 0, %v1602
          %v1604 = vrot.slane %v1599, %v1603
          %v1605 = vmul.f32 %v1604, %v1600
          %v1606 = vmul.f32 %v1604, %v1281
          %v1607 = vmul.f32 %v1604, %v1282
          %v1608 = vmul.f32 %v1604, %v1283
          %v1609 = vmul.f32 %v1604, %v1284
          %v1610 = vmul.f32 %v1604, %v1285
          %v1611 = vmul.f32 %v1604, %v1286
          %v1612 = vmul.f32 %v1604, %v1287
          %v1613 = vmul.f32 %v1604, %v1288
          %v1614 = vmul.f32 %v1604, %v1289
          %v1615 = vmul.f32 %v1604, %v1290
          %v1616 = vmul.f32 %v1604, %v1291
          %v1617 = vmul.f32 %v1604, %v1292
          %v1618 = vmul.f32 %v1604, %v1293
          %v1619 = vmul.f32 %v1604, %v1294
          %v1620 = vmul.f32 %v1604, %v1295
          %v1621 = vadd.f32 %v1583, %v1605
          %v1622 = vadd.f32 %v1584, %v1606
          %v1623 = vadd.f32 %v1585, %v1607
          %v1624 = vadd.f32 %v1586, %v1608
          %v1625 = vadd.f32 %v1587, %v1609
          %v1626 = vadd.f32 %v1588, %v1610
          %v1627 = vadd.f32 %v1589, %v1611
          %v1628 = vadd.f32 %v1590, %v1612
          %v1629 = vadd.f32 %v1591, %v1613
          %v1630 = vadd.f32 %v1592, %v1614
          %v1631 = vadd.f32 %v1593, %v1615
          %v1632 = vadd.f32 %v1594, %v1616
          %v1633 = vadd.f32 %v1595, %v1617
          %v1634 = vadd.f32 %v1596, %v1618
          %v1635 = vadd.f32 %v1597, %v1619
          %v1636 = vadd.f32 %v1598, %v1620
          %v1637 = vld [vmem:[#allocation9 + $0x11] sm:$0x1]
          %v1638 = vld [vmem:[#allocation2 + $0x2f] sm:$0xff]
          %v1639 = vlaneseq
          %v1640 = vshrl.u32 %v1639, 7
          %v1641 = vsub.s32 0, %v1640
          %v1642 = vrot.slane %v1637, %v1641
          %v1643 = vmul.f32 %v1642, %v1638
          %v1644 = vmul.f32 %v1642, %v1334
          %v1645 = vmul.f32 %v1642, %v910
          %v1646 = vmul.f32 %v1642, %v911
          %v1647 = vmul.f32 %v1642, %v912
          %v1648 = vmul.f32 %v1642, %v913
          %v1649 = vmul.f32 %v1642, %v914
          %v1650 = vmul.f32 %v1642, %v915
          %v1651 = vmul.f32 %v1642, %v916
          %v1652 = vmul.f32 %v1642, %v917
          %v1653 = vmul.f32 %v1642, %v918
          %v1654 = vmul.f32 %v1642, %v919
          %v1655 = vmul.f32 %v1642, %v920
          %v1656 = vmul.f32 %v1642, %v921
          %v1657 = vmul.f32 %v1642, %v922
          %v1658 = vmul.f32 %v1642, %v923
          %v1659 = vadd.f32 %v1621, %v1643
          %v1660 = vadd.f32 %v1622, %v1644
          %v1661 = vadd.f32 %v1623, %v1645
          %v1662 = vadd.f32 %v1624, %v1646
          %v1663 = vadd.f32 %v1625, %v1647
          %v1664 = vadd.f32 %v1626, %v1648
          %v1665 = vadd.f32 %v1627, %v1649
          %v1666 = vadd.f32 %v1628, %v1650
          %v1667 = vadd.f32 %v1629, %v1651
          %v1668 = vadd.f32 %v1630, %v1652
          %v1669 = vadd.f32 %v1631, %v1653
          %v1670 = vadd.f32 %v1632, %v1654
          %v1671 = vadd.f32 %v1633, %v1655
          %v1672 = vadd.f32 %v1634, %v1656
          %v1673 = vadd.f32 %v1635, %v1657
          %v1674 = vadd.f32 %v1636, %v1658
          %v1675 = vld [vmem:[#allocation9 + $0x12] sm:$0x1]
          %v1676 = vld [vmem:[#allocation2 + $0x2e] sm:$0xff]
          %v1677 = vlaneseq
          %v1678 = vshrl.u32 %v1677, 7
          %v1679 = vsub.s32 0, %v1678
          %v1680 = vrot.slane %v1675, %v1679
          %v1681 = vmul.f32 %v1680, %v1676
          %v1682 = vmul.f32 %v1680, %v1372
          %v1683 = vmul.f32 %v1680, %v963
          %v1684 = vmul.f32 %v1680, %v964
          %v1685 = vmul.f32 %v1680, %v965
          %v1686 = vmul.f32 %v1680, %v966
          %v1687 = vmul.f32 %v1680, %v967
          %v1688 = vmul.f32 %v1680, %v968
          %v1689 = vmul.f32 %v1680, %v969
          %v1690 = vmul.f32 %v1680, %v970
          %v1691 = vmul.f32 %v1680, %v971
          %v1692 = vmul.f32 %v1680, %v972
          %v1693 = vmul.f32 %v1680, %v973
          %v1694 = vmul.f32 %v1680, %v974
          %v1695 = vmul.f32 %v1680, %v975
          %v1696 = vmul.f32 %v1680, %v976
          %v1697 = vadd.f32 %v1659, %v1681
          %v1698 = vadd.f32 %v1660, %v1682
          %v1699 = vadd.f32 %v1661, %v1683
          %v1700 = vadd.f32 %v1662, %v1684
          %v1701 = vadd.f32 %v1663, %v1685
          %v1702 = vadd.f32 %v1664, %v1686
          %v1703 = vadd.f32 %v1665, %v1687
          %v1704 = vadd.f32 %v1666, %v1688
          %v1705 = vadd.f32 %v1667, %v1689
          %v1706 = vadd.f32 %v1668, %v1690
          %v1707 = vadd.f32 %v1669, %v1691
          %v1708 = vadd.f32 %v1670, %v1692
          %v1709 = vadd.f32 %v1671, %v1693
          %v1710 = vadd.f32 %v1672, %v1694
          %v1711 = vadd.f32 %v1673, %v1695
          %v1712 = vadd.f32 %v1674, %v1696
          %v1713 = vld [vmem:[#allocation9 + $0x13] sm:$0x1]
          %v1714 = vld [vmem:[#allocation2 + $0x2d] sm:$0xff]
          %v1715 = vlaneseq
          %v1716 = vshrl.u32 %v1715, 7
          %v1717 = vsub.s32 0, %v1716
          %v1718 = vrot.slane %v1713, %v1717
          %v1719 = vmul.f32 %v1718, %v1714
          %v1720 = vmul.f32 %v1718, %v1410
          %v1721 = vmul.f32 %v1718, %v1016
          %v1722 = vmul.f32 %v1718, %v1017
          %v1723 = vmul.f32 %v1718, %v1018
          %v1724 = vmul.f32 %v1718, %v1019
          %v1725 = vmul.f32 %v1718, %v1020
          %v1726 = vmul.f32 %v1718, %v1021
          %v1727 = vmul.f32 %v1718, %v1022
          %v1728 = vmul.f32 %v1718, %v1023
          %v1729 = vmul.f32 %v1718, %v1024
          %v1730 = vmul.f32 %v1718, %v1025
          %v1731 = vmul.f32 %v1718, %v1026
          %v1732 = vmul.f32 %v1718, %v1027
          %v1733 = vmul.f32 %v1718, %v1028
          %v1734 = vmul.f32 %v1718, %v1029
          %v1735 = vadd.f32 %v1697, %v1719
          %v1736 = vadd.f32 %v1698, %v1720
          %v1737 = vadd.f32 %v1699, %v1721
          %v1738 = vadd.f32 %v1700, %v1722
          %v1739 = vadd.f32 %v1701, %v1723
          %v1740 = vadd.f32 %v1702, %v1724
          %v1741 = vadd.f32 %v1703, %v1725
          %v1742 = vadd.f32 %v1704, %v1726
          %v1743 = vadd.f32 %v1705, %v1727
          %v1744 = vadd.f32 %v1706, %v1728
          %v1745 = vadd.f32 %v1707, %v1729
          %v1746 = vadd.f32 %v1708, %v1730
          %v1747 = vadd.f32 %v1709, %v1731
          %v1748 = vadd.f32 %v1710, %v1732
          %v1749 = vadd.f32 %v1711, %v1733
          %v1750 = vadd.f32 %v1712, %v1734
          %v1751 = vld [vmem:[#allocation9 + $0x14] sm:$0x1]
          %v1752 = vld [vmem:[#allocation2 + $0x2c] sm:$0xff]
          %v1753 = vlaneseq
          %v1754 = vshrl.u32 %v1753, 7
          %v1755 = vsub.s32 0, %v1754
          %v1756 = vrot.slane %v1751, %v1755
          %v1757 = vmul.f32 %v1756, %v1752
          %v1758 = vmul.f32 %v1756, %v1448
          %v1759 = vmul.f32 %v1756, %v1069
          %v1760 = vmul.f32 %v1756, %v1070
          %v1761 = vmul.f32 %v1756, %v1071
          %v1762 = vmul.f32 %v1756, %v1072
          %v1763 = vmul.f32 %v1756, %v1073
          %v1764 = vmul.f32 %v1756, %v1074
          %v1765 = vmul.f32 %v1756, %v1075
          %v1766 = vmul.f32 %v1756, %v1076
          %v1767 = vmul.f32 %v1756, %v1077
          %v1768 = vmul.f32 %v1756, %v1078
          %v1769 = vmul.f32 %v1756, %v1079
          %v1770 = vmul.f32 %v1756, %v1080
          %v1771 = vmul.f32 %v1756, %v1081
          %v1772 = vmul.f32 %v1756, %v1082
          %v1773 = vadd.f32 %v1735, %v1757
          %v1774 = vadd.f32 %v1736, %v1758
          %v1775 = vadd.f32 %v1737, %v1759
          %v1776 = vadd.f32 %v1738, %v1760
          %v1777 = vadd.f32 %v1739, %v1761
          %v1778 = vadd.f32 %v1740, %v1762
          %v1779 = vadd.f32 %v1741, %v1763
          %v1780 = vadd.f32 %v1742, %v1764
          %v1781 = vadd.f32 %v1743, %v1765
          %v1782 = vadd.f32 %v1744, %v1766
          %v1783 = vadd.f32 %v1745, %v1767
          %v1784 = vadd.f32 %v1746, %v1768
          %v1785 = vadd.f32 %v1747, %v1769
          %v1786 = vadd.f32 %v1748, %v1770
          %v1787 = vadd.f32 %v1749, %v1771
          %v1788 = vadd.f32 %v1750, %v1772
          %v1789 = vld [vmem:[#allocation9 + $0x15] sm:$0x1]
          %v1790 = vld [vmem:[#allocation2 + $0x2b] sm:$0xff]
          %v1791 = vlaneseq
          %v1792 = vshrl.u32 %v1791, 7
          %v1793 = vsub.s32 0, %v1792
          %v1794 = vrot.slane %v1789, %v1793
          %v1795 = vmul.f32 %v1794, %v1790
          %v1796 = vmul.f32 %v1794, %v1486
          %v1797 = vmul.f32 %v1794, %v1122
          %v1798 = vmul.f32 %v1794, %v1123
          %v1799 = vmul.f32 %v1794, %v1124
          %v1800 = vmul.f32 %v1794, %v1125
          %v1801 = vmul.f32 %v1794, %v1126
          %v1802 = vmul.f32 %v1794, %v1127
          %v1803 = vmul.f32 %v1794, %v1128
          %v1804 = vmul.f32 %v1794, %v1129
          %v1805 = vmul.f32 %v1794, %v1130
          %v1806 = vmul.f32 %v1794, %v1131
          %v1807 = vmul.f32 %v1794, %v1132
          %v1808 = vmul.f32 %v1794, %v1133
          %v1809 = vmul.f32 %v1794, %v1134
          %v1810 = vmul.f32 %v1794, %v1135
          %v1811 = vadd.f32 %v1773, %v1795
          %v1812 = vadd.f32 %v1774, %v1796
          %v1813 = vadd.f32 %v1775, %v1797
          %v1814 = vadd.f32 %v1776, %v1798
          %v1815 = vadd.f32 %v1777, %v1799
          %v1816 = vadd.f32 %v1778, %v1800
          %v1817 = vadd.f32 %v1779, %v1801
          %v1818 = vadd.f32 %v1780, %v1802
          %v1819 = vadd.f32 %v1781, %v1803
          %v1820 = vadd.f32 %v1782, %v1804
          %v1821 = vadd.f32 %v1783, %v1805
          %v1822 = vadd.f32 %v1784, %v1806
          %v1823 = vadd.f32 %v1785, %v1807
          %v1824 = vadd.f32 %v1786, %v1808
          %v1825 = vadd.f32 %v1787, %v1809
          %v1826 = vadd.f32 %v1788, %v1810
          %v1827 = vld [vmem:[#allocation9 + $0x16] sm:$0x1]
          %v1828 = vld [vmem:[#allocation2 + $0x2a] sm:$0xff]
          %v1829 = vlaneseq
          %v1830 = vshrl.u32 %v1829, 7
          %v1831 = vsub.s32 0, %v1830
          %v1832 = vrot.slane %v1827, %v1831
          %v1833 = vmul.f32 %v1832, %v1828
          %v1834 = vmul.f32 %v1832, %v1524
          %v1835 = vmul.f32 %v1832, %v1175
          %v1836 = vmul.f32 %v1832, %v1176
          %v1837 = vmul.f32 %v1832, %v1177
          %v1838 = vmul.f32 %v1832, %v1178
          %v1839 = vmul.f32 %v1832, %v1179
          %v1840 = vmul.f32 %v1832, %v1180
          %v1841 = vmul.f32 %v1832, %v1181
          %v1842 = vmul.f32 %v1832, %v1182
          %v1843 = vmul.f32 %v1832, %v1183
          %v1844 = vmul.f32 %v1832, %v1184
          %v1845 = vmul.f32 %v1832, %v1185
          %v1846 = vmul.f32 %v1832, %v1186
          %v1847 = vmul.f32 %v1832, %v1187
          %v1848 = vmul.f32 %v1832, %v1188
          %v1849 = vadd.f32 %v1811, %v1833
          %v1850 = vadd.f32 %v1812, %v1834
          %v1851 = vadd.f32 %v1813, %v1835
          %v1852 = vadd.f32 %v1814, %v1836
          %v1853 = vadd.f32 %v1815, %v1837
          %v1854 = vadd.f32 %v1816, %v1838
          %v1855 = vadd.f32 %v1817, %v1839
          %v1856 = vadd.f32 %v1818, %v1840
          %v1857 = vadd.f32 %v1819, %v1841
          %v1858 = vadd.f32 %v1820, %v1842
          %v1859 = vadd.f32 %v1821, %v1843
          %v1860 = vadd.f32 %v1822, %v1844
          %v1861 = vadd.f32 %v1823, %v1845
          %v1862 = vadd.f32 %v1824, %v1846
          %v1863 = vadd.f32 %v1825, %v1847
          %v1864 = vadd.f32 %v1826, %v1848
          %v1865 = vld [vmem:[#allocation9 + $0x17] sm:$0x1]
          %v1866 = vld [vmem:[#allocation2 + $0x29] sm:$0xff]
          %v1867 = vlaneseq
          %v1868 = vshrl.u32 %v1867, 7
          %v1869 = vsub.s32 0, %v1868
          %v1870 = vrot.slane %v1865, %v1869
          %v1871 = vmul.f32 %v1870, %v1866
          %v1872 = vmul.f32 %v1870, %v1562
          %v1873 = vmul.f32 %v1870, %v1228
          %v1874 = vmul.f32 %v1870, %v1229
          %v1875 = vmul.f32 %v1870, %v1230
          %v1876 = vmul.f32 %v1870, %v1231
          %v1877 = vmul.f32 %v1870, %v1232
          %v1878 = vmul.f32 %v1870, %v1233
          %v1879 = vmul.f32 %v1870, %v1234
          %v1880 = vmul.f32 %v1870, %v1235
          %v1881 = vmul.f32 %v1870, %v1236
          %v1882 = vmul.f32 %v1870, %v1237
          %v1883 = vmul.f32 %v1870, %v1238
          %v1884 = vmul.f32 %v1870, %v1239
          %v1885 = vmul.f32 %v1870, %v1240
          %v1886 = vmul.f32 %v1870, %v1241
          %v1887 = vadd.f32 %v1849, %v1871
          %v1888 = vadd.f32 %v1850, %v1872
          %v1889 = vadd.f32 %v1851, %v1873
          %v1890 = vadd.f32 %v1852, %v1874
          %v1891 = vadd.f32 %v1853, %v1875
          %v1892 = vadd.f32 %v1854, %v1876
          %v1893 = vadd.f32 %v1855, %v1877
          %v1894 = vadd.f32 %v1856, %v1878
          %v1895 = vadd.f32 %v1857, %v1879
          %v1896 = vadd.f32 %v1858, %v1880
          %v1897 = vadd.f32 %v1859, %v1881
          %v1898 = vadd.f32 %v1860, %v1882
          %v1899 = vadd.f32 %v1861, %v1883
          %v1900 = vadd.f32 %v1862, %v1884
          %v1901 = vadd.f32 %v1863, %v1885
          %v1902 = vadd.f32 %v1864, %v1886
          %v1903 = vld [vmem:[#allocation9 + $0x18] sm:$0x1]
          %v1904 = vld [vmem:[#allocation2 + $0x28] sm:$0xff]
          %v1905 = vlaneseq
          %v1906 = vshrl.u32 %v1905, 7
          %v1907 = vsub.s32 0, %v1906
          %v1908 = vrot.slane %v1903, %v1907
          %v1909 = vmul.f32 %v1908, %v1904
          %v1910 = vmul.f32 %v1908, %v1600
          %v1911 = vmul.f32 %v1908, %v1281
          %v1912 = vmul.f32 %v1908, %v1282
          %v1913 = vmul.f32 %v1908, %v1283
          %v1914 = vmul.f32 %v1908, %v1284
          %v1915 = vmul.f32 %v1908, %v1285
          %v1916 = vmul.f32 %v1908, %v1286
          %v1917 = vmul.f32 %v1908, %v1287
          %v1918 = vmul.f32 %v1908, %v1288
          %v1919 = vmul.f32 %v1908, %v1289
          %v1920 = vmul.f32 %v1908, %v1290
          %v1921 = vmul.f32 %v1908, %v1291
          %v1922 = vmul.f32 %v1908, %v1292
          %v1923 = vmul.f32 %v1908, %v1293
          %v1924 = vmul.f32 %v1908, %v1294
          %v1925 = vadd.f32 %v1887, %v1909
          %v1926 = vadd.f32 %v1888, %v1910
          %v1927 = vadd.f32 %v1889, %v1911
          %v1928 = vadd.f32 %v1890, %v1912
          %v1929 = vadd.f32 %v1891, %v1913
          %v1930 = vadd.f32 %v1892, %v1914
          %v1931 = vadd.f32 %v1893, %v1915
          %v1932 = vadd.f32 %v1894, %v1916
          %v1933 = vadd.f32 %v1895, %v1917
          %v1934 = vadd.f32 %v1896, %v1918
          %v1935 = vadd.f32 %v1897, %v1919
          %v1936 = vadd.f32 %v1898, %v1920
          %v1937 = vadd.f32 %v1899, %v1921
          %v1938 = vadd.f32 %v1900, %v1922
          %v1939 = vadd.f32 %v1901, %v1923
          %v1940 = vadd.f32 %v1902, %v1924
          %v1941 = vld [vmem:[#allocation9 + $0x19] sm:$0x1]
          %v1942 = vld [vmem:[#allocation2 + $0x27] sm:$0xff]
          %v1943 = vlaneseq
          %v1944 = vshrl.u32 %v1943, 7
          %v1945 = vsub.s32 0, %v1944
          %v1946 = vrot.slane %v1941, %v1945
          %v1947 = vmul.f32 %v1946, %v1942
          %v1948 = vmul.f32 %v1946, %v1638
          %v1949 = vmul.f32 %v1946, %v1334
          %v1950 = vmul.f32 %v1946, %v910
          %v1951 = vmul.f32 %v1946, %v911
          %v1952 = vmul.f32 %v1946, %v912
          %v1953 = vmul.f32 %v1946, %v913
          %v1954 = vmul.f32 %v1946, %v914
          %v1955 = vmul.f32 %v1946, %v915
          %v1956 = vmul.f32 %v1946, %v916
          %v1957 = vmul.f32 %v1946, %v917
          %v1958 = vmul.f32 %v1946, %v918
          %v1959 = vmul.f32 %v1946, %v919
          %v1960 = vmul.f32 %v1946, %v920
          %v1961 = vmul.f32 %v1946, %v921
          %v1962 = vmul.f32 %v1946, %v922
          %v1963 = vadd.f32 %v1925, %v1947
          %v1964 = vadd.f32 %v1926, %v1948
          %v1965 = vadd.f32 %v1927, %v1949
          %v1966 = vadd.f32 %v1928, %v1950
          %v1967 = vadd.f32 %v1929, %v1951
          %v1968 = vadd.f32 %v1930, %v1952
          %v1969 = vadd.f32 %v1931, %v1953
          %v1970 = vadd.f32 %v1932, %v1954
          %v1971 = vadd.f32 %v1933, %v1955
          %v1972 = vadd.f32 %v1934, %v1956
          %v1973 = vadd.f32 %v1935, %v1957
          %v1974 = vadd.f32 %v1936, %v1958
          %v1975 = vadd.f32 %v1937, %v1959
          %v1976 = vadd.f32 %v1938, %v1960
          %v1977 = vadd.f32 %v1939, %v1961
          %v1978 = vadd.f32 %v1940, %v1962
          %v1979 = vld [vmem:[#allocation9 + $0x1a] sm:$0x1]
          %v1980 = vld [vmem:[#allocation2 + $0x26] sm:$0xff]
          %v1981 = vlaneseq
          %v1982 = vshrl.u32 %v1981, 7
          %v1983 = vsub.s32 0, %v1982
          %v1984 = vrot.slane %v1979, %v1983
          %v1985 = vmul.f32 %v1984, %v1980
          %v1986 = vmul.f32 %v1984, %v1676
          %v1987 = vmul.f32 %v1984, %v1372
          %v1988 = vmul.f32 %v1984, %v963
          %v1989 = vmul.f32 %v1984, %v964
          %v1990 = vmul.f32 %v1984, %v965
          %v1991 = vmul.f32 %v1984, %v966
          %v1992 = vmul.f32 %v1984, %v967
          %v1993 = vmul.f32 %v1984, %v968
          %v1994 = vmul.f32 %v1984, %v969
          %v1995 = vmul.f32 %v1984, %v970
          %v1996 = vmul.f32 %v1984, %v971
          %v1997 = vmul.f32 %v1984, %v972
          %v1998 = vmul.f32 %v1984, %v973
          %v1999 = vmul.f32 %v1984, %v974
          %v2000 = vmul.f32 %v1984, %v975
          %v2001 = vadd.f32 %v1963, %v1985
          %v2002 = vadd.f32 %v1964, %v1986
          %v2003 = vadd.f32 %v1965, %v1987
          %v2004 = vadd.f32 %v1966, %v1988
          %v2005 = vadd.f32 %v1967, %v1989
          %v2006 = vadd.f32 %v1968, %v1990
          %v2007 = vadd.f32 %v1969, %v1991
          %v2008 = vadd.f32 %v1970, %v1992
          %v2009 = vadd.f32 %v1971, %v1993
          %v2010 = vadd.f32 %v1972, %v1994
          %v2011 = vadd.f32 %v1973, %v1995
          %v2012 = vadd.f32 %v1974, %v1996
          %v2013 = vadd.f32 %v1975, %v1997
          %v2014 = vadd.f32 %v1976, %v1998
          %v2015 = vadd.f32 %v1977, %v1999
          %v2016 = vadd.f32 %v1978, %v2000
          %v2017 = vld [vmem:[#allocation9 + $0x1b] sm:$0x1]
          %v2018 = vld [vmem:[#allocation2 + $0x25] sm:$0xff]
          %v2019 = vlaneseq
          %v2020 = vshrl.u32 %v2019, 7
          %v2021 = vsub.s32 0, %v2020
          %v2022 = vrot.slane %v2017, %v2021
          %v2023 = vmul.f32 %v2022, %v2018
          %v2024 = vmul.f32 %v2022, %v1714
          %v2025 = vmul.f32 %v2022, %v1410
          %v2026 = vmul.f32 %v2022, %v1016
          %v2027 = vmul.f32 %v2022, %v1017
          %v2028 = vmul.f32 %v2022, %v1018
          %v2029 = vmul.f32 %v2022, %v1019
          %v2030 = vmul.f32 %v2022, %v1020
          %v2031 = vmul.f32 %v2022, %v1021
          %v2032 = vmul.f32 %v2022, %v1022
          %v2033 = vmul.f32 %v2022, %v1023
          %v2034 = vmul.f32 %v2022, %v1024
          %v2035 = vmul.f32 %v2022, %v1025
          %v2036 = vmul.f32 %v2022, %v1026
          %v2037 = vmul.f32 %v2022, %v1027
          %v2038 = vmul.f32 %v2022, %v1028
          %v2039 = vadd.f32 %v2001, %v2023
          %v2040 = vadd.f32 %v2002, %v2024
          %v2041 = vadd.f32 %v2003, %v2025
          %v2042 = vadd.f32 %v2004, %v2026
          %v2043 = vadd.f32 %v2005, %v2027
          %v2044 = vadd.f32 %v2006, %v2028
          %v2045 = vadd.f32 %v2007, %v2029
          %v2046 = vadd.f32 %v2008, %v2030
          %v2047 = vadd.f32 %v2009, %v2031
          %v2048 = vadd.f32 %v2010, %v2032
          %v2049 = vadd.f32 %v2011, %v2033
          %v2050 = vadd.f32 %v2012, %v2034
          %v2051 = vadd.f32 %v2013, %v2035
          %v2052 = vadd.f32 %v2014, %v2036
          %v2053 = vadd.f32 %v2015, %v2037
          %v2054 = vadd.f32 %v2016, %v2038
          %v2055 = vld [vmem:[#allocation9 + $0x1c] sm:$0x1]
          %v2056 = vld [vmem:[#allocation2 + $0x24] sm:$0xff]
          %v2057 = vlaneseq
          %v2058 = vshrl.u32 %v2057, 7
          %v2059 = vsub.s32 0, %v2058
          %v2060 = vrot.slane %v2055, %v2059
          %v2061 = vmul.f32 %v2060, %v2056
          %v2062 = vmul.f32 %v2060, %v1752
          %v2063 = vmul.f32 %v2060, %v1448
          %v2064 = vmul.f32 %v2060, %v1069
          %v2065 = vmul.f32 %v2060, %v1070
          %v2066 = vmul.f32 %v2060, %v1071
          %v2067 = vmul.f32 %v2060, %v1072
          %v2068 = vmul.f32 %v2060, %v1073
          %v2069 = vmul.f32 %v2060, %v1074
          %v2070 = vmul.f32 %v2060, %v1075
          %v2071 = vmul.f32 %v2060, %v1076
          %v2072 = vmul.f32 %v2060, %v1077
          %v2073 = vmul.f32 %v2060, %v1078
          %v2074 = vmul.f32 %v2060, %v1079
          %v2075 = vmul.f32 %v2060, %v1080
          %v2076 = vmul.f32 %v2060, %v1081
          %v2077 = vadd.f32 %v2039, %v2061
          %v2078 = vadd.f32 %v2040, %v2062
          %v2079 = vadd.f32 %v2041, %v2063
          %v2080 = vadd.f32 %v2042, %v2064
          %v2081 = vadd.f32 %v2043, %v2065
          %v2082 = vadd.f32 %v2044, %v2066
          %v2083 = vadd.f32 %v2045, %v2067
          %v2084 = vadd.f32 %v2046, %v2068
          %v2085 = vadd.f32 %v2047, %v2069
          %v2086 = vadd.f32 %v2048, %v2070
          %v2087 = vadd.f32 %v2049, %v2071
          %v2088 = vadd.f32 %v2050, %v2072
          %v2089 = vadd.f32 %v2051, %v2073
          %v2090 = vadd.f32 %v2052, %v2074
          %v2091 = vadd.f32 %v2053, %v2075
          %v2092 = vadd.f32 %v2054, %v2076
          %v2093 = vld [vmem:[#allocation9 + $0x1d] sm:$0x1]
          %v2094 = vld [vmem:[#allocation2 + $0x23] sm:$0xff]
          %v2095 = vlaneseq
          %v2096 = vshrl.u32 %v2095, 7
          %v2097 = vsub.s32 0, %v2096
          %v2098 = vrot.slane %v2093, %v2097
          %v2099 = vmul.f32 %v2098, %v2094
          %v2100 = vmul.f32 %v2098, %v1790
          %v2101 = vmul.f32 %v2098, %v1486
          %v2102 = vmul.f32 %v2098, %v1122
          %v2103 = vmul.f32 %v2098, %v1123
          %v2104 = vmul.f32 %v2098, %v1124
          %v2105 = vmul.f32 %v2098, %v1125
          %v2106 = vmul.f32 %v2098, %v1126
          %v2107 = vmul.f32 %v2098, %v1127
          %v2108 = vmul.f32 %v2098, %v1128
          %v2109 = vmul.f32 %v2098, %v1129
          %v2110 = vmul.f32 %v2098, %v1130
          %v2111 = vmul.f32 %v2098, %v1131
          %v2112 = vmul.f32 %v2098, %v1132
          %v2113 = vmul.f32 %v2098, %v1133
          %v2114 = vmul.f32 %v2098, %v1134
          %v2115 = vadd.f32 %v2077, %v2099
          %v2116 = vadd.f32 %v2078, %v2100
          %v2117 = vadd.f32 %v2079, %v2101
          %v2118 = vadd.f32 %v2080, %v2102
          %v2119 = vadd.f32 %v2081, %v2103
          %v2120 = vadd.f32 %v2082, %v2104
          %v2121 = vadd.f32 %v2083, %v2105
          %v2122 = vadd.f32 %v2084, %v2106
          %v2123 = vadd.f32 %v2085, %v2107
          %v2124 = vadd.f32 %v2086, %v2108
          %v2125 = vadd.f32 %v2087, %v2109
          %v2126 = vadd.f32 %v2088, %v2110
          %v2127 = vadd.f32 %v2089, %v2111
          %v2128 = vadd.f32 %v2090, %v2112
          %v2129 = vadd.f32 %v2091, %v2113
          %v2130 = vadd.f32 %v2092, %v2114
          %v2131 = vld [vmem:[#allocation9 + $0x1e] sm:$0x1]
          %v2132 = vld [vmem:[#allocation2 + $0x22] sm:$0xff]
          %v2133 = vlaneseq
          %v2134 = vshrl.u32 %v2133, 7
          %v2135 = vsub.s32 0, %v2134
          %v2136 = vrot.slane %v2131, %v2135
          %v2137 = vmul.f32 %v2136, %v2132
          %v2138 = vmul.f32 %v2136, %v1828
          %v2139 = vmul.f32 %v2136, %v1524
          %v2140 = vmul.f32 %v2136, %v1175
          %v2141 = vmul.f32 %v2136, %v1176
          %v2142 = vmul.f32 %v2136, %v1177
          %v2143 = vmul.f32 %v2136, %v1178
          %v2144 = vmul.f32 %v2136, %v1179
          %v2145 = vmul.f32 %v2136, %v1180
          %v2146 = vmul.f32 %v2136, %v1181
          %v2147 = vmul.f32 %v2136, %v1182
          %v2148 = vmul.f32 %v2136, %v1183
          %v2149 = vmul.f32 %v2136, %v1184
          %v2150 = vmul.f32 %v2136, %v1185
          %v2151 = vmul.f32 %v2136, %v1186
          %v2152 = vmul.f32 %v2136, %v1187
          %v2153 = vadd.f32 %v2115, %v2137
          %v2154 = vadd.f32 %v2116, %v2138
          %v2155 = vadd.f32 %v2117, %v2139
          %v2156 = vadd.f32 %v2118, %v2140
          %v2157 = vadd.f32 %v2119, %v2141
          %v2158 = vadd.f32 %v2120, %v2142
          %v2159 = vadd.f32 %v2121, %v2143
          %v2160 = vadd.f32 %v2122, %v2144
          %v2161 = vadd.f32 %v2123, %v2145
          %v2162 = vadd.f32 %v2124, %v2146
          %v2163 = vadd.f32 %v2125, %v2147
          %v2164 = vadd.f32 %v2126, %v2148
          %v2165 = vadd.f32 %v2127, %v2149
          %v2166 = vadd.f32 %v2128, %v2150
          %v2167 = vadd.f32 %v2129, %v2151
          %v2168 = vadd.f32 %v2130, %v2152
          %v2169 = vld [vmem:[#allocation9 + $0x1f] sm:$0x1]
          %v2170 = vld [vmem:[#allocation2 + $0x21] sm:$0xff]
          %v2171 = vlaneseq
          %v2172 = vshrl.u32 %v2171, 7
          %v2173 = vsub.s32 0, %v2172
          %v2174 = vrot.slane %v2169, %v2173
          %v2175 = vmul.f32 %v2174, %v2170
          %v2176 = vmul.f32 %v2174, %v1866
          %v2177 = vmul.f32 %v2174, %v1562
          %v2178 = vmul.f32 %v2174, %v1228
          %v2179 = vmul.f32 %v2174, %v1229
          %v2180 = vmul.f32 %v2174, %v1230
          %v2181 = vmul.f32 %v2174, %v1231
          %v2182 = vmul.f32 %v2174, %v1232
          %v2183 = vmul.f32 %v2174, %v1233
          %v2184 = vmul.f32 %v2174, %v1234
          %v2185 = vmul.f32 %v2174, %v1235
          %v2186 = vmul.f32 %v2174, %v1236
          %v2187 = vmul.f32 %v2174, %v1237
          %v2188 = vmul.f32 %v2174, %v1238
          %v2189 = vmul.f32 %v2174, %v1239
          %v2190 = vmul.f32 %v2174, %v1240
          %v2191 = vadd.f32 %v2153, %v2175
          %v2192 = vadd.f32 %v2154, %v2176
          %v2193 = vadd.f32 %v2155, %v2177
          %v2194 = vadd.f32 %v2156, %v2178
          %v2195 = vadd.f32 %v2157, %v2179
          %v2196 = vadd.f32 %v2158, %v2180
          %v2197 = vadd.f32 %v2159, %v2181
          %v2198 = vadd.f32 %v2160, %v2182
          %v2199 = vadd.f32 %v2161, %v2183
          %v2200 = vadd.f32 %v2162, %v2184
          %v2201 = vadd.f32 %v2163, %v2185
          %v2202 = vadd.f32 %v2164, %v2186
          %v2203 = vadd.f32 %v2165, %v2187
          %v2204 = vadd.f32 %v2166, %v2188
          %v2205 = vadd.f32 %v2167, %v2189
          %v2206 = vadd.f32 %v2168, %v2190
          %v2207 = vld [vmem:[#allocation9 + $0x20] sm:$0x1]
          %v2208 = vld [vmem:[#allocation2 + $0x20] sm:$0xff]
          %v2209 = vlaneseq
          %v2210 = vshrl.u32 %v2209, 7
          %v2211 = vsub.s32 0, %v2210
          %v2212 = vrot.slane %v2207, %v2211
          %v2213 = vmul.f32 %v2212, %v2208
          %v2214 = vmul.f32 %v2212, %v1904
          %v2215 = vmul.f32 %v2212, %v1600
          %v2216 = vmul.f32 %v2212, %v1281
          %v2217 = vmul.f32 %v2212, %v1282
          %v2218 = vmul.f32 %v2212, %v1283
          %v2219 = vmul.f32 %v2212, %v1284
          %v2220 = vmul.f32 %v2212, %v1285
          %v2221 = vmul.f32 %v2212, %v1286
          %v2222 = vmul.f32 %v2212, %v1287
          %v2223 = vmul.f32 %v2212, %v1288
          %v2224 = vmul.f32 %v2212, %v1289
          %v2225 = vmul.f32 %v2212, %v1290
          %v2226 = vmul.f32 %v2212, %v1291
          %v2227 = vmul.f32 %v2212, %v1292
          %v2228 = vmul.f32 %v2212, %v1293
          %v2229 = vadd.f32 %v2191, %v2213
          %v2230 = vadd.f32 %v2192, %v2214
          %v2231 = vadd.f32 %v2193, %v2215
          %v2232 = vadd.f32 %v2194, %v2216
          %v2233 = vadd.f32 %v2195, %v2217
          %v2234 = vadd.f32 %v2196, %v2218
          %v2235 = vadd.f32 %v2197, %v2219
          %v2236 = vadd.f32 %v2198, %v2220
          %v2237 = vadd.f32 %v2199, %v2221
          %v2238 = vadd.f32 %v2200, %v2222
          %v2239 = vadd.f32 %v2201, %v2223
          %v2240 = vadd.f32 %v2202, %v2224
          %v2241 = vadd.f32 %v2203, %v2225
          %v2242 = vadd.f32 %v2204, %v2226
          %v2243 = vadd.f32 %v2205, %v2227
          %v2244 = vadd.f32 %v2206, %v2228
          %v2245 = vld [vmem:[#allocation9 + $0x21] sm:$0x1]
          %v2246 = vld [vmem:[#allocation2 + $0x1f] sm:$0xff]
          %v2247 = vlaneseq
          %v2248 = vshrl.u32 %v2247, 7
          %v2249 = vsub.s32 0, %v2248
          %v2250 = vrot.slane %v2245, %v2249
          %v2251 = vmul.f32 %v2250, %v2246
          %v2252 = vmul.f32 %v2250, %v1942
          %v2253 = vmul.f32 %v2250, %v1638
          %v2254 = vmul.f32 %v2250, %v1334
          %v2255 = vmul.f32 %v2250, %v910
          %v2256 = vmul.f32 %v2250, %v911
          %v2257 = vmul.f32 %v2250, %v912
          %v2258 = vmul.f32 %v2250, %v913
          %v2259 = vmul.f32 %v2250, %v914
          %v2260 = vmul.f32 %v2250, %v915
          %v2261 = vmul.f32 %v2250, %v916
          %v2262 = vmul.f32 %v2250, %v917
          %v2263 = vmul.f32 %v2250, %v918
          %v2264 = vmul.f32 %v2250, %v919
          %v2265 = vmul.f32 %v2250, %v920
          %v2266 = vmul.f32 %v2250, %v921
          %v2267 = vadd.f32 %v2229, %v2251
          %v2268 = vadd.f32 %v2230, %v2252
          %v2269 = vadd.f32 %v2231, %v2253
          %v2270 = vadd.f32 %v2232, %v2254
          %v2271 = vadd.f32 %v2233, %v2255
          %v2272 = vadd.f32 %v2234, %v2256
          %v2273 = vadd.f32 %v2235, %v2257
          %v2274 = vadd.f32 %v2236, %v2258
          %v2275 = vadd.f32 %v2237, %v2259
          %v2276 = vadd.f32 %v2238, %v2260
          %v2277 = vadd.f32 %v2239, %v2261
          %v2278 = vadd.f32 %v2240, %v2262
          %v2279 = vadd.f32 %v2241, %v2263
          %v2280 = vadd.f32 %v2242, %v2264
          %v2281 = vadd.f32 %v2243, %v2265
          %v2282 = vadd.f32 %v2244, %v2266
          %v2283 = vld [vmem:[#allocation9 + $0x22] sm:$0x1]
          %v2284 = vld [vmem:[#allocation2 + $0x1e] sm:$0xff]
          %v2285 = vlaneseq
          %v2286 = vshrl.u32 %v2285, 7
          %v2287 = vsub.s32 0, %v2286
          %v2288 = vrot.slane %v2283, %v2287
          %v2289 = vmul.f32 %v2288, %v2284
          %v2290 = vmul.f32 %v2288, %v1980
          %v2291 = vmul.f32 %v2288, %v1676
          %v2292 = vmul.f32 %v2288, %v1372
          %v2293 = vmul.f32 %v2288, %v963
          %v2294 = vmul.f32 %v2288, %v964
          %v2295 = vmul.f32 %v2288, %v965
          %v2296 = vmul.f32 %v2288, %v966
          %v2297 = vmul.f32 %v2288, %v967
          %v2298 = vmul.f32 %v2288, %v968
          %v2299 = vmul.f32 %v2288, %v969
          %v2300 = vmul.f32 %v2288, %v970
          %v2301 = vmul.f32 %v2288, %v971
          %v2302 = vmul.f32 %v2288, %v972
          %v2303 = vmul.f32 %v2288, %v973
          %v2304 = vmul.f32 %v2288, %v974
          %v2305 = vadd.f32 %v2267, %v2289
          %v2306 = vadd.f32 %v2268, %v2290
          %v2307 = vadd.f32 %v2269, %v2291
          %v2308 = vadd.f32 %v2270, %v2292
          %v2309 = vadd.f32 %v2271, %v2293
          %v2310 = vadd.f32 %v2272, %v2294
          %v2311 = vadd.f32 %v2273, %v2295
          %v2312 = vadd.f32 %v2274, %v2296
          %v2313 = vadd.f32 %v2275, %v2297
          %v2314 = vadd.f32 %v2276, %v2298
          %v2315 = vadd.f32 %v2277, %v2299
          %v2316 = vadd.f32 %v2278, %v2300
          %v2317 = vadd.f32 %v2279, %v2301
          %v2318 = vadd.f32 %v2280, %v2302
          %v2319 = vadd.f32 %v2281, %v2303
          %v2320 = vadd.f32 %v2282, %v2304
          %v2321 = vld [vmem:[#allocation9 + $0x23] sm:$0x1]
          %v2322 = vld [vmem:[#allocation2 + $0x1d] sm:$0xff]
          %v2323 = vlaneseq
          %v2324 = vshrl.u32 %v2323, 7
          %v2325 = vsub.s32 0, %v2324
          %v2326 = vrot.slane %v2321, %v2325
          %v2327 = vmul.f32 %v2326, %v2322
          %v2328 = vmul.f32 %v2326, %v2018
          %v2329 = vmul.f32 %v2326, %v1714
          %v2330 = vmul.f32 %v2326, %v1410
          %v2331 = vmul.f32 %v2326, %v1016
          %v2332 = vmul.f32 %v2326, %v1017
          %v2333 = vmul.f32 %v2326, %v1018
          %v2334 = vmul.f32 %v2326, %v1019
          %v2335 = vmul.f32 %v2326, %v1020
          %v2336 = vmul.f32 %v2326, %v1021
          %v2337 = vmul.f32 %v2326, %v1022
          %v2338 = vmul.f32 %v2326, %v1023
          %v2339 = vmul.f32 %v2326, %v1024
          %v2340 = vmul.f32 %v2326, %v1025
          %v2341 = vmul.f32 %v2326, %v1026
          %v2342 = vmul.f32 %v2326, %v1027
          %v2343 = vadd.f32 %v2305, %v2327
          %v2344 = vadd.f32 %v2306, %v2328
          %v2345 = vadd.f32 %v2307, %v2329
          %v2346 = vadd.f32 %v2308, %v2330
          %v2347 = vadd.f32 %v2309, %v2331
          %v2348 = vadd.f32 %v2310, %v2332
          %v2349 = vadd.f32 %v2311, %v2333
          %v2350 = vadd.f32 %v2312, %v2334
          %v2351 = vadd.f32 %v2313, %v2335
          %v2352 = vadd.f32 %v2314, %v2336
          %v2353 = vadd.f32 %v2315, %v2337
          %v2354 = vadd.f32 %v2316, %v2338
          %v2355 = vadd.f32 %v2317, %v2339
          %v2356 = vadd.f32 %v2318, %v2340
          %v2357 = vadd.f32 %v2319, %v2341
          %v2358 = vadd.f32 %v2320, %v2342
          %v2359 = vld [vmem:[#allocation9 + $0x24] sm:$0x1]
          %v2360 = vld [vmem:[#allocation2 + $0x1c] sm:$0xff]
          %v2361 = vlaneseq
          %v2362 = vshrl.u32 %v2361, 7
          %v2363 = vsub.s32 0, %v2362
          %v2364 = vrot.slane %v2359, %v2363
          %v2365 = vmul.f32 %v2364, %v2360
          %v2366 = vmul.f32 %v2364, %v2056
          %v2367 = vmul.f32 %v2364, %v1752
          %v2368 = vmul.f32 %v2364, %v1448
          %v2369 = vmul.f32 %v2364, %v1069
          %v2370 = vmul.f32 %v2364, %v1070
          %v2371 = vmul.f32 %v2364, %v1071
          %v2372 = vmul.f32 %v2364, %v1072
          %v2373 = vmul.f32 %v2364, %v1073
          %v2374 = vmul.f32 %v2364, %v1074
          %v2375 = vmul.f32 %v2364, %v1075
          %v2376 = vmul.f32 %v2364, %v1076
          %v2377 = vmul.f32 %v2364, %v1077
          %v2378 = vmul.f32 %v2364, %v1078
          %v2379 = vmul.f32 %v2364, %v1079
          %v2380 = vmul.f32 %v2364, %v1080
          %v2381 = vadd.f32 %v2343, %v2365
          %v2382 = vadd.f32 %v2344, %v2366
          %v2383 = vadd.f32 %v2345, %v2367
          %v2384 = vadd.f32 %v2346, %v2368
          %v2385 = vadd.f32 %v2347, %v2369
          %v2386 = vadd.f32 %v2348, %v2370
          %v2387 = vadd.f32 %v2349, %v2371
          %v2388 = vadd.f32 %v2350, %v2372
          %v2389 = vadd.f32 %v2351, %v2373
          %v2390 = vadd.f32 %v2352, %v2374
          %v2391 = vadd.f32 %v2353, %v2375
          %v2392 = vadd.f32 %v2354, %v2376
          %v2393 = vadd.f32 %v2355, %v2377
          %v2394 = vadd.f32 %v2356, %v2378
          %v2395 = vadd.f32 %v2357, %v2379
          %v2396 = vadd.f32 %v2358, %v2380
          %v2397 = vld [vmem:[#allocation9 + $0x25] sm:$0x1]
          %v2398 = vld [vmem:[#allocation2 + $0x1b] sm:$0xff]
          %v2399 = vlaneseq
          %v2400 = vshrl.u32 %v2399, 7
          %v2401 = vsub.s32 0, %v2400
          %v2402 = vrot.slane %v2397, %v2401
          %v2403 = vmul.f32 %v2402, %v2398
          %v2404 = vmul.f32 %v2402, %v2094
          %v2405 = vmul.f32 %v2402, %v1790
          %v2406 = vmul.f32 %v2402, %v1486
          %v2407 = vmul.f32 %v2402, %v1122
          %v2408 = vmul.f32 %v2402, %v1123
          %v2409 = vmul.f32 %v2402, %v1124
          %v2410 = vmul.f32 %v2402, %v1125
          %v2411 = vmul.f32 %v2402, %v1126
          %v2412 = vmul.f32 %v2402, %v1127
          %v2413 = vmul.f32 %v2402, %v1128
          %v2414 = vmul.f32 %v2402, %v1129
          %v2415 = vmul.f32 %v2402, %v1130
          %v2416 = vmul.f32 %v2402, %v1131
          %v2417 = vmul.f32 %v2402, %v1132
          %v2418 = vmul.f32 %v2402, %v1133
          %v2419 = vadd.f32 %v2381, %v2403
          %v2420 = vadd.f32 %v2382, %v2404
          %v2421 = vadd.f32 %v2383, %v2405
          %v2422 = vadd.f32 %v2384, %v2406
          %v2423 = vadd.f32 %v2385, %v2407
          %v2424 = vadd.f32 %v2386, %v2408
          %v2425 = vadd.f32 %v2387, %v2409
          %v2426 = vadd.f32 %v2388, %v2410
          %v2427 = vadd.f32 %v2389, %v2411
          %v2428 = vadd.f32 %v2390, %v2412
          %v2429 = vadd.f32 %v2391, %v2413
          %v2430 = vadd.f32 %v2392, %v2414
          %v2431 = vadd.f32 %v2393, %v2415
          %v2432 = vadd.f32 %v2394, %v2416
          %v2433 = vadd.f32 %v2395, %v2417
          %v2434 = vadd.f32 %v2396, %v2418
          %v2435 = vld [vmem:[#allocation9 + $0x26] sm:$0x1]
          %v2436 = vld [vmem:[#allocation2 + $0x1a] sm:$0xff]
          %v2437 = vlaneseq
          %v2438 = vshrl.u32 %v2437, 7
          %v2439 = vsub.s32 0, %v2438
          %v2440 = vrot.slane %v2435, %v2439
          %v2441 = vmul.f32 %v2440, %v2436
          %v2442 = vmul.f32 %v2440, %v2132
          %v2443 = vmul.f32 %v2440, %v1828
          %v2444 = vmul.f32 %v2440, %v1524
          %v2445 = vmul.f32 %v2440, %v1175
          %v2446 = vmul.f32 %v2440, %v1176
          %v2447 = vmul.f32 %v2440, %v1177
          %v2448 = vmul.f32 %v2440, %v1178
          %v2449 = vmul.f32 %v2440, %v1179
          %v2450 = vmul.f32 %v2440, %v1180
          %v2451 = vmul.f32 %v2440, %v1181
          %v2452 = vmul.f32 %v2440, %v1182
          %v2453 = vmul.f32 %v2440, %v1183
          %v2454 = vmul.f32 %v2440, %v1184
          %v2455 = vmul.f32 %v2440, %v1185
          %v2456 = vmul.f32 %v2440, %v1186
          %v2457 = vadd.f32 %v2419, %v2441
          %v2458 = vadd.f32 %v2420, %v2442
          %v2459 = vadd.f32 %v2421, %v2443
          %v2460 = vadd.f32 %v2422, %v2444
          %v2461 = vadd.f32 %v2423, %v2445
          %v2462 = vadd.f32 %v2424, %v2446
          %v2463 = vadd.f32 %v2425, %v2447
          %v2464 = vadd.f32 %v2426, %v2448
          %v2465 = vadd.f32 %v2427, %v2449
          %v2466 = vadd.f32 %v2428, %v2450
          %v2467 = vadd.f32 %v2429, %v2451
          %v2468 = vadd.f32 %v2430, %v2452
          %v2469 = vadd.f32 %v2431, %v2453
          %v2470 = vadd.f32 %v2432, %v2454
          %v2471 = vadd.f32 %v2433, %v2455
          %v2472 = vadd.f32 %v2434, %v2456
          %v2473 = vld [vmem:[#allocation9 + $0x27] sm:$0x1]
          %v2474 = vld [vmem:[#allocation2 + $0x19] sm:$0xff]
          %v2475 = vlaneseq
          %v2476 = vshrl.u32 %v2475, 7
          %v2477 = vsub.s32 0, %v2476
          %v2478 = vrot.slane %v2473, %v2477
          %v2479 = vmul.f32 %v2478, %v2474
          %v2480 = vmul.f32 %v2478, %v2170
          %v2481 = vmul.f32 %v2478, %v1866
          %v2482 = vmul.f32 %v2478, %v1562
          %v2483 = vmul.f32 %v2478, %v1228
          %v2484 = vmul.f32 %v2478, %v1229
          %v2485 = vmul.f32 %v2478, %v1230
          %v2486 = vmul.f32 %v2478, %v1231
          %v2487 = vmul.f32 %v2478, %v1232
          %v2488 = vmul.f32 %v2478, %v1233
          %v2489 = vmul.f32 %v2478, %v1234
          %v2490 = vmul.f32 %v2478, %v1235
          %v2491 = vmul.f32 %v2478, %v1236
          %v2492 = vmul.f32 %v2478, %v1237
          %v2493 = vmul.f32 %v2478, %v1238
          %v2494 = vmul.f32 %v2478, %v1239
          %v2495 = vadd.f32 %v2457, %v2479
          %v2496 = vadd.f32 %v2458, %v2480
          %v2497 = vadd.f32 %v2459, %v2481
          %v2498 = vadd.f32 %v2460, %v2482
          %v2499 = vadd.f32 %v2461, %v2483
          %v2500 = vadd.f32 %v2462, %v2484
          %v2501 = vadd.f32 %v2463, %v2485
          %v2502 = vadd.f32 %v2464, %v2486
          %v2503 = vadd.f32 %v2465, %v2487
          %v2504 = vadd.f32 %v2466, %v2488
          %v2505 = vadd.f32 %v2467, %v2489
          %v2506 = vadd.f32 %v2468, %v2490
          %v2507 = vadd.f32 %v2469, %v2491
          %v2508 = vadd.f32 %v2470, %v2492
          %v2509 = vadd.f32 %v2471, %v2493
          %v2510 = vadd.f32 %v2472, %v2494
          %v2511 = vld [vmem:[#allocation9 + $0x28] sm:$0x1]
          %v2512 = vld [vmem:[#allocation2 + $0x18] sm:$0xff]
          %v2513 = vlaneseq
          %v2514 = vshrl.u32 %v2513, 7
          %v2515 = vsub.s32 0, %v2514
          %v2516 = vrot.slane %v2511, %v2515
          %v2517 = vmul.f32 %v2516, %v2512
          %v2518 = vmul.f32 %v2516, %v2208
          %v2519 = vmul.f32 %v2516, %v1904
          %v2520 = vmul.f32 %v2516, %v1600
          %v2521 = vmul.f32 %v2516, %v1281
          %v2522 = vmul.f32 %v2516, %v1282
          %v2523 = vmul.f32 %v2516, %v1283
          %v2524 = vmul.f32 %v2516, %v1284
          %v2525 = vmul.f32 %v2516, %v1285
          %v2526 = vmul.f32 %v2516, %v1286
          %v2527 = vmul.f32 %v2516, %v1287
          %v2528 = vmul.f32 %v2516, %v1288
          %v2529 = vmul.f32 %v2516, %v1289
          %v2530 = vmul.f32 %v2516, %v1290
          %v2531 = vmul.f32 %v2516, %v1291
          %v2532 = vmul.f32 %v2516, %v1292
          %v2533 = vadd.f32 %v2495, %v2517
          %v2534 = vadd.f32 %v2496, %v2518
          %v2535 = vadd.f32 %v2497, %v2519
          %v2536 = vadd.f32 %v2498, %v2520
          %v2537 = vadd.f32 %v2499, %v2521
          %v2538 = vadd.f32 %v2500, %v2522
          %v2539 = vadd.f32 %v2501, %v2523
          %v2540 = vadd.f32 %v2502, %v2524
          %v2541 = vadd.f32 %v2503, %v2525
          %v2542 = vadd.f32 %v2504, %v2526
          %v2543 = vadd.f32 %v2505, %v2527
          %v2544 = vadd.f32 %v2506, %v2528
          %v2545 = vadd.f32 %v2507, %v2529
          %v2546 = vadd.f32 %v2508, %v2530
          %v2547 = vadd.f32 %v2509, %v2531
          %v2548 = vadd.f32 %v2510, %v2532
          %v2549 = vld [vmem:[#allocation9 + $0x29] sm:$0x1]
          %v2550 = vld [vmem:[#allocation2 + $0x17] sm:$0xff]
          %v2551 = vlaneseq
          %v2552 = vshrl.u32 %v2551, 7
          %v2553 = vsub.s32 0, %v2552
          %v2554 = vrot.slane %v2549, %v2553
          %v2555 = vmul.f32 %v2554, %v2550
          %v2556 = vmul.f32 %v2554, %v2246
          %v2557 = vmul.f32 %v2554, %v1942
          %v2558 = vmul.f32 %v2554, %v1638
          %v2559 = vmul.f32 %v2554, %v1334
          %v2560 = vmul.f32 %v2554, %v910
          %v2561 = vmul.f32 %v2554, %v911
          %v2562 = vmul.f32 %v2554, %v912
          %v2563 = vmul.f32 %v2554, %v913
          %v2564 = vmul.f32 %v2554, %v914
          %v2565 = vmul.f32 %v2554, %v915
          %v2566 = vmul.f32 %v2554, %v916
          %v2567 = vmul.f32 %v2554, %v917
          %v2568 = vmul.f32 %v2554, %v918
          %v2569 = vmul.f32 %v2554, %v919
          %v2570 = vmul.f32 %v2554, %v920
          %v2571 = vadd.f32 %v2533, %v2555
          %v2572 = vadd.f32 %v2534, %v2556
          %v2573 = vadd.f32 %v2535, %v2557
          %v2574 = vadd.f32 %v2536, %v2558
          %v2575 = vadd.f32 %v2537, %v2559
          %v2576 = vadd.f32 %v2538, %v2560
          %v2577 = vadd.f32 %v2539, %v2561
          %v2578 = vadd.f32 %v2540, %v2562
          %v2579 = vadd.f32 %v2541, %v2563
          %v2580 = vadd.f32 %v2542, %v2564
          %v2581 = vadd.f32 %v2543, %v2565
          %v2582 = vadd.f32 %v2544, %v2566
          %v2583 = vadd.f32 %v2545, %v2567
          %v2584 = vadd.f32 %v2546, %v2568
          %v2585 = vadd.f32 %v2547, %v2569
          %v2586 = vadd.f32 %v2548, %v2570
          %v2587 = vld [vmem:[#allocation9 + $0x2a] sm:$0x1]
          %v2588 = vld [vmem:[#allocation2 + $0x16] sm:$0xff]
          %v2589 = vlaneseq
          %v2590 = vshrl.u32 %v2589, 7
          %v2591 = vsub.s32 0, %v2590
          %v2592 = vrot.slane %v2587, %v2591
          %v2593 = vmul.f32 %v2592, %v2588
          %v2594 = vmul.f32 %v2592, %v2284
          %v2595 = vmul.f32 %v2592, %v1980
          %v2596 = vmul.f32 %v2592, %v1676
          %v2597 = vmul.f32 %v2592, %v1372
          %v2598 = vmul.f32 %v2592, %v963
          %v2599 = vmul.f32 %v2592, %v964
          %v2600 = vmul.f32 %v2592, %v965
          %v2601 = vmul.f32 %v2592, %v966
          %v2602 = vmul.f32 %v2592, %v967
          %v2603 = vmul.f32 %v2592, %v968
          %v2604 = vmul.f32 %v2592, %v969
          %v2605 = vmul.f32 %v2592, %v970
          %v2606 = vmul.f32 %v2592, %v971
          %v2607 = vmul.f32 %v2592, %v972
          %v2608 = vmul.f32 %v2592, %v973
          %v2609 = vadd.f32 %v2571, %v2593
          %v2610 = vadd.f32 %v2572, %v2594
          %v2611 = vadd.f32 %v2573, %v2595
          %v2612 = vadd.f32 %v2574, %v2596
          %v2613 = vadd.f32 %v2575, %v2597
          %v2614 = vadd.f32 %v2576, %v2598
          %v2615 = vadd.f32 %v2577, %v2599
          %v2616 = vadd.f32 %v2578, %v2600
          %v2617 = vadd.f32 %v2579, %v2601
          %v2618 = vadd.f32 %v2580, %v2602
          %v2619 = vadd.f32 %v2581, %v2603
          %v2620 = vadd.f32 %v2582, %v2604
          %v2621 = vadd.f32 %v2583, %v2605
          %v2622 = vadd.f32 %v2584, %v2606
          %v2623 = vadd.f32 %v2585, %v2607
          %v2624 = vadd.f32 %v2586, %v2608
          %v2625 = vld [vmem:[#allocation9 + $0x2b] sm:$0x1]
          %v2626 = vld [vmem:[#allocation2 + $0x15] sm:$0xff]
          %v2627 = vlaneseq
          %v2628 = vshrl.u32 %v2627, 7
          %v2629 = vsub.s32 0, %v2628
          %v2630 = vrot.slane %v2625, %v2629
          %v2631 = vmul.f32 %v2630, %v2626
          %v2632 = vmul.f32 %v2630, %v2322
          %v2633 = vmul.f32 %v2630, %v2018
          %v2634 = vmul.f32 %v2630, %v1714
          %v2635 = vmul.f32 %v2630, %v1410
          %v2636 = vmul.f32 %v2630, %v1016
          %v2637 = vmul.f32 %v2630, %v1017
          %v2638 = vmul.f32 %v2630, %v1018
          %v2639 = vmul.f32 %v2630, %v1019
          %v2640 = vmul.f32 %v2630, %v1020
          %v2641 = vmul.f32 %v2630, %v1021
          %v2642 = vmul.f32 %v2630, %v1022
          %v2643 = vmul.f32 %v2630, %v1023
          %v2644 = vmul.f32 %v2630, %v1024
          %v2645 = vmul.f32 %v2630, %v1025
          %v2646 = vmul.f32 %v2630, %v1026
          %v2647 = vadd.f32 %v2609, %v2631
          %v2648 = vadd.f32 %v2610, %v2632
          %v2649 = vadd.f32 %v2611, %v2633
          %v2650 = vadd.f32 %v2612, %v2634
          %v2651 = vadd.f32 %v2613, %v2635
          %v2652 = vadd.f32 %v2614, %v2636
          %v2653 = vadd.f32 %v2615, %v2637
          %v2654 = vadd.f32 %v2616, %v2638
          %v2655 = vadd.f32 %v2617, %v2639
          %v2656 = vadd.f32 %v2618, %v2640
          %v2657 = vadd.f32 %v2619, %v2641
          %v2658 = vadd.f32 %v2620, %v2642
          %v2659 = vadd.f32 %v2621, %v2643
          %v2660 = vadd.f32 %v2622, %v2644
          %v2661 = vadd.f32 %v2623, %v2645
          %v2662 = vadd.f32 %v2624, %v2646
          %v2663 = vld [vmem:[#allocation9 + $0x2c] sm:$0x1]
          %v2664 = vld [vmem:[#allocation2 + $0x14] sm:$0xff]
          %v2665 = vlaneseq
          %v2666 = vshrl.u32 %v2665, 7
          %v2667 = vsub.s32 0, %v2666
          %v2668 = vrot.slane %v2663, %v2667
          %v2669 = vmul.f32 %v2668, %v2664
          %v2670 = vmul.f32 %v2668, %v2360
          %v2671 = vmul.f32 %v2668, %v2056
          %v2672 = vmul.f32 %v2668, %v1752
          %v2673 = vmul.f32 %v2668, %v1448
          %v2674 = vmul.f32 %v2668, %v1069
          %v2675 = vmul.f32 %v2668, %v1070
          %v2676 = vmul.f32 %v2668, %v1071
          %v2677 = vmul.f32 %v2668, %v1072
          %v2678 = vmul.f32 %v2668, %v1073
          %v2679 = vmul.f32 %v2668, %v1074
          %v2680 = vmul.f32 %v2668, %v1075
          %v2681 = vmul.f32 %v2668, %v1076
          %v2682 = vmul.f32 %v2668, %v1077
          %v2683 = vmul.f32 %v2668, %v1078
          %v2684 = vmul.f32 %v2668, %v1079
          %v2685 = vadd.f32 %v2647, %v2669
          %v2686 = vadd.f32 %v2648, %v2670
          %v2687 = vadd.f32 %v2649, %v2671
          %v2688 = vadd.f32 %v2650, %v2672
          %v2689 = vadd.f32 %v2651, %v2673
          %v2690 = vadd.f32 %v2652, %v2674
          %v2691 = vadd.f32 %v2653, %v2675
          %v2692 = vadd.f32 %v2654, %v2676
          %v2693 = vadd.f32 %v2655, %v2677
          %v2694 = vadd.f32 %v2656, %v2678
          %v2695 = vadd.f32 %v2657, %v2679
          %v2696 = vadd.f32 %v2658, %v2680
          %v2697 = vadd.f32 %v2659, %v2681
          %v2698 = vadd.f32 %v2660, %v2682
          %v2699 = vadd.f32 %v2661, %v2683
          %v2700 = vadd.f32 %v2662, %v2684
          %v2701 = vld [vmem:[#allocation9 + $0x2d] sm:$0x1]
          %v2702 = vld [vmem:[#allocation2 + $0x13] sm:$0xff]
          %v2703 = vlaneseq
          %v2704 = vshrl.u32 %v2703, 7
          %v2705 = vsub.s32 0, %v2704
          %v2706 = vrot.slane %v2701, %v2705
          %v2707 = vmul.f32 %v2706, %v2702
          %v2708 = vmul.f32 %v2706, %v2398
          %v2709 = vmul.f32 %v2706, %v2094
          %v2710 = vmul.f32 %v2706, %v1790
          %v2711 = vmul.f32 %v2706, %v1486
          %v2712 = vmul.f32 %v2706, %v1122
          %v2713 = vmul.f32 %v2706, %v1123
          %v2714 = vmul.f32 %v2706, %v1124
          %v2715 = vmul.f32 %v2706, %v1125
          %v2716 = vmul.f32 %v2706, %v1126
          %v2717 = vmul.f32 %v2706, %v1127
          %v2718 = vmul.f32 %v2706, %v1128
          %v2719 = vmul.f32 %v2706, %v1129
          %v2720 = vmul.f32 %v2706, %v1130
          %v2721 = vmul.f32 %v2706, %v1131
          %v2722 = vmul.f32 %v2706, %v1132
          %v2723 = vadd.f32 %v2685, %v2707
          %v2724 = vadd.f32 %v2686, %v2708
          %v2725 = vadd.f32 %v2687, %v2709
          %v2726 = vadd.f32 %v2688, %v2710
          %v2727 = vadd.f32 %v2689, %v2711
          %v2728 = vadd.f32 %v2690, %v2712
          %v2729 = vadd.f32 %v2691, %v2713
          %v2730 = vadd.f32 %v2692, %v2714
          %v2731 = vadd.f32 %v2693, %v2715
          %v2732 = vadd.f32 %v2694, %v2716
          %v2733 = vadd.f32 %v2695, %v2717
          %v2734 = vadd.f32 %v2696, %v2718
          %v2735 = vadd.f32 %v2697, %v2719
          %v2736 = vadd.f32 %v2698, %v2720
          %v2737 = vadd.f32 %v2699, %v2721
          %v2738 = vadd.f32 %v2700, %v2722
          %v2739 = vld [vmem:[#allocation9 + $0x2e] sm:$0x1]
          %v2740 = vld [vmem:[#allocation2 + $0x12] sm:$0xff]
          %v2741 = vlaneseq
          %v2742 = vshrl.u32 %v2741, 7
          %v2743 = vsub.s32 0, %v2742
          %v2744 = vrot.slane %v2739, %v2743
          %v2745 = vmul.f32 %v2744, %v2740
          %v2746 = vmul.f32 %v2744, %v2436
          %v2747 = vmul.f32 %v2744, %v2132
          %v2748 = vmul.f32 %v2744, %v1828
          %v2749 = vmul.f32 %v2744, %v1524
          %v2750 = vmul.f32 %v2744, %v1175
          %v2751 = vmul.f32 %v2744, %v1176
          %v2752 = vmul.f32 %v2744, %v1177
          %v2753 = vmul.f32 %v2744, %v1178
          %v2754 = vmul.f32 %v2744, %v1179
          %v2755 = vmul.f32 %v2744, %v1180
          %v2756 = vmul.f32 %v2744, %v1181
          %v2757 = vmul.f32 %v2744, %v1182
          %v2758 = vmul.f32 %v2744, %v1183
          %v2759 = vmul.f32 %v2744, %v1184
          %v2760 = vmul.f32 %v2744, %v1185
          %v2761 = vadd.f32 %v2723, %v2745
          %v2762 = vadd.f32 %v2724, %v2746
          %v2763 = vadd.f32 %v2725, %v2747
          %v2764 = vadd.f32 %v2726, %v2748
          %v2765 = vadd.f32 %v2727, %v2749
          %v2766 = vadd.f32 %v2728, %v2750
          %v2767 = vadd.f32 %v2729, %v2751
          %v2768 = vadd.f32 %v2730, %v2752
          %v2769 = vadd.f32 %v2731, %v2753
          %v2770 = vadd.f32 %v2732, %v2754
          %v2771 = vadd.f32 %v2733, %v2755
          %v2772 = vadd.f32 %v2734, %v2756
          %v2773 = vadd.f32 %v2735, %v2757
          %v2774 = vadd.f32 %v2736, %v2758
          %v2775 = vadd.f32 %v2737, %v2759
          %v2776 = vadd.f32 %v2738, %v2760
          %v2777 = vld [vmem:[#allocation9 + $0x2f] sm:$0x1]
          %v2778 = vld [vmem:[#allocation2 + $0x11] sm:$0xff]
          %v2779 = vlaneseq
          %v2780 = vshrl.u32 %v2779, 7
          %v2781 = vsub.s32 0, %v2780
          %v2782 = vrot.slane %v2777, %v2781
          %v2783 = vmul.f32 %v2782, %v2778
          %v2784 = vmul.f32 %v2782, %v2474
          %v2785 = vmul.f32 %v2782, %v2170
          %v2786 = vmul.f32 %v2782, %v1866
          %v2787 = vmul.f32 %v2782, %v1562
          %v2788 = vmul.f32 %v2782, %v1228
          %v2789 = vmul.f32 %v2782, %v1229
          %v2790 = vmul.f32 %v2782, %v1230
          %v2791 = vmul.f32 %v2782, %v1231
          %v2792 = vmul.f32 %v2782, %v1232
          %v2793 = vmul.f32 %v2782, %v1233
          %v2794 = vmul.f32 %v2782, %v1234
          %v2795 = vmul.f32 %v2782, %v1235
          %v2796 = vmul.f32 %v2782, %v1236
          %v2797 = vmul.f32 %v2782, %v1237
          %v2798 = vmul.f32 %v2782, %v1238
          %v2799 = vadd.f32 %v2761, %v2783
          %v2800 = vadd.f32 %v2762, %v2784
          %v2801 = vadd.f32 %v2763, %v2785
          %v2802 = vadd.f32 %v2764, %v2786
          %v2803 = vadd.f32 %v2765, %v2787
          %v2804 = vadd.f32 %v2766, %v2788
          %v2805 = vadd.f32 %v2767, %v2789
          %v2806 = vadd.f32 %v2768, %v2790
          %v2807 = vadd.f32 %v2769, %v2791
          %v2808 = vadd.f32 %v2770, %v2792
          %v2809 = vadd.f32 %v2771, %v2793
          %v2810 = vadd.f32 %v2772, %v2794
          %v2811 = vadd.f32 %v2773, %v2795
          %v2812 = vadd.f32 %v2774, %v2796
          %v2813 = vadd.f32 %v2775, %v2797
          %v2814 = vadd.f32 %v2776, %v2798
          %v2815 = vld [vmem:[#allocation9 + $0x30] sm:$0x1]
          %v2816 = vld [vmem:[#allocation2 + $0x10] sm:$0xff]
          %v2817 = vlaneseq
          %v2818 = vshrl.u32 %v2817, 7
          %v2819 = vsub.s32 0, %v2818
          %v2820 = vrot.slane %v2815, %v2819
          %v2821 = vmul.f32 %v2820, %v2816
          %v2822 = vmul.f32 %v2820, %v2512
          %v2823 = vmul.f32 %v2820, %v2208
          %v2824 = vmul.f32 %v2820, %v1904
          %v2825 = vmul.f32 %v2820, %v1600
          %v2826 = vmul.f32 %v2820, %v1281
          %v2827 = vmul.f32 %v2820, %v1282
          %v2828 = vmul.f32 %v2820, %v1283
          %v2829 = vmul.f32 %v2820, %v1284
          %v2830 = vmul.f32 %v2820, %v1285
          %v2831 = vmul.f32 %v2820, %v1286
          %v2832 = vmul.f32 %v2820, %v1287
          %v2833 = vmul.f32 %v2820, %v1288
          %v2834 = vmul.f32 %v2820, %v1289
          %v2835 = vmul.f32 %v2820, %v1290
          %v2836 = vmul.f32 %v2820, %v1291
          %v2837 = vadd.f32 %v2799, %v2821
          %v2838 = vadd.f32 %v2800, %v2822
          %v2839 = vadd.f32 %v2801, %v2823
          %v2840 = vadd.f32 %v2802, %v2824
          %v2841 = vadd.f32 %v2803, %v2825
          %v2842 = vadd.f32 %v2804, %v2826
          %v2843 = vadd.f32 %v2805, %v2827
          %v2844 = vadd.f32 %v2806, %v2828
          %v2845 = vadd.f32 %v2807, %v2829
          %v2846 = vadd.f32 %v2808, %v2830
          %v2847 = vadd.f32 %v2809, %v2831
          %v2848 = vadd.f32 %v2810, %v2832
          %v2849 = vadd.f32 %v2811, %v2833
          %v2850 = vadd.f32 %v2812, %v2834
          %v2851 = vadd.f32 %v2813, %v2835
          %v2852 = vadd.f32 %v2814, %v2836
          %v2853 = vld [vmem:[#allocation9 + $0x31] sm:$0x1]
          %v2854 = vld [vmem:[#allocation2 + $0xf] sm:$0xff]
          %v2855 = vlaneseq
          %v2856 = vshrl.u32 %v2855, 7
          %v2857 = vsub.s32 0, %v2856
          %v2858 = vrot.slane %v2853, %v2857
          %v2859 = vmul.f32 %v2858, %v2854
          %v2860 = vmul.f32 %v2858, %v2550
          %v2861 = vmul.f32 %v2858, %v2246
          %v2862 = vmul.f32 %v2858, %v1942
          %v2863 = vmul.f32 %v2858, %v1638
          %v2864 = vmul.f32 %v2858, %v1334
          %v2865 = vmul.f32 %v2858, %v910
          %v2866 = vmul.f32 %v2858, %v911
          %v2867 = vmul.f32 %v2858, %v912
          %v2868 = vmul.f32 %v2858, %v913
          %v2869 = vmul.f32 %v2858, %v914
          %v2870 = vmul.f32 %v2858, %v915
          %v2871 = vmul.f32 %v2858, %v916
          %v2872 = vmul.f32 %v2858, %v917
          %v2873 = vmul.f32 %v2858, %v918
          %v2874 = vmul.f32 %v2858, %v919
          %v2875 = vadd.f32 %v2837, %v2859
          %v2876 = vadd.f32 %v2838, %v2860
          %v2877 = vadd.f32 %v2839, %v2861
          %v2878 = vadd.f32 %v2840, %v2862
          %v2879 = vadd.f32 %v2841, %v2863
          %v2880 = vadd.f32 %v2842, %v2864
          %v2881 = vadd.f32 %v2843, %v2865
          %v2882 = vadd.f32 %v2844, %v2866
          %v2883 = vadd.f32 %v2845, %v2867
          %v2884 = vadd.f32 %v2846, %v2868
          %v2885 = vadd.f32 %v2847, %v2869
          %v2886 = vadd.f32 %v2848, %v2870
          %v2887 = vadd.f32 %v2849, %v2871
          %v2888 = vadd.f32 %v2850, %v2872
          %v2889 = vadd.f32 %v2851, %v2873
          %v2890 = vadd.f32 %v2852, %v2874
          %v2891 = vld [vmem:[#allocation9 + $0x32] sm:$0x1]
          %v2892 = vld [vmem:[#allocation2 + $0xe] sm:$0xff]
          %v2893 = vlaneseq
          %v2894 = vshrl.u32 %v2893, 7
          %v2895 = vsub.s32 0, %v2894
          %v2896 = vrot.slane %v2891, %v2895
          %v2897 = vmul.f32 %v2896, %v2892
          %v2898 = vmul.f32 %v2896, %v2588
          %v2899 = vmul.f32 %v2896, %v2284
          %v2900 = vmul.f32 %v2896, %v1980
          %v2901 = vmul.f32 %v2896, %v1676
          %v2902 = vmul.f32 %v2896, %v1372
          %v2903 = vmul.f32 %v2896, %v963
          %v2904 = vmul.f32 %v2896, %v964
          %v2905 = vmul.f32 %v2896, %v965
          %v2906 = vmul.f32 %v2896, %v966
          %v2907 = vmul.f32 %v2896, %v967
          %v2908 = vmul.f32 %v2896, %v968
          %v2909 = vmul.f32 %v2896, %v969
          %v2910 = vmul.f32 %v2896, %v970
          %v2911 = vmul.f32 %v2896, %v971
          %v2912 = vmul.f32 %v2896, %v972
          %v2913 = vadd.f32 %v2875, %v2897
          %v2914 = vadd.f32 %v2876, %v2898
          %v2915 = vadd.f32 %v2877, %v2899
          %v2916 = vadd.f32 %v2878, %v2900
          %v2917 = vadd.f32 %v2879, %v2901
          %v2918 = vadd.f32 %v2880, %v2902
          %v2919 = vadd.f32 %v2881, %v2903
          %v2920 = vadd.f32 %v2882, %v2904
          %v2921 = vadd.f32 %v2883, %v2905
          %v2922 = vadd.f32 %v2884, %v2906
          %v2923 = vadd.f32 %v2885, %v2907
          %v2924 = vadd.f32 %v2886, %v2908
          %v2925 = vadd.f32 %v2887, %v2909
          %v2926 = vadd.f32 %v2888, %v2910
          %v2927 = vadd.f32 %v2889, %v2911
          %v2928 = vadd.f32 %v2890, %v2912
          %v2929 = vld [vmem:[#allocation9 + $0x33] sm:$0x1]
          %v2930 = vld [vmem:[#allocation2 + $0xd] sm:$0xff]
          %v2931 = vlaneseq
          %v2932 = vshrl.u32 %v2931, 7
          %v2933 = vsub.s32 0, %v2932
          %v2934 = vrot.slane %v2929, %v2933
          %v2935 = vmul.f32 %v2934, %v2930
          %v2936 = vmul.f32 %v2934, %v2626
          %v2937 = vmul.f32 %v2934, %v2322
          %v2938 = vmul.f32 %v2934, %v2018
          %v2939 = vmul.f32 %v2934, %v1714
          %v2940 = vmul.f32 %v2934, %v1410
          %v2941 = vmul.f32 %v2934, %v1016
          %v2942 = vmul.f32 %v2934, %v1017
          %v2943 = vmul.f32 %v2934, %v1018
          %v2944 = vmul.f32 %v2934, %v1019
          %v2945 = vmul.f32 %v2934, %v1020
          %v2946 = vmul.f32 %v2934, %v1021
          %v2947 = vmul.f32 %v2934, %v1022
          %v2948 = vmul.f32 %v2934, %v1023
          %v2949 = vmul.f32 %v2934, %v1024
          %v2950 = vmul.f32 %v2934, %v1025
          %v2951 = vadd.f32 %v2913, %v2935
          %v2952 = vadd.f32 %v2914, %v2936
          %v2953 = vadd.f32 %v2915, %v2937
          %v2954 = vadd.f32 %v2916, %v2938
          %v2955 = vadd.f32 %v2917, %v2939
          %v2956 = vadd.f32 %v2918, %v2940
          %v2957 = vadd.f32 %v2919, %v2941
          %v2958 = vadd.f32 %v2920, %v2942
          %v2959 = vadd.f32 %v2921, %v2943
          %v2960 = vadd.f32 %v2922, %v2944
          %v2961 = vadd.f32 %v2923, %v2945
          %v2962 = vadd.f32 %v2924, %v2946
          %v2963 = vadd.f32 %v2925, %v2947
          %v2964 = vadd.f32 %v2926, %v2948
          %v2965 = vadd.f32 %v2927, %v2949
          %v2966 = vadd.f32 %v2928, %v2950
          %v2967 = vld [vmem:[#allocation9 + $0x34] sm:$0x1]
          %v2968 = vld [vmem:[#allocation2 + $0xc] sm:$0xff]
          %v2969 = vlaneseq
          %v2970 = vshrl.u32 %v2969, 7
          %v2971 = vsub.s32 0, %v2970
          %v2972 = vrot.slane %v2967, %v2971
          %v2973 = vmul.f32 %v2972, %v2968
          %v2974 = vmul.f32 %v2972, %v2664
          %v2975 = vmul.f32 %v2972, %v2360
          %v2976 = vmul.f32 %v2972, %v2056
          %v2977 = vmul.f32 %v2972, %v1752
          %v2978 = vmul.f32 %v2972, %v1448
          %v2979 = vmul.f32 %v2972, %v1069
          %v2980 = vmul.f32 %v2972, %v1070
          %v2981 = vmul.f32 %v2972, %v1071
          %v2982 = vmul.f32 %v2972, %v1072
          %v2983 = vmul.f32 %v2972, %v1073
          %v2984 = vmul.f32 %v2972, %v1074
          %v2985 = vmul.f32 %v2972, %v1075
          %v2986 = vmul.f32 %v2972, %v1076
          %v2987 = vmul.f32 %v2972, %v1077
          %v2988 = vmul.f32 %v2972, %v1078
          %v2989 = vadd.f32 %v2951, %v2973
          %v2990 = vadd.f32 %v2952, %v2974
          %v2991 = vadd.f32 %v2953, %v2975
          %v2992 = vadd.f32 %v2954, %v2976
          %v2993 = vadd.f32 %v2955, %v2977
          %v2994 = vadd.f32 %v2956, %v2978
          %v2995 = vadd.f32 %v2957, %v2979
          %v2996 = vadd.f32 %v2958, %v2980
          %v2997 = vadd.f32 %v2959, %v2981
          %v2998 = vadd.f32 %v2960, %v2982
          %v2999 = vadd.f32 %v2961, %v2983
          %v3000 = vadd.f32 %v2962, %v2984
          %v3001 = vadd.f32 %v2963, %v2985
          %v3002 = vadd.f32 %v2964, %v2986
          %v3003 = vadd.f32 %v2965, %v2987
          %v3004 = vadd.f32 %v2966, %v2988
          %v3005 = vld [vmem:[#allocation9 + $0x35] sm:$0x1]
          %v3006 = vld [vmem:[#allocation2 + $0xb] sm:$0xff]
          %v3007 = vlaneseq
          %v3008 = vshrl.u32 %v3007, 7
          %v3009 = vsub.s32 0, %v3008
          %v3010 = vrot.slane %v3005, %v3009
          %v3011 = vmul.f32 %v3010, %v3006
          %v3012 = vmul.f32 %v3010, %v2702
          %v3013 = vmul.f32 %v3010, %v2398
          %v3014 = vmul.f32 %v3010, %v2094
          %v3015 = vmul.f32 %v3010, %v1790
          %v3016 = vmul.f32 %v3010, %v1486
          %v3017 = vmul.f32 %v3010, %v1122
          %v3018 = vmul.f32 %v3010, %v1123
          %v3019 = vmul.f32 %v3010, %v1124
          %v3020 = vmul.f32 %v3010, %v1125
          %v3021 = vmul.f32 %v3010, %v1126
          %v3022 = vmul.f32 %v3010, %v1127
          %v3023 = vmul.f32 %v3010, %v1128
          %v3024 = vmul.f32 %v3010, %v1129
          %v3025 = vmul.f32 %v3010, %v1130
          %v3026 = vmul.f32 %v3010, %v1131
          %v3027 = vadd.f32 %v2989, %v3011
          %v3028 = vadd.f32 %v2990, %v3012
          %v3029 = vadd.f32 %v2991, %v3013
          %v3030 = vadd.f32 %v2992, %v3014
          %v3031 = vadd.f32 %v2993, %v3015
          %v3032 = vadd.f32 %v2994, %v3016
          %v3033 = vadd.f32 %v2995, %v3017
          %v3034 = vadd.f32 %v2996, %v3018
          %v3035 = vadd.f32 %v2997, %v3019
          %v3036 = vadd.f32 %v2998, %v3020
          %v3037 = vadd.f32 %v2999, %v3021
          %v3038 = vadd.f32 %v3000, %v3022
          %v3039 = vadd.f32 %v3001, %v3023
          %v3040 = vadd.f32 %v3002, %v3024
          %v3041 = vadd.f32 %v3003, %v3025
          %v3042 = vadd.f32 %v3004, %v3026
          %v3043 = vld [vmem:[#allocation9 + $0x36] sm:$0x1]
          %v3044 = vld [vmem:[#allocation2 + $0xa] sm:$0xff]
          %v3045 = vlaneseq
          %v3046 = vshrl.u32 %v3045, 7
          %v3047 = vsub.s32 0, %v3046
          %v3048 = vrot.slane %v3043, %v3047
          %v3049 = vmul.f32 %v3048, %v3044
          %v3050 = vmul.f32 %v3048, %v2740
          %v3051 = vmul.f32 %v3048, %v2436
          %v3052 = vmul.f32 %v3048, %v2132
          %v3053 = vmul.f32 %v3048, %v1828
          %v3054 = vmul.f32 %v3048, %v1524
          %v3055 = vmul.f32 %v3048, %v1175
          %v3056 = vmul.f32 %v3048, %v1176
          %v3057 = vmul.f32 %v3048, %v1177
          %v3058 = vmul.f32 %v3048, %v1178
          %v3059 = vmul.f32 %v3048, %v1179
          %v3060 = vmul.f32 %v3048, %v1180
          %v3061 = vmul.f32 %v3048, %v1181
          %v3062 = vmul.f32 %v3048, %v1182
          %v3063 = vmul.f32 %v3048, %v1183
          %v3064 = vmul.f32 %v3048, %v1184
          %v3065 = vadd.f32 %v3027, %v3049
          %v3066 = vadd.f32 %v3028, %v3050
          %v3067 = vadd.f32 %v3029, %v3051
          %v3068 = vadd.f32 %v3030, %v3052
          %v3069 = vadd.f32 %v3031, %v3053
          %v3070 = vadd.f32 %v3032, %v3054
          %v3071 = vadd.f32 %v3033, %v3055
          %v3072 = vadd.f32 %v3034, %v3056
          %v3073 = vadd.f32 %v3035, %v3057
          %v3074 = vadd.f32 %v3036, %v3058
          %v3075 = vadd.f32 %v3037, %v3059
          %v3076 = vadd.f32 %v3038, %v3060
          %v3077 = vadd.f32 %v3039, %v3061
          %v3078 = vadd.f32 %v3040, %v3062
          %v3079 = vadd.f32 %v3041, %v3063
          %v3080 = vadd.f32 %v3042, %v3064
          %v3081 = vld [vmem:[#allocation9 + $0x37] sm:$0x1]
          %v3082 = vld [vmem:[#allocation2 + $0x9] sm:$0xff]
          %v3083 = vlaneseq
          %v3084 = vshrl.u32 %v3083, 7
          %v3085 = vsub.s32 0, %v3084
          %v3086 = vrot.slane %v3081, %v3085
          %v3087 = vmul.f32 %v3086, %v3082
          %v3088 = vmul.f32 %v3086, %v2778
          %v3089 = vmul.f32 %v3086, %v2474
          %v3090 = vmul.f32 %v3086, %v2170
          %v3091 = vmul.f32 %v3086, %v1866
          %v3092 = vmul.f32 %v3086, %v1562
          %v3093 = vmul.f32 %v3086, %v1228
          %v3094 = vmul.f32 %v3086, %v1229
          %v3095 = vmul.f32 %v3086, %v1230
          %v3096 = vmul.f32 %v3086, %v1231
          %v3097 = vmul.f32 %v3086, %v1232
          %v3098 = vmul.f32 %v3086, %v1233
          %v3099 = vmul.f32 %v3086, %v1234
          %v3100 = vmul.f32 %v3086, %v1235
          %v3101 = vmul.f32 %v3086, %v1236
          %v3102 = vmul.f32 %v3086, %v1237
          %v3103 = vadd.f32 %v3065, %v3087
          %v3104 = vadd.f32 %v3066, %v3088
          %v3105 = vadd.f32 %v3067, %v3089
          %v3106 = vadd.f32 %v3068, %v3090
          %v3107 = vadd.f32 %v3069, %v3091
          %v3108 = vadd.f32 %v3070, %v3092
          %v3109 = vadd.f32 %v3071, %v3093
          %v3110 = vadd.f32 %v3072, %v3094
          %v3111 = vadd.f32 %v3073, %v3095
          %v3112 = vadd.f32 %v3074, %v3096
          %v3113 = vadd.f32 %v3075, %v3097
          %v3114 = vadd.f32 %v3076, %v3098
          %v3115 = vadd.f32 %v3077, %v3099
          %v3116 = vadd.f32 %v3078, %v3100
          %v3117 = vadd.f32 %v3079, %v3101
          %v3118 = vadd.f32 %v3080, %v3102
          %v3119 = vld [vmem:[#allocation9 + $0x38] sm:$0x1]
          %v3120 = vld [vmem:[#allocation2 + $0x8] sm:$0xff]
          %v3121 = vlaneseq
          %v3122 = vshrl.u32 %v3121, 7
          %v3123 = vsub.s32 0, %v3122
          %v3124 = vrot.slane %v3119, %v3123
          %v3125 = vmul.f32 %v3124, %v3120
          %v3126 = vmul.f32 %v3124, %v2816
          %v3127 = vmul.f32 %v3124, %v2512
          %v3128 = vmul.f32 %v3124, %v2208
          %v3129 = vmul.f32 %v3124, %v1904
          %v3130 = vmul.f32 %v3124, %v1600
          %v3131 = vmul.f32 %v3124, %v1281
          %v3132 = vmul.f32 %v3124, %v1282
          %v3133 = vmul.f32 %v3124, %v1283
          %v3134 = vmul.f32 %v3124, %v1284
          %v3135 = vmul.f32 %v3124, %v1285
          %v3136 = vmul.f32 %v3124, %v1286
          %v3137 = vmul.f32 %v3124, %v1287
          %v3138 = vmul.f32 %v3124, %v1288
          %v3139 = vmul.f32 %v3124, %v1289
          %v3140 = vmul.f32 %v3124, %v1290
          %v3141 = vadd.f32 %v3103, %v3125
          %v3142 = vadd.f32 %v3104, %v3126
          %v3143 = vadd.f32 %v3105, %v3127
          %v3144 = vadd.f32 %v3106, %v3128
          %v3145 = vadd.f32 %v3107, %v3129
          %v3146 = vadd.f32 %v3108, %v3130
          %v3147 = vadd.f32 %v3109, %v3131
          %v3148 = vadd.f32 %v3110, %v3132
          %v3149 = vadd.f32 %v3111, %v3133
          %v3150 = vadd.f32 %v3112, %v3134
          %v3151 = vadd.f32 %v3113, %v3135
          %v3152 = vadd.f32 %v3114, %v3136
          %v3153 = vadd.f32 %v3115, %v3137
          %v3154 = vadd.f32 %v3116, %v3138
          %v3155 = vadd.f32 %v3117, %v3139
          %v3156 = vadd.f32 %v3118, %v3140
          %v3157 = vld [vmem:[#allocation9 + $0x39] sm:$0x1]
          %v3158 = vld [vmem:[#allocation2 + $0x7] sm:$0xff]
          %v3159 = vlaneseq
          %v3160 = vshrl.u32 %v3159, 7
          %v3161 = vsub.s32 0, %v3160
          %v3162 = vrot.slane %v3157, %v3161
          %v3163 = vmul.f32 %v3162, %v3158
          %v3164 = vmul.f32 %v3162, %v2854
          %v3165 = vmul.f32 %v3162, %v2550
          %v3166 = vmul.f32 %v3162, %v2246
          %v3167 = vmul.f32 %v3162, %v1942
          %v3168 = vmul.f32 %v3162, %v1638
          %v3169 = vmul.f32 %v3162, %v1334
          %v3170 = vmul.f32 %v3162, %v910
          %v3171 = vmul.f32 %v3162, %v911
          %v3172 = vmul.f32 %v3162, %v912
          %v3173 = vmul.f32 %v3162, %v913
          %v3174 = vmul.f32 %v3162, %v914
          %v3175 = vmul.f32 %v3162, %v915
          %v3176 = vmul.f32 %v3162, %v916
          %v3177 = vmul.f32 %v3162, %v917
          %v3178 = vmul.f32 %v3162, %v918
          %v3179 = vadd.f32 %v3141, %v3163
          %v3180 = vadd.f32 %v3142, %v3164
          %v3181 = vadd.f32 %v3143, %v3165
          %v3182 = vadd.f32 %v3144, %v3166
          %v3183 = vadd.f32 %v3145, %v3167
          %v3184 = vadd.f32 %v3146, %v3168
          %v3185 = vadd.f32 %v3147, %v3169
          %v3186 = vadd.f32 %v3148, %v3170
          %v3187 = vadd.f32 %v3149, %v3171
          %v3188 = vadd.f32 %v3150, %v3172
          %v3189 = vadd.f32 %v3151, %v3173
          %v3190 = vadd.f32 %v3152, %v3174
          %v3191 = vadd.f32 %v3153, %v3175
          %v3192 = vadd.f32 %v3154, %v3176
          %v3193 = vadd.f32 %v3155, %v3177
          %v3194 = vadd.f32 %v3156, %v3178
          %v3195 = vld [vmem:[#allocation9 + $0x3a] sm:$0x1]
          %v3196 = vld [vmem:[#allocation2 + $0x6] sm:$0xff]
          %v3197 = vlaneseq
          %v3198 = vshrl.u32 %v3197, 7
          %v3199 = vsub.s32 0, %v3198
          %v3200 = vrot.slane %v3195, %v3199
          %v3201 = vmul.f32 %v3200, %v3196
          %v3202 = vmul.f32 %v3200, %v2892
          %v3203 = vmul.f32 %v3200, %v2588
          %v3204 = vmul.f32 %v3200, %v2284
          %v3205 = vmul.f32 %v3200, %v1980
          %v3206 = vmul.f32 %v3200, %v1676
          %v3207 = vmul.f32 %v3200, %v1372
          %v3208 = vmul.f32 %v3200, %v963
          %v3209 = vmul.f32 %v3200, %v964
          %v3210 = vmul.f32 %v3200, %v965
          %v3211 = vmul.f32 %v3200, %v966
          %v3212 = vmul.f32 %v3200, %v967
          %v3213 = vmul.f32 %v3200, %v968
          %v3214 = vmul.f32 %v3200, %v969
          %v3215 = vmul.f32 %v3200, %v970
          %v3216 = vmul.f32 %v3200, %v971
          %v3217 = vadd.f32 %v3179, %v3201
          %v3218 = vadd.f32 %v3180, %v3202
          %v3219 = vadd.f32 %v3181, %v3203
          %v3220 = vadd.f32 %v3182, %v3204
          %v3221 = vadd.f32 %v3183, %v3205
          %v3222 = vadd.f32 %v3184, %v3206
          %v3223 = vadd.f32 %v3185, %v3207
          %v3224 = vadd.f32 %v3186, %v3208
          %v3225 = vadd.f32 %v3187, %v3209
          %v3226 = vadd.f32 %v3188, %v3210
          %v3227 = vadd.f32 %v3189, %v3211
          %v3228 = vadd.f32 %v3190, %v3212
          %v3229 = vadd.f32 %v3191, %v3213
          %v3230 = vadd.f32 %v3192, %v3214
          %v3231 = vadd.f32 %v3193, %v3215
          %v3232 = vadd.f32 %v3194, %v3216
          %v3233 = vld [vmem:[#allocation9 + $0x3b] sm:$0x1]
          %v3234 = vld [vmem:[#allocation2 + $0x5] sm:$0xff]
          %v3235 = vlaneseq
          %v3236 = vshrl.u32 %v3235, 7
          %v3237 = vsub.s32 0, %v3236
          %v3238 = vrot.slane %v3233, %v3237
          %v3239 = vmul.f32 %v3238, %v3234
          %v3240 = vmul.f32 %v3238, %v2930
          %v3241 = vmul.f32 %v3238, %v2626
          %v3242 = vmul.f32 %v3238, %v2322
          %v3243 = vmul.f32 %v3238, %v2018
          %v3244 = vmul.f32 %v3238, %v1714
          %v3245 = vmul.f32 %v3238, %v1410
          %v3246 = vmul.f32 %v3238, %v1016
          %v3247 = vmul.f32 %v3238, %v1017
          %v3248 = vmul.f32 %v3238, %v1018
          %v3249 = vmul.f32 %v3238, %v1019
          %v3250 = vmul.f32 %v3238, %v1020
          %v3251 = vmul.f32 %v3238, %v1021
          %v3252 = vmul.f32 %v3238, %v1022
          %v3253 = vmul.f32 %v3238, %v1023
          %v3254 = vmul.f32 %v3238, %v1024
          %v3255 = vadd.f32 %v3217, %v3239
          %v3256 = vadd.f32 %v3218, %v3240
          %v3257 = vadd.f32 %v3219, %v3241
          %v3258 = vadd.f32 %v3220, %v3242
          %v3259 = vadd.f32 %v3221, %v3243
          %v3260 = vadd.f32 %v3222, %v3244
          %v3261 = vadd.f32 %v3223, %v3245
          %v3262 = vadd.f32 %v3224, %v3246
          %v3263 = vadd.f32 %v3225, %v3247
          %v3264 = vadd.f32 %v3226, %v3248
          %v3265 = vadd.f32 %v3227, %v3249
          %v3266 = vadd.f32 %v3228, %v3250
          %v3267 = vadd.f32 %v3229, %v3251
          %v3268 = vadd.f32 %v3230, %v3252
          %v3269 = vadd.f32 %v3231, %v3253
          %v3270 = vadd.f32 %v3232, %v3254
          %v3271 = vld [vmem:[#allocation9 + $0x3c] sm:$0x1]
          %v3272 = vld [vmem:[#allocation2 + $0x4] sm:$0xff]
          %v3273 = vlaneseq
          %v3274 = vshrl.u32 %v3273, 7
          %v3275 = vsub.s32 0, %v3274
          %v3276 = vrot.slane %v3271, %v3275
          %v3277 = vmul.f32 %v3276, %v3272
          %v3278 = vmul.f32 %v3276, %v2968
          %v3279 = vmul.f32 %v3276, %v2664
          %v3280 = vmul.f32 %v3276, %v2360
          %v3281 = vmul.f32 %v3276, %v2056
          %v3282 = vmul.f32 %v3276, %v1752
          %v3283 = vmul.f32 %v3276, %v1448
          %v3284 = vmul.f32 %v3276, %v1069
          %v3285 = vmul.f32 %v3276, %v1070
          %v3286 = vmul.f32 %v3276, %v1071
          %v3287 = vmul.f32 %v3276, %v1072
          %v3288 = vmul.f32 %v3276, %v1073
          %v3289 = vmul.f32 %v3276, %v1074
          %v3290 = vmul.f32 %v3276, %v1075
          %v3291 = vmul.f32 %v3276, %v1076
          %v3292 = vmul.f32 %v3276, %v1077
          %v3293 = vadd.f32 %v3255, %v3277
          %v3294 = vadd.f32 %v3256, %v3278
          %v3295 = vadd.f32 %v3257, %v3279
          %v3296 = vadd.f32 %v3258, %v3280
          %v3297 = vadd.f32 %v3259, %v3281
          %v3298 = vadd.f32 %v3260, %v3282
          %v3299 = vadd.f32 %v3261, %v3283
          %v3300 = vadd.f32 %v3262, %v3284
          %v3301 = vadd.f32 %v3263, %v3285
          %v3302 = vadd.f32 %v3264, %v3286
          %v3303 = vadd.f32 %v3265, %v3287
          %v3304 = vadd.f32 %v3266, %v3288
          %v3305 = vadd.f32 %v3267, %v3289
          %v3306 = vadd.f32 %v3268, %v3290
          %v3307 = vadd.f32 %v3269, %v3291
          %v3308 = vadd.f32 %v3270, %v3292
          %v3309 = vld [vmem:[#allocation9 + $0x3d] sm:$0x1]
          %v3310 = vld [vmem:[#allocation2 + $0x3] sm:$0xff]
          %v3311 = vlaneseq
          %v3312 = vshrl.u32 %v3311, 7
          %v3313 = vsub.s32 0, %v3312
          %v3314 = vrot.slane %v3309, %v3313
          %v3315 = vmul.f32 %v3314, %v3310
          %v3316 = vmul.f32 %v3314, %v3006
          %v3317 = vmul.f32 %v3314, %v2702
          %v3318 = vmul.f32 %v3314, %v2398
          %v3319 = vmul.f32 %v3314, %v2094
          %v3320 = vmul.f32 %v3314, %v1790
          %v3321 = vmul.f32 %v3314, %v1486
          %v3322 = vmul.f32 %v3314, %v1122
          %v3323 = vmul.f32 %v3314, %v1123
          %v3324 = vmul.f32 %v3314, %v1124
          %v3325 = vmul.f32 %v3314, %v1125
          %v3326 = vmul.f32 %v3314, %v1126
          %v3327 = vmul.f32 %v3314, %v1127
          %v3328 = vmul.f32 %v3314, %v1128
          %v3329 = vmul.f32 %v3314, %v1129
          %v3330 = vmul.f32 %v3314, %v1130
          %v3331 = vadd.f32 %v3293, %v3315
          %v3332 = vadd.f32 %v3294, %v3316
          %v3333 = vadd.f32 %v3295, %v3317
          %v3334 = vadd.f32 %v3296, %v3318
          %v3335 = vadd.f32 %v3297, %v3319
          %v3336 = vadd.f32 %v3298, %v3320
          %v3337 = vadd.f32 %v3299, %v3321
          %v3338 = vadd.f32 %v3300, %v3322
          %v3339 = vadd.f32 %v3301, %v3323
          %v3340 = vadd.f32 %v3302, %v3324
          %v3341 = vadd.f32 %v3303, %v3325
          %v3342 = vadd.f32 %v3304, %v3326
          %v3343 = vadd.f32 %v3305, %v3327
          %v3344 = vadd.f32 %v3306, %v3328
          %v3345 = vadd.f32 %v3307, %v3329
          %v3346 = vadd.f32 %v3308, %v3330
          %v3347 = vld [vmem:[#allocation9 + $0x3e] sm:$0x1]
          %v3348 = vld [vmem:[#allocation2 + $0x2] sm:$0xff]
          %v3349 = vlaneseq
          %v3350 = vshrl.u32 %v3349, 7
          %v3351 = vsub.s32 0, %v3350
          %v3352 = vrot.slane %v3347, %v3351
          %v3353 = vmul.f32 %v3352, %v3348
          %v3354 = vmul.f32 %v3352, %v3044
          %v3355 = vmul.f32 %v3352, %v2740
          %v3356 = vmul.f32 %v3352, %v2436
          %v3357 = vmul.f32 %v3352, %v2132
          %v3358 = vmul.f32 %v3352, %v1828
          %v3359 = vmul.f32 %v3352, %v1524
          %v3360 = vmul.f32 %v3352, %v1175
          %v3361 = vmul.f32 %v3352, %v1176
          %v3362 = vmul.f32 %v3352, %v1177
          %v3363 = vmul.f32 %v3352, %v1178
          %v3364 = vmul.f32 %v3352, %v1179
          %v3365 = vmul.f32 %v3352, %v1180
          %v3366 = vmul.f32 %v3352, %v1181
          %v3367 = vmul.f32 %v3352, %v1182
          %v3368 = vmul.f32 %v3352, %v1183
          %v3369 = vadd.f32 %v3331, %v3353
          %v3370 = vadd.f32 %v3332, %v3354
          %v3371 = vadd.f32 %v3333, %v3355
          %v3372 = vadd.f32 %v3334, %v3356
          %v3373 = vadd.f32 %v3335, %v3357
          %v3374 = vadd.f32 %v3336, %v3358
          %v3375 = vadd.f32 %v3337, %v3359
          %v3376 = vadd.f32 %v3338, %v3360
          %v3377 = vadd.f32 %v3339, %v3361
          %v3378 = vadd.f32 %v3340, %v3362
          %v3379 = vadd.f32 %v3341, %v3363
          %v3380 = vadd.f32 %v3342, %v3364
          %v3381 = vadd.f32 %v3343, %v3365
          %v3382 = vadd.f32 %v3344, %v3366
          %v3383 = vadd.f32 %v3345, %v3367
          %v3384 = vadd.f32 %v3346, %v3368
          %v3385 = vld [vmem:[#allocation9 + $0x3f] sm:$0x1]
          %v3386 = vld [vmem:[#allocation2 + $0x1] sm:$0xff]
          %v3387 = vlaneseq
          %v3388 = vshrl.u32 %v3387, 7
          %v3389 = vsub.s32 0, %v3388
          %v3390 = vrot.slane %v3385, %v3389
          %v3391 = vmul.f32 %v3390, %v3386
          %v3392 = vmul.f32 %v3390, %v3082
          %v3393 = vmul.f32 %v3390, %v2778
          %v3394 = vmul.f32 %v3390, %v2474
          %v3395 = vmul.f32 %v3390, %v2170
          %v3396 = vmul.f32 %v3390, %v1866
          %v3397 = vmul.f32 %v3390, %v1562
          %v3398 = vmul.f32 %v3390, %v1228
          %v3399 = vmul.f32 %v3390, %v1229
          %v3400 = vmul.f32 %v3390, %v1230
          %v3401 = vmul.f32 %v3390, %v1231
          %v3402 = vmul.f32 %v3390, %v1232
          %v3403 = vmul.f32 %v3390, %v1233
          %v3404 = vmul.f32 %v3390, %v1234
          %v3405 = vmul.f32 %v3390, %v1235
          %v3406 = vmul.f32 %v3390, %v1236
          %v3407 = vadd.f32 %v3369, %v3391
          %v3408 = vadd.f32 %v3370, %v3392
          %v3409 = vadd.f32 %v3371, %v3393
          %v3410 = vadd.f32 %v3372, %v3394
          %v3411 = vadd.f32 %v3373, %v3395
          %v3412 = vadd.f32 %v3374, %v3396
          %v3413 = vadd.f32 %v3375, %v3397
          %v3414 = vadd.f32 %v3376, %v3398
          %v3415 = vadd.f32 %v3377, %v3399
          %v3416 = vadd.f32 %v3378, %v3400
          %v3417 = vadd.f32 %v3379, %v3401
          %v3418 = vadd.f32 %v3380, %v3402
          %v3419 = vadd.f32 %v3381, %v3403
          %v3420 = vadd.f32 %v3382, %v3404
          %v3421 = vadd.f32 %v3383, %v3405
          %v3422 = vadd.f32 %v3384, %v3406
          %v3423 = vmul.f32 %v3407, %v3407
          %v3424 = vmul.f32 %v3408, %v3408
          %v3425 = vmul.f32 %v3409, %v3409
          %v3426 = vmul.f32 %v3410, %v3410
          %v3427 = vmul.f32 %v3411, %v3411
          %v3428 = vmul.f32 %v3412, %v3412
          %v3429 = vmul.f32 %v3413, %v3413
          %v3430 = vmul.f32 %v3414, %v3414
          %v3431 = vmul.f32 %v3415, %v3415
          %v3432 = vmul.f32 %v3416, %v3416
          %v3433 = vmul.f32 %v3417, %v3417
          %v3434 = vmul.f32 %v3418, %v3418
          %v3435 = vmul.f32 %v3419, %v3419
          %v3436 = vmul.f32 %v3420, %v3420
          %v3437 = vmul.f32 %v3421, %v3421
          %v3438 = vmul.f32 %v3422, %v3422
          %v3439 = vmul.f32 %v3407, %v3423
          %v3440 = vmul.f32 %v3408, %v3424
          %v3441 = vmul.f32 %v3409, %v3425
          %v3442 = vmul.f32 %v3410, %v3426
          %v3443 = vmul.f32 %v3411, %v3427
          %v3444 = vmul.f32 %v3412, %v3428
          %v3445 = vmul.f32 %v3413, %v3429
          %v3446 = vmul.f32 %v3414, %v3430
          %v3447 = vmul.f32 %v3415, %v3431
          %v3448 = vmul.f32 %v3416, %v3432
          %v3449 = vmul.f32 %v3417, %v3433
          %v3450 = vmul.f32 %v3418, %v3434
          %v3451 = vmul.f32 %v3419, %v3435
          %v3452 = vmul.f32 %v3420, %v3436
          %v3453 = vmul.f32 %v3421, %v3437
          %v3454 = vmul.f32 %v3422, %v3438
          %v3455 = vmul.f32 %v3439, 0.044715
          %v3456 = vmul.f32 %v3440, 0.044715
          %v3457 = vmul.f32 %v3441, 0.044715
          %v3458 = vmul.f32 %v3442, 0.044715
          %v3459 = vmul.f32 %v3443, 0.044715
          %v3460 = vmul.f32 %v3444, 0.044715
          %v3461 = vmul.f32 %v3445, 0.044715
          %v3462 = vmul.f32 %v3446, 0.044715
          %v3463 = vmul.f32 %v3447, 0.044715
          %v3464 = vmul.f32 %v3448, 0.044715
          %v3465 = vmul.f32 %v3449, 0.044715
          %v3466 = vmul.f32 %v3450, 0.044715
          %v3467 = vmul.f32 %v3451, 0.044715
          %v3468 = vmul.f32 %v3452, 0.044715
          %v3469 = vmul.f32 %v3453, 0.044715
          %v3470 = vmul.f32 %v3454, 0.044715
          %v3471 = vadd.f32 %v3407, %v3455
          %v3472 = vadd.f32 %v3408, %v3456
          %v3473 = vadd.f32 %v3409, %v3457
          %v3474 = vadd.f32 %v3410, %v3458
          %v3475 = vadd.f32 %v3411, %v3459
          %v3476 = vadd.f32 %v3412, %v3460
          %v3477 = vadd.f32 %v3413, %v3461
          %v3478 = vadd.f32 %v3414, %v3462
          %v3479 = vadd.f32 %v3415, %v3463
          %v3480 = vadd.f32 %v3416, %v3464
          %v3481 = vadd.f32 %v3417, %v3465
          %v3482 = vadd.f32 %v3418, %v3466
          %v3483 = vadd.f32 %v3419, %v3467
          %v3484 = vadd.f32 %v3420, %v3468
          %v3485 = vadd.f32 %v3421, %v3469
          %v3486 = vadd.f32 %v3422, %v3470
          %v3487 = vmul.f32 %v3471, 0.7978846
          %v3488 = vmul.f32 %v3472, 0.7978846
          %v3489 = vmul.f32 %v3473, 0.7978846
          %v3490 = vmul.f32 %v3474, 0.7978846
          %v3491 = vmul.f32 %v3475, 0.7978846
          %v3492 = vmul.f32 %v3476, 0.7978846
          %v3493 = vmul.f32 %v3477, 0.7978846
          %v3494 = vmul.f32 %v3478, 0.7978846
          %v3495 = vmul.f32 %v3479, 0.7978846
          %v3496 = vmul.f32 %v3480, 0.7978846
          %v3497 = vmul.f32 %v3481, 0.7978846
          %v3498 = vmul.f32 %v3482, 0.7978846
          %v3499 = vmul.f32 %v3483, 0.7978846
          %v3500 = vmul.f32 %v3484, 0.7978846
          %v3501 = vmul.f32 %v3485, 0.7978846
          %v3502 = vmul.f32 %v3486, 0.7978846
          %v3503 = vtanh.pop %v3487
          %v3504 = vtanh.pop %v3488
          %v3505 = vtanh.pop %v3489
          %v3506 = vtanh.pop %v3490
          %v3507 = vtanh.pop %v3491
          %v3508 = vtanh.pop %v3492
          %v3509 = vtanh.pop %v3493
          %v3510 = vtanh.pop %v3494
          %v3511 = vtanh.pop %v3495
          %v3512 = vtanh.pop %v3496
          %v3513 = vtanh.pop %v3497
          %v3514 = vtanh.pop %v3498
          %v3515 = vtanh.pop %v3499
          %v3516 = vtanh.pop %v3500
          %v3517 = vtanh.pop %v3501
          %v3518 = vtanh.pop %v3502
          %v3519 = vadd.f32 %v3503, 1.0
          %v3520 = vadd.f32 %v3504, 1.0
          %v3521 = vadd.f32 %v3505, 1.0
          %v3522 = vadd.f32 %v3506, 1.0
          %v3523 = vadd.f32 %v3507, 1.0
          %v3524 = vadd.f32 %v3508, 1.0
          %v3525 = vadd.f32 %v3509, 1.0
          %v3526 = vadd.f32 %v3510, 1.0
          %v3527 = vadd.f32 %v3511, 1.0
          %v3528 = vadd.f32 %v3512, 1.0
          %v3529 = vadd.f32 %v3513, 1.0
          %v3530 = vadd.f32 %v3514, 1.0
          %v3531 = vadd.f32 %v3515, 1.0
          %v3532 = vadd.f32 %v3516, 1.0
          %v3533 = vadd.f32 %v3517, 1.0
          %v3534 = vadd.f32 %v3518, 1.0
          %v3535 = vmul.f32 %v3519, 0.5
          %v3536 = vmul.f32 %v3520, 0.5
          %v3537 = vmul.f32 %v3521, 0.5
          %v3538 = vmul.f32 %v3522, 0.5
          %v3539 = vmul.f32 %v3523, 0.5
          %v3540 = vmul.f32 %v3524, 0.5
          %v3541 = vmul.f32 %v3525, 0.5
          %v3542 = vmul.f32 %v3526, 0.5
          %v3543 = vmul.f32 %v3527, 0.5
          %v3544 = vmul.f32 %v3528, 0.5
          %v3545 = vmul.f32 %v3529, 0.5
          %v3546 = vmul.f32 %v3530, 0.5
          %v3547 = vmul.f32 %v3531, 0.5
          %v3548 = vmul.f32 %v3532, 0.5
          %v3549 = vmul.f32 %v3533, 0.5
          %v3550 = vmul.f32 %v3534, 0.5
          %v3551 = vmul.f32 %v3407, %v3535
          %v3552 = vmul.f32 %v3408, %v3536
          %v3553 = vmul.f32 %v3409, %v3537
          %v3554 = vmul.f32 %v3410, %v3538
          %v3555 = vmul.f32 %v3411, %v3539
          %v3556 = vmul.f32 %v3412, %v3540
          %v3557 = vmul.f32 %v3413, %v3541
          %v3558 = vmul.f32 %v3414, %v3542
          %v3559 = vmul.f32 %v3415, %v3543
          %v3560 = vmul.f32 %v3416, %v3544
          %v3561 = vmul.f32 %v3417, %v3545
          %v3562 = vmul.f32 %v3418, %v3546
          %v3563 = vmul.f32 %v3419, %v3547
          %v3564 = vmul.f32 %v3420, %v3548
          %v3565 = vmul.f32 %v3421, %v3549
          %v3566 = vmul.f32 %v3422, %v3550
          %v3567 = vld [vmem:[#allocation10] sm:$0xff]
          %v3568 = vld [vmem:[#allocation10 + $0x8] sm:$0xff]
          %v3569 = vld [vmem:[#allocation10 + $0x10] sm:$0xff]
          %v3570 = vld [vmem:[#allocation10 + $0x18] sm:$0xff]
          %v3571 = vld [vmem:[#allocation10 + $0x20] sm:$0xff]
          %v3572 = vld [vmem:[#allocation10 + $0x28] sm:$0xff]
          %v3573 = vld [vmem:[#allocation10 + $0x30] sm:$0xff]
          %v3574 = vld [vmem:[#allocation10 + $0x38] sm:$0xff]
          %v3575 = vld [vmem:[#allocation10 + $0x40] sm:$0xff]
          %v3576 = vld [vmem:[#allocation10 + $0x48] sm:$0xff]
          %v3577 = vld [vmem:[#allocation10 + $0x50] sm:$0xff]
          %v3578 = vld [vmem:[#allocation10 + $0x58] sm:$0xff]
          %v3579 = vld [vmem:[#allocation10 + $0x60] sm:$0xff]
          %v3580 = vld [vmem:[#allocation10 + $0x68] sm:$0xff]
          %v3581 = vld [vmem:[#allocation10 + $0x70] sm:$0xff]
          %v3582 = vld [vmem:[#allocation10 + $0x78] sm:$0xff]
          %v3583 = vld [vmem:[#allocation10 + $0x80] sm:$0xff]
          %v3584 = vld [vmem:[#allocation10 + $0x88] sm:$0xff]
          %v3585 = vld [vmem:[#allocation10 + $0x90] sm:$0xff]
          %v3586 = vld [vmem:[#allocation10 + $0x98] sm:$0xff]
          %v3587 = vld [vmem:[#allocation10 + $0xa0] sm:$0xff]
          %v3588 = vld [vmem:[#allocation10 + $0xa8] sm:$0xff]
          %v3589 = vld [vmem:[#allocation10 + $0xb0] sm:$0xff]
          %v3590 = vld [vmem:[#allocation10 + $0xb8] sm:$0xff]
          %v3591 = vld [vmem:[#allocation10 + $0xc0] sm:$0xff]
          %v3592 = vld [vmem:[#allocation10 + $0xc8] sm:$0xff]
          %v3593 = vld [vmem:[#allocation10 + $0xd0] sm:$0xff]
          %v3594 = vld [vmem:[#allocation10 + $0xd8] sm:$0xff]
          %v3595 = vld [vmem:[#allocation10 + $0xe0] sm:$0xff]
          %v3596 = vld [vmem:[#allocation10 + $0xe8] sm:$0xff]
          %v3597 = vld [vmem:[#allocation10 + $0xf0] sm:$0xff]
          %v3598 = vld [vmem:[#allocation10 + $0xf8] sm:$0xff]
          %v3599 = vld [vmem:[%s6] sm:$0x3]
          %v3601 = vlaneseq
          %v3602 = vshrl.u32 %v3601, 7
          %v3603 = vsub.s32 0, %v3602
          %v3604 = vrot.slane %v3599, %v3603
          %v3605 = vlaneseq
          %v3606 = vshrl.u32 %v3605, 7
          %v3607 = vsub.s32 1, %v3606
          %v3608 = vrot.slane %v3599, %v3607
          %3611 = vmatprep.subr.mxu0 %v3598
          %3612 = vmatpush1.msra.mxu0 %v3597
          %3613 = vmatprep.subr.mxu0 %v3596
          %3614 = vmatpush1.msra.mxu0 %v3595
          %3615 = vmatprep.subr.mxu0 %v3594
          %3616 = vmatpush1.msra.mxu0 %v3593
          %3617 = vmatprep.subr.mxu0 %v3592
          %3618 = vmatpush1.msra.mxu0 %v3591
          %3619 = vmatprep.subr.mxu0 %v3590
          %3620 = vmatpush1.msra.mxu0 %v3589
          %3621 = vmatprep.subr.mxu0 %v3588
          %3622 = vmatpush1.msra.mxu0 %v3587
          %3623 = vmatprep.subr.mxu0 %v3586
          %3624 = vmatpush1.msra.mxu0 %v3585
          %3625 = vmatprep.subr.mxu0 %v3584
          %3626 = vmatpush1.msra.mxu0 %v3583
          %3627 = vmatprep.subr.mxu0 %v3582
          %3628 = vmatpush1.msra.mxu0 %v3581
          %3629 = vmatprep.subr.mxu0 %v3580
          %3630 = vmatpush1.msra.mxu0 %v3579
          %3631 = vmatprep.subr.mxu0 %v3578
          %3632 = vmatpush1.msra.mxu0 %v3577
          %3633 = vmatprep.subr.mxu0 %v3576
          %3634 = vmatpush1.msra.mxu0 %v3575
          %3635 = vmatprep.subr.mxu0 %v3574
          %3636 = vmatpush1.msra.mxu0 %v3573
          %3637 = vmatprep.subr.mxu0 %v3572
          %3638 = vmatpush1.msra.mxu0 %v3571
          %3639 = vmatprep.subr.mxu0 %v3570
          %3640 = vmatpush1.msra.mxu0 %v3569
          %3641 = vmatprep.subr.mxu0 %v3568
          %3642 = vmatpush1.msra.mxu0 %v3567
          %3643 = vmatprep.subr.mxu0 0.0
          %3644 = vmatpush2.msra.mxu0 0.0
          %3645 = vmatprep.subr.mxu0 0.0
          %3646 = vmatpush2.msra.mxu0 0.0
          %3647 = vmatprep.subr.mxu0 0.0
          %3648 = vmatpush2.msra.mxu0 0.0
          %3649 = vmatprep.subr.mxu0 0.0
          %3650 = vmatpush2.msra.mxu0 0.0
          %3651 = vmatprep.subr.mxu0 0.0
          %3652 = vmatpush2.msra.mxu0 0.0
          %3653 = vmatprep.subr.mxu0 0.0
          %3654 = vmatpush2.msra.mxu0 0.0
          %3655 = vmatprep.subr.mxu0 0.0
          %3656 = vmatpush2.msra.mxu0 0.0
          %3657 = vmatprep.subr.mxu0 0.0
          %3658 = vmatpush2.msra.mxu0 0.0
          %3659 = vmatprep.subr.mxu0 0.0
          %3660 = vmatpush2.msra.mxu0 0.0
          %3661 = vmatprep.subr.mxu0 0.0
          %3662 = vmatpush2.msra.mxu0 0.0
          %3663 = vmatprep.subr.mxu0 0.0
          %3664 = vmatpush2.msra.mxu0 0.0
          %3665 = vmatprep.subr.mxu0 0.0
          %3666 = vmatpush2.msra.mxu0 0.0
          %3667 = vmatprep.subr.mxu0 0.0
          %3668 = vmatpush2.msra.mxu0 0.0
          %3669 = vmatprep.subr.mxu0 0.0
          %3670 = vmatpush2.msra.mxu0 0.0
          %3671 = vmatprep.subr.mxu0 0.0
          %3672 = vmatpush2.msra.mxu0 0.0
          %3673 = vmatprep.subr.mxu0 0.0
          %3674 = vmatpush2.msra.mxu0 0.0
          %3675 = vmatprep.mubr.f32.mxu0 0.0
          %3676 = vmatmul.mubr.f32.gmra.mxu0 %v3551
          %v3677 = vpop.f32.mrf.mxu0
          %v3678 = vadd.f32 %v3604, %v3677
          %v3679 = vpop.f32.mrf.mxu0
          %v3680 = vadd.f32 %v3608, %v3679
          %3681 = vmatprep.mubr.f32.mxu0 0.0
          %3682 = vmatmul.mubr.f32.gmra.mxu0 %v3552
          %v3683 = vpop.f32.mrf.mxu0
          %v3684 = vadd.f32 %v3604, %v3683
          %v3685 = vpop.f32.mrf.mxu0
          %v3686 = vadd.f32 %v3608, %v3685
          %3687 = vmatprep.mubr.f32.mxu0 0.0
          %3688 = vmatmul.mubr.f32.gmra.mxu0 %v3553
          %v3689 = vpop.f32.mrf.mxu0
          %v3690 = vadd.f32 %v3604, %v3689
          %v3691 = vpop.f32.mrf.mxu0
          %v3692 = vadd.f32 %v3608, %v3691
          %3693 = vmatprep.mubr.f32.mxu0 0.0
          %3694 = vmatmul.mubr.f32.gmra.mxu0 %v3554
          %v3695 = vpop.f32.mrf.mxu0
          %v3696 = vadd.f32 %v3604, %v3695
          %v3697 = vpop.f32.mrf.mxu0
          %v3698 = vadd.f32 %v3608, %v3697
          %3699 = vmatprep.mubr.f32.mxu0 0.0
          %3700 = vmatmul.mubr.f32.gmra.mxu0 %v3555
          %v3701 = vpop.f32.mrf.mxu0
          %v3702 = vadd.f32 %v3604, %v3701
          %v3703 = vpop.f32.mrf.mxu0
          %v3704 = vadd.f32 %v3608, %v3703
          %3705 = vmatprep.mubr.f32.mxu0 0.0
          %3706 = vmatmul.mubr.f32.gmra.mxu0 %v3556
          %v3707 = vpop.f32.mrf.mxu0
          %v3708 = vadd.f32 %v3604, %v3707
          %v3709 = vpop.f32.mrf.mxu0
          %v3710 = vadd.f32 %v3608, %v3709
          %3711 = vmatprep.mubr.f32.mxu0 0.0
          %3712 = vmatmul.mubr.f32.gmra.mxu0 %v3557
          %v3713 = vpop.f32.mrf.mxu0
          %v3714 = vadd.f32 %v3604, %v3713
          %v3715 = vpop.f32.mrf.mxu0
          %v3716 = vadd.f32 %v3608, %v3715
          %3717 = vmatprep.mubr.f32.mxu0 0.0
          %3718 = vmatmul.mubr.f32.gmra.mxu0 %v3558
          %v3719 = vpop.f32.mrf.mxu0
          %v3720 = vadd.f32 %v3604, %v3719
          %v3721 = vpop.f32.mrf.mxu0
          %v3722 = vadd.f32 %v3608, %v3721
          %3723 = vmatprep.mubr.f32.mxu0 0.0
          %3724 = vmatmul.mubr.f32.gmra.mxu0 %v3559
          %v3725 = vpop.f32.mrf.mxu0
          %v3726 = vadd.f32 %v3604, %v3725
          %v3727 = vpop.f32.mrf.mxu0
          %v3728 = vadd.f32 %v3608, %v3727
          %3729 = vmatprep.mubr.f32.mxu0 0.0
          %3730 = vmatmul.mubr.f32.gmra.mxu0 %v3560
          %v3731 = vpop.f32.mrf.mxu0
          %v3732 = vadd.f32 %v3604, %v3731
          %v3733 = vpop.f32.mrf.mxu0
          %v3734 = vadd.f32 %v3608, %v3733
          %3735 = vmatprep.mubr.f32.mxu0 0.0
          %3736 = vmatmul.mubr.f32.gmra.mxu0 %v3561
          %v3737 = vpop.f32.mrf.mxu0
          %v3738 = vadd.f32 %v3604, %v3737
          %v3739 = vpop.f32.mrf.mxu0
          %v3740 = vadd.f32 %v3608, %v3739
          %3741 = vmatprep.mubr.f32.mxu0 0.0
          %3742 = vmatmul.mubr.f32.gmra.mxu0 %v3562
          %v3743 = vpop.f32.mrf.mxu0
          %v3744 = vadd.f32 %v3604, %v3743
          %v3745 = vpop.f32.mrf.mxu0
          %v3746 = vadd.f32 %v3608, %v3745
          %3747 = vmatprep.mubr.f32.mxu0 0.0
          %3748 = vmatmul.mubr.f32.gmra.mxu0 %v3563
          %v3749 = vpop.f32.mrf.mxu0
          %v3750 = vadd.f32 %v3604, %v3749
          %v3751 = vpop.f32.mrf.mxu0
          %v3752 = vadd.f32 %v3608, %v3751
          %3753 = vmatprep.mubr.f32.mxu0 0.0
          %3754 = vmatmul.mubr.f32.gmra.mxu0 %v3564
          %v3755 = vpop.f32.mrf.mxu0
          %v3756 = vadd.f32 %v3604, %v3755
          %v3757 = vpop.f32.mrf.mxu0
          %v3758 = vadd.f32 %v3608, %v3757
          %3759 = vmatprep.mubr.f32.mxu0 0.0
          %3760 = vmatmul.mubr.f32.gmra.mxu0 %v3565
          %v3761 = vpop.f32.mrf.mxu0
          %v3762 = vadd.f32 %v3604, %v3761
          %v3763 = vpop.f32.mrf.mxu0
          %v3764 = vadd.f32 %v3608, %v3763
          %3765 = vmatprep.mubr.f32.mxu0 0.0
          %3766 = vmatmul.mubr.f32.gmra.mxu0 %v3566
          %v3767 = vpop.f32.mrf.mxu0
          %v3768 = vadd.f32 %v3604, %v3767
          %v3769 = vpop.f32.mrf.mxu0
          %v3770 = vadd.f32 %v3608, %v3769
          %3771 = vdwg.mxu0
          %v3772 = vxor.u32 %v3680, 2147483648
          %v3773 = vxor.u32 %v3686, 2147483648
          %v3774 = vxor.u32 %v3692, 2147483648
          %v3775 = vxor.u32 %v3698, 2147483648
          %v3776 = vxor.u32 %v3704, 2147483648
          %v3777 = vxor.u32 %v3710, 2147483648
          %v3778 = vxor.u32 %v3716, 2147483648
          %v3779 = vxor.u32 %v3722, 2147483648
          %v3780 = vxor.u32 %v3728, 2147483648
          %v3781 = vxor.u32 %v3734, 2147483648
          %v3782 = vxor.u32 %v3740, 2147483648
          %v3783 = vxor.u32 %v3746, 2147483648
          %v3784 = vxor.u32 %v3752, 2147483648
          %v3785 = vxor.u32 %v3758, 2147483648
          %v3786 = vxor.u32 %v3764, 2147483648
          %v3787 = vxor.u32 %v3770, 2147483648
          %v3788 = vmul.f32 %v3772, 1.442695
          %v3789 = vpow.pop %v3788
          %v3790 = vmul.f32 %v3773, 1.442695
          %v3791 = vpow.pop %v3790
          %v3792 = vmul.f32 %v3774, 1.442695
          %v3793 = vpow.pop %v3792
          %v3794 = vmul.f32 %v3775, 1.442695
          %v3795 = vpow.pop %v3794
          %v3796 = vmul.f32 %v3776, 1.442695
          %v3797 = vpow.pop %v3796
          %v3798 = vmul.f32 %v3777, 1.442695
          %v3799 = vpow.pop %v3798
          %v3800 = vmul.f32 %v3778, 1.442695
          %v3801 = vpow.pop %v3800
          %v3802 = vmul.f32 %v3779, 1.442695
          %v3803 = vpow.pop %v3802
          %v3804 = vmul.f32 %v3780, 1.442695
          %v3805 = vpow.pop %v3804
          %v3806 = vmul.f32 %v3781, 1.442695
          %v3807 = vpow.pop %v3806
          %v3808 = vmul.f32 %v3782, 1.442695
          %v3809 = vpow.pop %v3808
          %v3810 = vmul.f32 %v3783, 1.442695
          %v3811 = vpow.pop %v3810
          %v3812 = vmul.f32 %v3784, 1.442695
          %v3813 = vpow.pop %v3812
          %v3814 = vmul.f32 %v3785, 1.442695
          %v3815 = vpow.pop %v3814
          %v3816 = vmul.f32 %v3786, 1.442695
          %v3817 = vpow.pop %v3816
          %v3818 = vmul.f32 %v3787, 1.442695
          %v3819 = vpow.pop %v3818
          %v3820 = vadd.f32 %v3789, 1.0
          %v3821 = vadd.f32 %v3791, 1.0
          %v3822 = vadd.f32 %v3793, 1.0
          %v3823 = vadd.f32 %v3795, 1.0
          %v3824 = vadd.f32 %v3797, 1.0
          %v3825 = vadd.f32 %v3799, 1.0
          %v3826 = vadd.f32 %v3801, 1.0
          %v3827 = vadd.f32 %v3803, 1.0
          %v3828 = vadd.f32 %v3805, 1.0
          %v3829 = vadd.f32 %v3807, 1.0
          %v3830 = vadd.f32 %v3809, 1.0
          %v3831 = vadd.f32 %v3811, 1.0
          %v3832 = vadd.f32 %v3813, 1.0
          %v3833 = vadd.f32 %v3815, 1.0
          %v3834 = vadd.f32 %v3817, 1.0
          %v3835 = vadd.f32 %v3819, 1.0
          %v3836 = vrcp.pop %v3820
          %v3837 = vmul.f32 1.0, %v3836
          %v3838 = vrcp.pop %v3821
          %v3839 = vmul.f32 1.0, %v3838
          %v3840 = vrcp.pop %v3822
          %v3841 = vmul.f32 1.0, %v3840
          %v3842 = vrcp.pop %v3823
          %v3843 = vmul.f32 1.0, %v3842
          %v3844 = vrcp.pop %v3824
          %v3845 = vmul.f32 1.0, %v3844
          %v3846 = vrcp.pop %v3825
          %v3847 = vmul.f32 1.0, %v3846
          %v3848 = vrcp.pop %v3826
          %v3849 = vmul.f32 1.0, %v3848
          %v3850 = vrcp.pop %v3827
          %v3851 = vmul.f32 1.0, %v3850
          %v3852 = vrcp.pop %v3828
          %v3853 = vmul.f32 1.0, %v3852
          %v3854 = vrcp.pop %v3829
          %v3855 = vmul.f32 1.0, %v3854
          %v3856 = vrcp.pop %v3830
          %v3857 = vmul.f32 1.0, %v3856
          %v3858 = vrcp.pop %v3831
          %v3859 = vmul.f32 1.0, %v3858
          %v3860 = vrcp.pop %v3832
          %v3861 = vmul.f32 1.0, %v3860
          %v3862 = vrcp.pop %v3833
          %v3863 = vmul.f32 1.0, %v3862
          %v3864 = vrcp.pop %v3834
          %v3865 = vmul.f32 1.0, %v3864
          %v3866 = vrcp.pop %v3835
          %v3867 = vmul.f32 1.0, %v3866
          %v3868 = vmul.f32 %v3678, %v3837
          %v3869 = vmul.f32 %v3684, %v3839
          %v3870 = vmul.f32 %v3690, %v3841
          %v3871 = vmul.f32 %v3696, %v3843
          %v3872 = vmul.f32 %v3702, %v3845
          %v3873 = vmul.f32 %v3708, %v3847
          %v3874 = vmul.f32 %v3714, %v3849
          %v3875 = vmul.f32 %v3720, %v3851
          %v3876 = vmul.f32 %v3726, %v3853
          %v3877 = vmul.f32 %v3732, %v3855
          %v3878 = vmul.f32 %v3738, %v3857
          %v3879 = vmul.f32 %v3744, %v3859
          %v3880 = vmul.f32 %v3750, %v3861
          %v3881 = vmul.f32 %v3756, %v3863
          %v3882 = vmul.f32 %v3762, %v3865
          %v3883 = vmul.f32 %v3768, %v3867
          %v3884 = vadd.f32 %v574, %v3868
          %v3885 = vadd.f32 %v575, %v3869
          %v3886 = vadd.f32 %v576, %v3870
          %v3887 = vadd.f32 %v577, %v3871
          %v3888 = vadd.f32 %v578, %v3872
          %v3889 = vadd.f32 %v579, %v3873
          %v3890 = vadd.f32 %v580, %v3874
          %v3891 = vadd.f32 %v581, %v3875
          %v3892 = vadd.f32 %v582, %v3876
          %v3893 = vadd.f32 %v583, %v3877
          %v3894 = vadd.f32 %v584, %v3878
          %v3895 = vadd.f32 %v585, %v3879
          %v3896 = vadd.f32 %v586, %v3880
          %v3897 = vadd.f32 %v587, %v3881
          %v3898 = vadd.f32 %v588, %v3882
          %v3899 = vadd.f32 %v589, %v3883
          %3900 = vst [vmem:[%s560] sm:$0xff] %v3884
          %3901 = vst [vmem:[%s560 + $0x8] sm:$0xff] %v3885
          %3902 = vst [vmem:[%s560 + $0x10] sm:$0xff] %v3886
          %3903 = vst [vmem:[%s560 + $0x18] sm:$0xff] %v3887
          %3904 = vst [vmem:[%s560 + $0x20] sm:$0xff] %v3888
          %3905 = vst [vmem:[%s560 + $0x28] sm:$0xff] %v3889
          %3906 = vst [vmem:[%s560 + $0x30] sm:$0xff] %v3890
          %3907 = vst [vmem:[%s560 + $0x38] sm:$0xff] %v3891
          %3908 = vst [vmem:[%s560 + $0x40] sm:$0xff] %v3892
          %3909 = vst [vmem:[%s560 + $0x48] sm:$0xff] %v3893
          %3910 = vst [vmem:[%s560 + $0x50] sm:$0xff] %v3894
          %3911 = vst [vmem:[%s560 + $0x58] sm:$0xff] %v3895
          %3912 = vst [vmem:[%s560 + $0x60] sm:$0xff] %v3896
          %3913 = vst [vmem:[%s560 + $0x68] sm:$0xff] %v3897
          %3914 = vst [vmem:[%s560 + $0x70] sm:$0xff] %v3898
          %3915 = vst [vmem:[%s560 + $0x78] sm:$0xff] %v3899
          %v3916 = vld [vmem:[%s7] sm:$0x1]
          %v3917 = vmul.f32 %v3884, %v3884
          %v3918 = vmul.f32 %v3885, %v3885
          %v3919 = vmul.f32 %v3886, %v3886
          %v3920 = vmul.f32 %v3887, %v3887
          %v3921 = vmul.f32 %v3888, %v3888
          %v3922 = vmul.f32 %v3889, %v3889
          %v3923 = vmul.f32 %v3890, %v3890
          %v3924 = vmul.f32 %v3891, %v3891
          %v3925 = vmul.f32 %v3892, %v3892
          %v3926 = vmul.f32 %v3893, %v3893
          %v3927 = vmul.f32 %v3894, %v3894
          %v3928 = vmul.f32 %v3895, %v3895
          %v3929 = vmul.f32 %v3896, %v3896
          %v3930 = vmul.f32 %v3897, %v3897
          %v3931 = vmul.f32 %v3898, %v3898
          %v3932 = vmul.f32 %v3899, %v3899
          %3933 = vadd.xlane.f32.xlu0 %v3917
          %v3934 = vpop.xlane.xlu0 %3933
          %3935 = vadd.xlane.f32.xlu0 %v3918
          %v3936 = vpop.xlane.xlu0 %3935
          %3937 = vadd.xlane.f32.xlu0 %v3919
          %v3938 = vpop.xlane.xlu0 %3937
          %3939 = vadd.xlane.f32.xlu0 %v3920
          %v3940 = vpop.xlane.xlu0 %3939
          %3941 = vadd.xlane.f32.xlu0 %v3921
          %v3942 = vpop.xlane.xlu0 %3941
          %3943 = vadd.xlane.f32.xlu0 %v3922
          %v3944 = vpop.xlane.xlu0 %3943
          %3945 = vadd.xlane.f32.xlu0 %v3923
          %v3946 = vpop.xlane.xlu0 %3945
          %3947 = vadd.xlane.f32.xlu0 %v3924
          %v3948 = vpop.xlane.xlu0 %3947
          %3949 = vadd.xlane.f32.xlu0 %v3925
          %v3950 = vpop.xlane.xlu0 %3949
          %3951 = vadd.xlane.f32.xlu0 %v3926
          %v3952 = vpop.xlane.xlu0 %3951
          %3953 = vadd.xlane.f32.xlu0 %v3927
          %v3954 = vpop.xlane.xlu0 %3953
          %3955 = vadd.xlane.f32.xlu0 %v3928
          %v3956 = vpop.xlane.xlu0 %3955
          %3957 = vadd.xlane.f32.xlu0 %v3929
          %v3958 = vpop.xlane.xlu0 %3957
          %3959 = vadd.xlane.f32.xlu0 %v3930
          %v3960 = vpop.xlane.xlu0 %3959
          %3961 = vadd.xlane.f32.xlu0 %v3931
          %v3962 = vpop.xlane.xlu0 %3961
          %3963 = vadd.xlane.f32.xlu0 %v3932
          %v3964 = vpop.xlane.xlu0 %3963
          %v3965 = vmul.f32 %v3934, %v638
          %v3966 = vmul.f32 %v3936, %v638
          %v3967 = vmul.f32 %v3938, %v638
          %v3968 = vmul.f32 %v3940, %v638
          %v3969 = vmul.f32 %v3942, %v638
          %v3970 = vmul.f32 %v3944, %v638
          %v3971 = vmul.f32 %v3946, %v638
          %v3972 = vmul.f32 %v3948, %v638
          %v3973 = vmul.f32 %v3950, %v638
          %v3974 = vmul.f32 %v3952, %v638
          %v3975 = vmul.f32 %v3954, %v638
          %v3976 = vmul.f32 %v3956, %v638
          %v3977 = vmul.f32 %v3958, %v638
          %v3978 = vmul.f32 %v3960, %v638
          %v3979 = vmul.f32 %v3962, %v638
          %v3980 = vmul.f32 %v3964, %v638
          %v3981 = vadd.f32 %v3965, 1e-06
          %v3982 = vadd.f32 %v3966, 1e-06
          %v3983 = vadd.f32 %v3967, 1e-06
          %v3984 = vadd.f32 %v3968, 1e-06
          %v3985 = vadd.f32 %v3969, 1e-06
          %v3986 = vadd.f32 %v3970, 1e-06
          %v3987 = vadd.f32 %v3971, 1e-06
          %v3988 = vadd.f32 %v3972, 1e-06
          %v3989 = vadd.f32 %v3973, 1e-06
          %v3990 = vadd.f32 %v3974, 1e-06
          %v3991 = vadd.f32 %v3975, 1e-06
          %v3992 = vadd.f32 %v3976, 1e-06
          %v3993 = vadd.f32 %v3977, 1e-06
          %v3994 = vadd.f32 %v3978, 1e-06
          %v3995 = vadd.f32 %v3979, 1e-06
          %v3996 = vadd.f32 %v3980, 1e-06
          %v3997 = vrsqrt.pop %v3981
          %v3998 = vrsqrt.pop %v3982
          %v3999 = vrsqrt.pop %v3983
          %v4000 = vrsqrt.pop %v3984
          %v4001 = vrsqrt.pop %v3985
          %v4002 = vrsqrt.pop %v3986
          %v4003 = vrsqrt.pop %v3987
          %v4004 = vrsqrt.pop %v3988
          %v4005 = vrsqrt.pop %v3989
          %v4006 = vrsqrt.pop %v3990
          %v4007 = vrsqrt.pop %v3991
          %v4008 = vrsqrt.pop %v3992
          %v4009 = vrsqrt.pop %v3993
          %v4010 = vrsqrt.pop %v3994
          %v4011 = vrsqrt.pop %v3995
          %v4012 = vrsqrt.pop %v3996
          %v4013 = vmul.f32 %v3884, %v3997
          %v4014 = vmul.f32 %v3885, %v3998
          %v4015 = vmul.f32 %v3886, %v3999
          %v4016 = vmul.f32 %v3887, %v4000
          %v4017 = vmul.f32 %v3888, %v4001
          %v4018 = vmul.f32 %v3889, %v4002
          %v4019 = vmul.f32 %v3890, %v4003
          %v4020 = vmul.f32 %v3891, %v4004
          %v4021 = vmul.f32 %v3892, %v4005
          %v4022 = vmul.f32 %v3893, %v4006
          %v4023 = vmul.f32 %v3894, %v4007
          %v4024 = vmul.f32 %v3895, %v4008
          %v4025 = vmul.f32 %v3896, %v4009
          %v4026 = vmul.f32 %v3897, %v4010
          %v4027 = vmul.f32 %v3898, %v4011
          %v4028 = vmul.f32 %v3899, %v4012
          %v4030 = vlaneseq
          %v4031 = vshrl.u32 %v4030, 7
          %v4032 = vsub.s32 0, %v4031
          %v4033 = vrot.slane %v3916, %v4032
          %v4035 = vmul.f32 %v4013, %v4033
          %v4036 = vmul.f32 %v4014, %v4033
          %v4037 = vmul.f32 %v4015, %v4033
          %v4038 = vmul.f32 %v4016, %v4033
          %v4039 = vmul.f32 %v4017, %v4033
          %v4040 = vmul.f32 %v4018, %v4033
          %v4041 = vmul.f32 %v4019, %v4033
          %v4042 = vmul.f32 %v4020, %v4033
          %v4043 = vmul.f32 %v4021, %v4033
          %v4044 = vmul.f32 %v4022, %v4033
          %v4045 = vmul.f32 %v4023, %v4033
          %v4046 = vmul.f32 %v4024, %v4033
          %v4047 = vmul.f32 %v4025, %v4033
          %v4048 = vmul.f32 %v4026, %v4033
          %v4049 = vmul.f32 %v4027, %v4033
          %v4050 = vmul.f32 %v4028, %v4033
          %4051 = vst [vmem:[#allocation3] sm:$0xff] %v4035
          %4052 = vst [vmem:[#allocation3 + $0x8] sm:$0xff] %v4036
          %4053 = vst [vmem:[#allocation3 + $0x10] sm:$0xff] %v4037
          %4054 = vst [vmem:[#allocation3 + $0x18] sm:$0xff] %v4038
          %4055 = vst [vmem:[#allocation3 + $0x20] sm:$0xff] %v4039
          %4056 = vst [vmem:[#allocation3 + $0x28] sm:$0xff] %v4040
          %4057 = vst [vmem:[#allocation3 + $0x30] sm:$0xff] %v4041
          %4058 = vst [vmem:[#allocation3 + $0x38] sm:$0xff] %v4042
          %4059 = vst [vmem:[#allocation3 + $0x40] sm:$0xff] %v4043
          %4060 = vst [vmem:[#allocation3 + $0x48] sm:$0xff] %v4044
          %4061 = vst [vmem:[#allocation3 + $0x50] sm:$0xff] %v4045
          %4062 = vst [vmem:[#allocation3 + $0x58] sm:$0xff] %v4046
          %4063 = vst [vmem:[#allocation3 + $0x60] sm:$0xff] %v4047
          %4064 = vst [vmem:[#allocation3 + $0x68] sm:$0xff] %v4048
          %4065 = vst [vmem:[#allocation3 + $0x70] sm:$0xff] %v4049
          %4066 = vst [vmem:[#allocation3 + $0x78] sm:$0xff] %v4050
        $region88: #{tpu_custom_call.1} parent=59 // pred_fallthru
          _
        %v4067 = vld [vmem:[#allocation3] sm:$0xff]
        %v4068 = vld [vmem:[#allocation3 + $0x8] sm:$0xff]
        %v4069 = vld [vmem:[#allocation3 + $0x10] sm:$0xff]
        %v4070 = vld [vmem:[#allocation3 + $0x18] sm:$0xff]
        %v4071 = vld [vmem:[#allocation3 + $0x20] sm:$0xff]
        %v4072 = vld [vmem:[#allocation3 + $0x28] sm:$0xff]
        %v4073 = vld [vmem:[#allocation3 + $0x30] sm:$0xff]
        %v4074 = vld [vmem:[#allocation3 + $0x38] sm:$0xff]
        %v4075 = vld [vmem:[#allocation3 + $0x40] sm:$0xff]
        %v4076 = vld [vmem:[#allocation3 + $0x48] sm:$0xff]
        %v4077 = vld [vmem:[#allocation3 + $0x50] sm:$0xff]
        %v4078 = vld [vmem:[#allocation3 + $0x58] sm:$0xff]
        %v4079 = vld [vmem:[#allocation3 + $0x60] sm:$0xff]
        %v4080 = vld [vmem:[#allocation3 + $0x68] sm:$0xff]
        %v4081 = vld [vmem:[#allocation3 + $0x70] sm:$0xff]
        %v4082 = vld [vmem:[#allocation3 + $0x78] sm:$0xff]
        %v4083 = vld [vmem:[%s500] sm:$0xff]
        %v4084 = vld [vmem:[%s500 + $0x8] sm:$0xff]
        %v4085 = vld [vmem:[%s500 + $0x10] sm:$0xff]
        %v4086 = vld [vmem:[%s500 + $0x18] sm:$0xff]
        %v4087 = vld [vmem:[%s500 + $0x20] sm:$0xff]
        %v4088 = vld [vmem:[%s500 + $0x28] sm:$0xff]
        %v4089 = vld [vmem:[%s500 + $0x30] sm:$0xff]
        %v4090 = vld [vmem:[%s500 + $0x38] sm:$0xff]
        %v4091 = vld [vmem:[%s500 + $0x40] sm:$0xff]
        %v4092 = vld [vmem:[%s500 + $0x48] sm:$0xff]
        %v4093 = vld [vmem:[%s500 + $0x50] sm:$0xff]
        %v4094 = vld [vmem:[%s500 + $0x58] sm:$0xff]
        %v4095 = vld [vmem:[%s500 + $0x60] sm:$0xff]
        %v4096 = vld [vmem:[%s500 + $0x68] sm:$0xff]
        %v4097 = vld [vmem:[%s500 + $0x70] sm:$0xff]
        %v4098 = vld [vmem:[%s500 + $0x78] sm:$0xff]
        %4099 = vmatprep.subr.mxu0 0.0
        %4100 = vmatpush1.msra.mxu0 %v4098
        %4101 = vmatprep.subr.mxu0 0.0
        %4102 = vmatpush1.msra.mxu0 %v4097
        %4103 = vmatprep.subr.mxu0 0.0
        %4104 = vmatpush1.msra.mxu0 %v4096
        %4105 = vmatprep.subr.mxu0 0.0
        %4106 = vmatpush1.msra.mxu0 %v4095
        %4107 = vmatprep.subr.mxu0 0.0
        %4108 = vmatpush1.msra.mxu0 %v4094
        %4109 = vmatprep.subr.mxu0 0.0
        %4110 = vmatpush1.msra.mxu0 %v4093
        %4111 = vmatprep.subr.mxu0 0.0
        %4112 = vmatpush1.msra.mxu0 %v4092
        %4113 = vmatprep.subr.mxu0 0.0
        %4114 = vmatpush1.msra.mxu0 %v4091
        %4115 = vmatprep.subr.mxu0 0.0
        %4116 = vmatpush1.msra.mxu0 %v4090
        %4117 = vmatprep.subr.mxu0 0.0
        %4118 = vmatpush1.msra.mxu0 %v4089
        %4119 = vmatprep.subr.mxu0 0.0
        %4120 = vmatpush1.msra.mxu0 %v4088
        %4121 = vmatprep.subr.mxu0 0.0
        %4122 = vmatpush1.msra.mxu0 %v4087
        %4123 = vmatprep.subr.mxu0 0.0
        %4124 = vmatpush1.msra.mxu0 %v4086
        %4125 = vmatprep.subr.mxu0 0.0
        %4126 = vmatpush1.msra.mxu0 %v4085
        %4127 = vmatprep.subr.mxu0 0.0
        %4128 = vmatpush1.msra.mxu0 %v4084
        %4129 = vmatprep.subr.mxu0 0.0
        %4130 = vmatpush1.msra.mxu0 %v4083
        %4131 = vmatprep.subr.mxu0 0.0
        %4132 = vmatpush2.msra.mxu0 0.0
        %4133 = vmatprep.subr.mxu0 0.0
        %4134 = vmatpush2.msra.mxu0 0.0
        %4135 = vmatprep.subr.mxu0 0.0
        %4136 = vmatpush2.msra.mxu0 0.0
        %4137 = vmatprep.subr.mxu0 0.0
        %4138 = vmatpush2.msra.mxu0 0.0
        %4139 = vmatprep.subr.mxu0 0.0
        %4140 = vmatpush2.msra.mxu0 0.0
        %4141 = vmatprep.subr.mxu0 0.0
        %4142 = vmatpush2.msra.mxu0 0.0
        %4143 = vmatprep.subr.mxu0 0.0
        %4144 = vmatpush2.msra.mxu0 0.0
        %4145 = vmatprep.subr.mxu0 0.0
        %4146 = vmatpush2.msra.mxu0 0.0
        %4147 = vmatprep.subr.mxu0 0.0
        %4148 = vmatpush2.msra.mxu0 0.0
        %4149 = vmatprep.subr.mxu0 0.0
        %4150 = vmatpush2.msra.mxu0 0.0
        %4151 = vmatprep.subr.mxu0 0.0
        %4152 = vmatpush2.msra.mxu0 0.0
        %4153 = vmatprep.subr.mxu0 0.0
        %4154 = vmatpush2.msra.mxu0 0.0
        %4155 = vmatprep.subr.mxu0 0.0
        %4156 = vmatpush2.msra.mxu0 0.0
        %4157 = vmatprep.subr.mxu0 0.0
        %4158 = vmatpush2.msra.mxu0 0.0
        %4159 = vmatprep.subr.mxu0 0.0
        %4160 = vmatpush2.msra.mxu0 0.0
        %4161 = vmatprep.subr.mxu0 0.0
        %4162 = vmatpush2.msra.mxu0 0.0
        %4163 = vmatprep.mubr.f32.mxu0 0.0
        %4164 = vmatmul.mubr.f32.gmra.mxu0 %v4067
        %v4165 = vpop.f32.mrf.mxu0
        %v4166 = vadd.f32 0.0, %v4165
        %v4167 = vpop.f32.mrf.mxu0
        %4168 = vmatprep.mubr.f32.mxu0 0.0
        %4169 = vmatmul.mubr.f32.gmra.mxu0 %v4068
        %v4170 = vpop.f32.mrf.mxu0
        %v4171 = vadd.f32 0.0, %v4170
        %v4172 = vpop.f32.mrf.mxu0
        %4173 = vmatprep.mubr.f32.mxu0 0.0
        %4174 = vmatmul.mubr.f32.gmra.mxu0 %v4069
        %v4175 = vpop.f32.mrf.mxu0
        %v4176 = vadd.f32 0.0, %v4175
        %v4177 = vpop.f32.mrf.mxu0
        %4178 = vmatprep.mubr.f32.mxu0 0.0
        %4179 = vmatmul.mubr.f32.gmra.mxu0 %v4070
        %v4180 = vpop.f32.mrf.mxu0
        %v4181 = vadd.f32 0.0, %v4180
        %v4182 = vpop.f32.mrf.mxu0
        %4183 = vmatprep.mubr.f32.mxu0 0.0
        %4184 = vmatmul.mubr.f32.gmra.mxu0 %v4071
        %v4185 = vpop.f32.mrf.mxu0
        %v4186 = vadd.f32 0.0, %v4185
        %v4187 = vpop.f32.mrf.mxu0
        %4188 = vmatprep.mubr.f32.mxu0 0.0
        %4189 = vmatmul.mubr.f32.gmra.mxu0 %v4072
        %v4190 = vpop.f32.mrf.mxu0
        %v4191 = vadd.f32 0.0, %v4190
        %v4192 = vpop.f32.mrf.mxu0
        %4193 = vmatprep.mubr.f32.mxu0 0.0
        %4194 = vmatmul.mubr.f32.gmra.mxu0 %v4073
        %v4195 = vpop.f32.mrf.mxu0
        %v4196 = vadd.f32 0.0, %v4195
        %v4197 = vpop.f32.mrf.mxu0
        %4198 = vmatprep.mubr.f32.mxu0 0.0
        %4199 = vmatmul.mubr.f32.gmra.mxu0 %v4074
        %v4200 = vpop.f32.mrf.mxu0
        %v4201 = vadd.f32 0.0, %v4200
        %v4202 = vpop.f32.mrf.mxu0
        %4203 = vmatprep.mubr.f32.mxu0 0.0
        %4204 = vmatmul.mubr.f32.gmra.mxu0 %v4075
        %v4205 = vpop.f32.mrf.mxu0
        %v4206 = vadd.f32 0.0, %v4205
        %v4207 = vpop.f32.mrf.mxu0
        %4208 = vmatprep.mubr.f32.mxu0 0.0
        %4209 = vmatmul.mubr.f32.gmra.mxu0 %v4076
        %v4210 = vpop.f32.mrf.mxu0
        %v4211 = vadd.f32 0.0, %v4210
        %v4212 = vpop.f32.mrf.mxu0
        %4213 = vmatprep.mubr.f32.mxu0 0.0
        %4214 = vmatmul.mubr.f32.gmra.mxu0 %v4077
        %v4215 = vpop.f32.mrf.mxu0
        %v4216 = vadd.f32 0.0, %v4215
        %v4217 = vpop.f32.mrf.mxu0
        %4218 = vmatprep.mubr.f32.mxu0 0.0
        %4219 = vmatmul.mubr.f32.gmra.mxu0 %v4078
        %v4220 = vpop.f32.mrf.mxu0
        %v4221 = vadd.f32 0.0, %v4220
        %v4222 = vpop.f32.mrf.mxu0
        %4223 = vmatprep.mubr.f32.mxu0 0.0
        %4224 = vmatmul.mubr.f32.gmra.mxu0 %v4079
        %v4225 = vpop.f32.mrf.mxu0
        %v4226 = vadd.f32 0.0, %v4225
        %v4227 = vpop.f32.mrf.mxu0
        %4228 = vmatprep.mubr.f32.mxu0 0.0
        %4229 = vmatmul.mubr.f32.gmra.mxu0 %v4080
        %v4230 = vpop.f32.mrf.mxu0
        %v4231 = vadd.f32 0.0, %v4230
        %v4232 = vpop.f32.mrf.mxu0
        %4233 = vmatprep.mubr.f32.mxu0 0.0
        %4234 = vmatmul.mubr.f32.gmra.mxu0 %v4081
        %v4235 = vpop.f32.mrf.mxu0
        %v4236 = vadd.f32 0.0, %v4235
        %v4237 = vpop.f32.mrf.mxu0
        %4238 = vmatprep.mubr.f32.mxu0 0.0
        %4239 = vmatmul.mubr.f32.gmra.mxu0 %v4082
        %v4240 = vpop.f32.mrf.mxu0
        %v4241 = vadd.f32 0.0, %v4240
        %v4242 = vpop.f32.mrf.mxu0
        %4243 = vdwg.mxu0
        %v4244 = vmax.f32 %v4166, 0.0
        %v4245 = vmax.f32 %v4171, 0.0
        %v4246 = vmax.f32 %v4176, 0.0
        %v4247 = vmax.f32 %v4181, 0.0
        %v4248 = vmax.f32 %v4186, 0.0
        %v4249 = vmax.f32 %v4191, 0.0
        %v4250 = vmax.f32 %v4196, 0.0
        %v4251 = vmax.f32 %v4201, 0.0
        %v4252 = vmax.f32 %v4206, 0.0
        %v4253 = vmax.f32 %v4211, 0.0
        %v4254 = vmax.f32 %v4216, 0.0
        %v4255 = vmax.f32 %v4221, 0.0
        %v4256 = vmax.f32 %v4226, 0.0
        %v4257 = vmax.f32 %v4231, 0.0
        %v4258 = vmax.f32 %v4236, 0.0
        %v4259 = vmax.f32 %v4241, 0.0
        %v4260 = vld [vmem:[%s509] sm:$0xff]
        %v4261 = vld [vmem:[%s509 + $0x8] sm:$0xff]
        %v4262 = vld [vmem:[%s509 + $0x10] sm:$0xff]
        %v4263 = vld [vmem:[%s509 + $0x18] sm:$0xff]
        %v4264 = vld [vmem:[%s509 + $0x20] sm:$0xff]
        %v4265 = vld [vmem:[%s509 + $0x28] sm:$0xff]
        %v4266 = vld [vmem:[%s509 + $0x30] sm:$0xff]
        %v4267 = vld [vmem:[%s509 + $0x38] sm:$0xff]
        %v4268 = vld [vmem:[%s509 + $0x40] sm:$0xff]
        %v4269 = vld [vmem:[%s509 + $0x48] sm:$0xff]
        %v4270 = vld [vmem:[%s509 + $0x50] sm:$0xff]
        %v4271 = vld [vmem:[%s509 + $0x58] sm:$0xff]
        %v4272 = vld [vmem:[%s509 + $0x60] sm:$0xff]
        %v4273 = vld [vmem:[%s509 + $0x68] sm:$0xff]
        %v4274 = vld [vmem:[%s509 + $0x70] sm:$0xff]
        %v4275 = vld [vmem:[%s509 + $0x78] sm:$0xff]
        %4276 = vmatprep.subr.mxu0 0.0
        %4277 = vmatpush1.msra.mxu0 %v4275
        %4278 = vmatprep.subr.mxu0 0.0
        %4279 = vmatpush1.msra.mxu0 %v4274
        %4280 = vmatprep.subr.mxu0 0.0
        %4281 = vmatpush1.msra.mxu0 %v4273
        %4282 = vmatprep.subr.mxu0 0.0
        %4283 = vmatpush1.msra.mxu0 %v4272
        %4284 = vmatprep.subr.mxu0 0.0
        %4285 = vmatpush1.msra.mxu0 %v4271
        %4286 = vmatprep.subr.mxu0 0.0
        %4287 = vmatpush1.msra.mxu0 %v4270
        %4288 = vmatprep.subr.mxu0 0.0
        %4289 = vmatpush1.msra.mxu0 %v4269
        %4290 = vmatprep.subr.mxu0 0.0
        %4291 = vmatpush1.msra.mxu0 %v4268
        %4292 = vmatprep.subr.mxu0 0.0
        %4293 = vmatpush1.msra.mxu0 %v4267
        %4294 = vmatprep.subr.mxu0 0.0
        %4295 = vmatpush1.msra.mxu0 %v4266
        %4296 = vmatprep.subr.mxu0 0.0
        %4297 = vmatpush1.msra.mxu0 %v4265
        %4298 = vmatprep.subr.mxu0 0.0
        %4299 = vmatpush1.msra.mxu0 %v4264
        %4300 = vmatprep.subr.mxu0 0.0
        %4301 = vmatpush1.msra.mxu0 %v4263
        %4302 = vmatprep.subr.mxu0 0.0
        %4303 = vmatpush1.msra.mxu0 %v4262
        %4304 = vmatprep.subr.mxu0 0.0
        %4305 = vmatpush1.msra.mxu0 %v4261
        %4306 = vmatprep.subr.mxu0 0.0
        %4307 = vmatpush1.msra.mxu0 %v4260
        %4308 = vmatprep.subr.mxu0 0.0
        %4309 = vmatpush2.msra.mxu0 0.0
        %4310 = vmatprep.subr.mxu0 0.0
        %4311 = vmatpush2.msra.mxu0 0.0
        %4312 = vmatprep.subr.mxu0 0.0
        %4313 = vmatpush2.msra.mxu0 0.0
        %4314 = vmatprep.subr.mxu0 0.0
        %4315 = vmatpush2.msra.mxu0 0.0
        %4316 = vmatprep.subr.mxu0 0.0
        %4317 = vmatpush2.msra.mxu0 0.0
        %4318 = vmatprep.subr.mxu0 0.0
        %4319 = vmatpush2.msra.mxu0 0.0
        %4320 = vmatprep.subr.mxu0 0.0
        %4321 = vmatpush2.msra.mxu0 0.0
        %4322 = vmatprep.subr.mxu0 0.0
        %4323 = vmatpush2.msra.mxu0 0.0
        %4324 = vmatprep.subr.mxu0 0.0
        %4325 = vmatpush2.msra.mxu0 0.0
        %4326 = vmatprep.subr.mxu0 0.0
        %4327 = vmatpush2.msra.mxu0 0.0
        %4328 = vmatprep.subr.mxu0 0.0
        %4329 = vmatpush2.msra.mxu0 0.0
        %4330 = vmatprep.subr.mxu0 0.0
        %4331 = vmatpush2.msra.mxu0 0.0
        %4332 = vmatprep.subr.mxu0 0.0
        %4333 = vmatpush2.msra.mxu0 0.0
        %4334 = vmatprep.subr.mxu0 0.0
        %4335 = vmatpush2.msra.mxu0 0.0
        %4336 = vmatprep.subr.mxu0 0.0
        %4337 = vmatpush2.msra.mxu0 0.0
        %4338 = vmatprep.subr.mxu0 0.0
        %4339 = vmatpush2.msra.mxu0 0.0
        %4340 = vmatprep.mubr.f32.mxu0 0.0
        %4341 = vmatmul.mubr.f32.gmra.mxu0 %v4244
        %v4342 = vpop.f32.mrf.mxu0
        %v4343 = vadd.f32 0.0, %v4342
        %v4344 = vpop.f32.mrf.mxu0
        %4345 = vmatprep.mubr.f32.mxu0 0.0
        %4346 = vmatmul.mubr.f32.gmra.mxu0 %v4245
        %v4347 = vpop.f32.mrf.mxu0
        %v4348 = vadd.f32 0.0, %v4347
        %v4349 = vpop.f32.mrf.mxu0
        %4350 = vmatprep.mubr.f32.mxu0 0.0
        %4351 = vmatmul.mubr.f32.gmra.mxu0 %v4246
        %v4352 = vpop.f32.mrf.mxu0
        %v4353 = vadd.f32 0.0, %v4352
        %v4354 = vpop.f32.mrf.mxu0
        %4355 = vmatprep.mubr.f32.mxu0 0.0
        %4356 = vmatmul.mubr.f32.gmra.mxu0 %v4247
        %v4357 = vpop.f32.mrf.mxu0
        %v4358 = vadd.f32 0.0, %v4357
        %v4359 = vpop.f32.mrf.mxu0
        %4360 = vmatprep.mubr.f32.mxu0 0.0
        %4361 = vmatmul.mubr.f32.gmra.mxu0 %v4248
        %v4362 = vpop.f32.mrf.mxu0
        %v4363 = vadd.f32 0.0, %v4362
        %v4364 = vpop.f32.mrf.mxu0
        %4365 = vmatprep.mubr.f32.mxu0 0.0
        %4366 = vmatmul.mubr.f32.gmra.mxu0 %v4249
        %v4367 = vpop.f32.mrf.mxu0
        %v4368 = vadd.f32 0.0, %v4367
        %v4369 = vpop.f32.mrf.mxu0
        %4370 = vmatprep.mubr.f32.mxu0 0.0
        %4371 = vmatmul.mubr.f32.gmra.mxu0 %v4250
        %v4372 = vpop.f32.mrf.mxu0
        %v4373 = vadd.f32 0.0, %v4372
        %v4374 = vpop.f32.mrf.mxu0
        %4375 = vmatprep.mubr.f32.mxu0 0.0
        %4376 = vmatmul.mubr.f32.gmra.mxu0 %v4251
        %v4377 = vpop.f32.mrf.mxu0
        %v4378 = vadd.f32 0.0, %v4377
        %v4379 = vpop.f32.mrf.mxu0
        %4380 = vmatprep.mubr.f32.mxu0 0.0
        %4381 = vmatmul.mubr.f32.gmra.mxu0 %v4252
        %v4382 = vpop.f32.mrf.mxu0
        %v4383 = vadd.f32 0.0, %v4382
        %v4384 = vpop.f32.mrf.mxu0
        %4385 = vmatprep.mubr.f32.mxu0 0.0
        %4386 = vmatmul.mubr.f32.gmra.mxu0 %v4253
        %v4387 = vpop.f32.mrf.mxu0
        %v4388 = vadd.f32 0.0, %v4387
        %v4389 = vpop.f32.mrf.mxu0
        %4390 = vmatprep.mubr.f32.mxu0 0.0
        %4391 = vmatmul.mubr.f32.gmra.mxu0 %v4254
        %v4392 = vpop.f32.mrf.mxu0
        %v4393 = vadd.f32 0.0, %v4392
        %v4394 = vpop.f32.mrf.mxu0
        %4395 = vmatprep.mubr.f32.mxu0 0.0
        %4396 = vmatmul.mubr.f32.gmra.mxu0 %v4255
        %v4397 = vpop.f32.mrf.mxu0
        %v4398 = vadd.f32 0.0, %v4397
        %v4399 = vpop.f32.mrf.mxu0
        %4400 = vmatprep.mubr.f32.mxu0 0.0
        %4401 = vmatmul.mubr.f32.gmra.mxu0 %v4256
        %v4402 = vpop.f32.mrf.mxu0
        %v4403 = vadd.f32 0.0, %v4402
        %v4404 = vpop.f32.mrf.mxu0
        %4405 = vmatprep.mubr.f32.mxu0 0.0
        %4406 = vmatmul.mubr.f32.gmra.mxu0 %v4257
        %v4407 = vpop.f32.mrf.mxu0
        %v4408 = vadd.f32 0.0, %v4407
        %v4409 = vpop.f32.mrf.mxu0
        %4410 = vmatprep.mubr.f32.mxu0 0.0
        %4411 = vmatmul.mubr.f32.gmra.mxu0 %v4258
        %v4412 = vpop.f32.mrf.mxu0
        %v4413 = vadd.f32 0.0, %v4412
        %v4414 = vpop.f32.mrf.mxu0
        %4415 = vmatprep.mubr.f32.mxu0 0.0
        %4416 = vmatmul.mubr.f32.gmra.mxu0 %v4259
        %v4417 = vpop.f32.mrf.mxu0
        %v4418 = vadd.f32 0.0, %v4417
        %v4419 = vpop.f32.mrf.mxu0
        %4420 = vdwg.mxu0
        %v4421 = vld [vmem:[%s560] sm:$0xff]
        %v4422 = vld [vmem:[%s560 + $0x8] sm:$0xff]
        %v4423 = vld [vmem:[%s560 + $0x10] sm:$0xff]
        %v4424 = vld [vmem:[%s560 + $0x18] sm:$0xff]
        %v4425 = vld [vmem:[%s560 + $0x20] sm:$0xff]
        %v4426 = vld [vmem:[%s560 + $0x28] sm:$0xff]
        %v4427 = vld [vmem:[%s560 + $0x30] sm:$0xff]
        %v4428 = vld [vmem:[%s560 + $0x38] sm:$0xff]
        %v4429 = vld [vmem:[%s560 + $0x40] sm:$0xff]
        %v4430 = vld [vmem:[%s560 + $0x48] sm:$0xff]
        %v4431 = vld [vmem:[%s560 + $0x50] sm:$0xff]
        %v4432 = vld [vmem:[%s560 + $0x58] sm:$0xff]
        %v4433 = vld [vmem:[%s560 + $0x60] sm:$0xff]
        %v4434 = vld [vmem:[%s560 + $0x68] sm:$0xff]
        %v4435 = vld [vmem:[%s560 + $0x70] sm:$0xff]
        %v4436 = vld [vmem:[%s560 + $0x78] sm:$0xff]
        %v4437 = vadd.f32 %v4421, %v4343
        %v4438 = vadd.f32 %v4422, %v4348
        %v4439 = vadd.f32 %v4423, %v4353
        %v4440 = vadd.f32 %v4424, %v4358
        %v4441 = vadd.f32 %v4425, %v4363
        %v4442 = vadd.f32 %v4426, %v4368
        %v4443 = vadd.f32 %v4427, %v4373
        %v4444 = vadd.f32 %v4428, %v4378
        %v4445 = vadd.f32 %v4429, %v4383
        %v4446 = vadd.f32 %v4430, %v4388
        %v4447 = vadd.f32 %v4431, %v4393
        %v4448 = vadd.f32 %v4432, %v4398
        %v4449 = vadd.f32 %v4433, %v4403
        %v4450 = vadd.f32 %v4434, %v4408
        %v4451 = vadd.f32 %v4435, %v4413
        %v4452 = vadd.f32 %v4436, %v4418
        %4453 = vst [vmem:[%s560] sm:$0xff] %v4437
        %4454 = vst [vmem:[%s560 + $0x8] sm:$0xff] %v4438
        %4455 = vst [vmem:[%s560 + $0x10] sm:$0xff] %v4439
        %4456 = vst [vmem:[%s560 + $0x18] sm:$0xff] %v4440
        %4457 = vst [vmem:[%s560 + $0x20] sm:$0xff] %v4441
        %4458 = vst [vmem:[%s560 + $0x28] sm:$0xff] %v4442
        %4459 = vst [vmem:[%s560 + $0x30] sm:$0xff] %v4443
        %4460 = vst [vmem:[%s560 + $0x38] sm:$0xff] %v4444
        %4461 = vst [vmem:[%s560 + $0x40] sm:$0xff] %v4445
        %4462 = vst [vmem:[%s560 + $0x48] sm:$0xff] %v4446
        %4463 = vst [vmem:[%s560 + $0x50] sm:$0xff] %v4447
        %4464 = vst [vmem:[%s560 + $0x58] sm:$0xff] %v4448
        %4465 = vst [vmem:[%s560 + $0x60] sm:$0xff] %v4449
        %4466 = vst [vmem:[%s560 + $0x68] sm:$0xff] %v4450
        %4467 = vst [vmem:[%s560 + $0x70] sm:$0xff] %v4451
        %4468 = vst [vmem:[%s560 + $0x78] sm:$0xff] %v4452
        %s4469 = sand.u32 %s302, 1
        %s4470 = scalar_lea.sflag [#allocation6], %s4469
        %s4471 = sand.u32 %s302, 1
        %s4472 = smul.addr %s4471, 128
        %s4473 = scalar_lea.vmem [#allocation14], %s4472
        // Predicated region
        $region89: #{tpu_custom_call.1} parent=59 // pred_check
          %p4474 = pneg %p312
        $region90: #{tpu_custom_call.1} parent=59 // pred_check_branch
          %4476 = sbr.rel (%p4474) target = $region92
        $region91: #{tpu_custom_call.1} parent=59 // pred_region
          %s4477 = smul.u32 16, %s37
          %s4479 = ssub.s32 2048, 2048
          %4480 = vsyncadd %s4470, %s4479
          %s4481 = smul.addr %s36, 32
          %s4482 = sadd.s32 %s4477, %s4481
          %s4483 = smul.addr %s4482, 128
          %s4484 = scalar_lea.hbm %s10, %s4483
          %s4485 = sshll.u32 %s4473, 4
          %s4486 = int_to_ptr.vmem [resolvable:$true] %s4485
          %4491 = dma.vmem_to_hbm [thread:$0]  %s4486, 2048, %s4484, %s4470, 128, 128, 8
        $region92: #{tpu_custom_call.1} parent=59 // pred_fallthru
          _
      $region60: #{tpu_custom_call.1} parent=5 // pred_fallthru
        _
      %p4492 = scmp.le.s32.totalorder 2, %s26
      // Predicated region
      $region93: #{tpu_custom_call.1} parent=5 // pred_check
        %p4493 = pneg %p4492
      $region94: #{tpu_custom_call.1} parent=5 // pred_check_branch
        %4495 = sbr.rel (%p4493) target = $region96
      $region95: #{tpu_custom_call.1} parent=5 // pred_region
        %s4496 = ssub.s32 %s26, 2
        // Predicated region
        $region97: #{tpu_custom_call.1} parent=95 // pred_check
          %p4497 = pneg %p318
        $region98: #{tpu_custom_call.1} parent=95 // pred_check_branch
          %4499 = sbr.rel (%p4497) target = $region100
        $region99: #{tpu_custom_call.1} parent=95 // pred_region
          %s4500 = sand.u32 %s303, 1
          %s4501 = scalar_lea.sflag [#allocation6], %s4500
          %s4502 = sand.u32 %s303, 1
          %s4503 = smul.addr %s4502, 128
          %s4504 = scalar_lea.vmem [#allocation14], %s4503
          %4505 = dma.done %s4501, 2048
        $region100: #{tpu_custom_call.1} parent=95 // pred_fallthru
          _
      $region96: #{tpu_custom_call.1} parent=5 // pred_fallthru
        _
    $region6: #{tpu_custom_call.1} parent=1 // loop_footer
      %s30 = sadd.s32 1, %s26
    $region7: #{tpu_custom_call.1} parent=1 // loop_footer_branch
      %25 = sbr.rel target = $region3
    $region8: #{tpu_custom_call.1} parent=1 // loop_exit
      _
    %4506 = vsyncpa [#allocation5], 1
    %s4507 = scalar_lea.sflag [#allocation5], 1
    %4508 = vsyncpa %s4507, 1
    %4509 = vsyncpa [#allocation8], 1
    %s4510 = scalar_lea.sflag [#allocation8], 1
    %4511 = vsyncpa %s4510, 1
    %4512 = vsyncpa [#allocation11], 1
    %4513 = vsyncpa [#allocation6], 1
    %s4514 = scalar_lea.sflag [#allocation6], 1
    %4515 = vsyncpa %s4514, 1

</llo_original>
